<compile_context>
chip_gen: v7x
topology: tpu7x:2x2x1
jax: 0.10.0
libtpu: 0.0.40
codegen_flags: <defaults>
</compile_context>

<pallas_src>
import math
import functools
import numpy as np

import jax
import jax.numpy as jnp
from jax import lax
from jax.experimental import pallas as pl
from jax.experimental.pallas import tpu as pltpu


def superpoint_kernel(feat_ref, lab_ref,
                      wq_ref, wk_ref, wv_ref, bq_ref, bk_ref, bv_ref,
                      wo_ref, ob_ref,
                      w1_ref, b1_ref, g_ref, be_ref, w2_ref, b2_ref,
                      cw_ref, o_ref, *, num_heads, num_superpoints):
    f32 = jnp.float32
    bf16 = jnp.bfloat16

    x = feat_ref[0]                       # [N, D] f32
    N, D = x.shape
    H = num_heads
    dh = D // H
    S = num_superpoints
    x_b = x.astype(bf16)

    lab = lab_ref[0]                      # [1, N] int32
    # one-hot superpoint membership; label -1 matches no superpoint.
    onehot_sn = (lax.broadcasted_iota(jnp.int32, (S, N), 0) == lab).astype(f32)  # [S, N]
    onehot_ns = onehot_sn.T                                                      # [N, S]
    counts_s = jnp.sum(onehot_sn, axis=-1, keepdims=True)                        # [S, 1]
    onehot_sn_b = onehot_sn.astype(bf16)  # 0/1 exact in bf16
    onehot_ns_b = onehot_ns.astype(bf16)

    # same-superpoint mask + per-point member count (MXU + row reduce).
    # rows/cols of unlabeled (-1) points are all-zero -> they get uniform
    # attention below but are gated off by count_pt < 3, so output is exact.
    same_f = jnp.dot(onehot_ns_b, onehot_sn_b, preferred_element_type=f32)       # [N, N]
    same = same_f > 0.5
    count_pt = jnp.sum(same_f, axis=-1, keepdims=True)                           # [N, 1]

    # ---- masked multi-head self-attention, out-proj folded per head ----
    scale = 1.0 / math.sqrt(dh)
    attended = jnp.zeros((N, D), f32) + ob_ref[...]          # start from out-proj bias
    for h in range(H):
        qh = (jnp.dot(x_b, wq_ref[h], preferred_element_type=f32) + bq_ref[h]) * scale
        kh = jnp.dot(x_b, wk_ref[h], preferred_element_type=f32) + bk_ref[h]
        vh = jnp.dot(x_b, wv_ref[h], preferred_element_type=f32) + bv_ref[h]
        s = lax.dot_general(qh.astype(bf16), kh.astype(bf16),
                            (((1,), (1,)), ((), ())),
                            preferred_element_type=f32)                          # [N, N]
        s = jnp.where(same, s, -1e30)
        p = jnp.exp(s - jnp.max(s, axis=-1, keepdims=True))   # unnormalized probs (f32)
        denom = jnp.sum(p, axis=-1, keepdims=True)            # [N, 1]
        hv = jnp.dot(p.astype(bf16), vh.astype(bf16), preferred_element_type=f32)
        hv = hv * pl.reciprocal(denom, approx=True)           # deferred softmax norm
        attended = attended + jnp.dot(hv.astype(bf16), wo_ref[h],
                                      preferred_element_type=f32)                # [N, D]

    # ---- per-superpoint mean of attended member features ----
    sums = jnp.dot(onehot_sn_b, attended.astype(bf16), preferred_element_type=f32)  # [S, D]
    means = sums * pl.reciprocal(jnp.maximum(counts_s, 1.0), approx=True)

    # ---- aggregator MLP: Linear -> LayerNorm -> GELU -> (Dropout=id) -> Linear ----
    hdn = jnp.dot(means.astype(bf16), w1_ref[...], preferred_element_type=f32) + b1_ref[...]
    mu = jnp.mean(hdn, axis=-1, keepdims=True)
    var = jnp.mean((hdn - mu) ** 2, axis=-1, keepdims=True)
    hdn = (hdn - mu) * lax.rsqrt(var + 1e-5) * g_ref[...] + be_ref[...]
    hdn = 0.5 * hdn * (1.0 + lax.erf(hdn * (1.0 / math.sqrt(2.0))))   # exact GELU
    agg = jnp.dot(hdn.astype(bf16), w2_ref[...], preferred_element_type=f32) + b2_ref[...]

    # ---- scatter aggregate back to members and blend where size >= 3 ----
    agg_pt = jnp.dot(onehot_ns_b, agg.astype(bf16), preferred_element_type=f32)  # [N, D]
    w = cw_ref[0, 0]                                        # sigmoid(cw), SMEM scalar
    apply = count_pt >= 3.0
    o_ref[0] = jnp.where(apply, (1.0 - w) * x + w * agg_pt, x)


def superpoint_consistency_encoder(features, labels, params, *,
                                   num_superpoints, num_heads=8):
    B, N, D = features.shape
    H = num_heads
    dh = D // H
    bf16 = jnp.bfloat16
    f32 = jnp.float32

    lab = labels.reshape(B, 1, N).astype(jnp.int32)

    in_w = params["in_proj_weight"]        # [3D, D]
    in_b = params["in_proj_bias"]          # [3D]

    def head_major(w):                     # w: [D, D] -> [H, D, dh] (x @ w.T, head cols)
        return jnp.transpose(w.T.reshape(D, H, dh), (1, 0, 2)).astype(bf16)

    wq = head_major(in_w[:D])
    wk = head_major(in_w[D:2 * D])
    wv = head_major(in_w[2 * D:])
    bq = in_b[:D].reshape(H, 1, dh).astype(f32)
    bk = in_b[D:2 * D].reshape(H, 1, dh).astype(f32)
    bv = in_b[2 * D:].reshape(H, 1, dh).astype(f32)
    wo = params["out_proj_weight"].T.reshape(H, dh, D).astype(bf16)   # [H, dh, D]
    out_b = params["out_proj_bias"].reshape(1, D).astype(f32)

    w1_t = params["agg_w1"].T.astype(bf16)          # [D, D]
    b1 = params["agg_b1"].reshape(1, D).astype(f32)
    ln_g = params["ln_gamma"].reshape(1, D).astype(f32)
    ln_b = params["ln_beta"].reshape(1, D).astype(f32)
    w2_t = params["agg_w2"].T.astype(bf16)
    b2 = params["agg_b2"].reshape(1, D).astype(f32)
    cw = jax.nn.sigmoid(params["consistency_weight"]).reshape(1, 1).astype(f32)

    def const_spec(arr):
        zero = (0,) * arr.ndim
        return pl.BlockSpec(arr.shape, lambda b, zero=zero: zero)

    kernel = functools.partial(superpoint_kernel,
                               num_heads=num_heads,
                               num_superpoints=num_superpoints)
    return pl.pallas_call(
        kernel,
        out_shape=jax.ShapeDtypeStruct((B, N, D), features.dtype),
        grid=(B,),
        in_specs=[
            pl.BlockSpec((1, N, D), lambda b: (b, 0, 0)),    # features
            pl.BlockSpec((1, 1, N), lambda b: (b, 0, 0)),    # labels (lane-dense)
            const_spec(wq), const_spec(wk), const_spec(wv),
            const_spec(bq), const_spec(bk), const_spec(bv),
            const_spec(wo), const_spec(out_b),
            const_spec(w1_t), const_spec(b1), const_spec(ln_g), const_spec(ln_b),
            const_spec(w2_t), const_spec(b2),
            pl.BlockSpec(memory_space=pltpu.MemorySpace.SMEM),   # sigmoid(weight) scalar
        ],
        out_specs=pl.BlockSpec((1, N, D), lambda b: (b, 0, 0)),
        compiler_params=pltpu.CompilerParams(
            dimension_semantics=("parallel",),
            vmem_limit_bytes=32 * 1024 * 1024),
    )(features, lab, wq, wk, wv, bq, bk, bv, wo, out_b,
      w1_t, b1, ln_g, ln_b, w2_t, b2, cw)


# ------------------------- pure numpy reference -------------------------
def ref_forward(features, labels, p):
    feats = np.asarray(features, dtype=np.float32)
    labs = np.asarray(labels)
    B, N, D = feats.shape
    H = 8
    dh = D // H
    in_w = np.asarray(p["in_proj_weight"]); in_b = np.asarray(p["in_proj_bias"])
    out_w = np.asarray(p["out_proj_weight"]); out_b = np.asarray(p["out_proj_bias"])
    w1 = np.asarray(p["agg_w1"]); b1 = np.asarray(p["agg_b1"])
    g = np.asarray(p["ln_gamma"]); be = np.asarray(p["ln_beta"])
    w2 = np.asarray(p["agg_w2"]); b2 = np.asarray(p["agg_b2"])
    cw = float(np.asarray(p["consistency_weight"]))
    wgt = 1.0 / (1.0 + math.exp(-cw))

    def np_erf(x):
        return np.asarray(jax.scipy.special.erf(jnp.asarray(x)))

    def mha(x):
        qkv = x @ in_w.T + in_b
        q, k, v = qkv[:, :D], qkv[:, D:2 * D], qkv[:, 2 * D:]
        outs = []
        for h in range(H):
            qh = q[:, h * dh:(h + 1) * dh]
            kh = k[:, h * dh:(h + 1) * dh]
            vh = v[:, h * dh:(h + 1) * dh]
            s = qh @ kh.T / math.sqrt(dh)
            s = s - s.max(-1, keepdims=True)
            e = np.exp(s)
            a = e / e.sum(-1, keepdims=True)
            outs.append(a @ vh)
        o = np.concatenate(outs, -1)
        return o @ out_w.T + out_b

    def aggregator(x):  # [1, D]
        h = x @ w1.T + b1
        mu = h.mean(-1, keepdims=True)
        var = ((h - mu) ** 2).mean(-1, keepdims=True)
        h = (h - mu) / np.sqrt(var + 1e-5) * g + be
        h = 0.5 * h * (1.0 + np_erf(h / math.sqrt(2.0)))
        return h @ w2.T + b2

    out = feats.copy()
    for b in range(B):
        for sp in np.unique(labs[b]):
            if sp == -1:
                continue
            mask = labs[b] == sp
            size = int(mask.sum())
            if size < 3:
                continue
            sp_feat = feats[b][mask]
            attended = mha(sp_feat)
            agg = aggregator(attended.mean(0, keepdims=True))
            out[b][mask] = (1.0 - wgt) * sp_feat + wgt * agg
    return out


if __name__ == "__main__":
    B, N, D, S = 2, 16, 32, 4
    key = jax.random.PRNGKey(0)
    k_feat, k_lab, *ks = jax.random.split(key, 12)

    features = jax.random.normal(k_feat, (B, N, D), jnp.float32)
    labels = jax.random.randint(k_lab, (B, N), -1, S).astype(jnp.int32)

    def nrm(k, shape, scale):
        return jax.random.normal(k, shape, jnp.float32) * scale

    params = {
        "in_proj_weight": nrm(ks[0], (3 * D, D), 1.0 / math.sqrt(D)),
        "in_proj_bias": nrm(ks[1], (3 * D,), 0.02),
        "out_proj_weight": nrm(ks[2], (D, D), 1.0 / math.sqrt(D)),
        "out_proj_bias": nrm(ks[3], (D,), 0.02),
        "agg_w1": nrm(ks[4], (D, D), 1.0 / math.sqrt(D)),
        "agg_b1": nrm(ks[5], (D,), 0.02),
        "ln_gamma": jnp.ones((D,), jnp.float32),
        "ln_beta": jnp.zeros((D,), jnp.float32),
        "agg_w2": nrm(ks[6], (D, D), 1.0 / math.sqrt(D)),
        "agg_b2": nrm(ks[7], (D,), 0.02),
        "consistency_weight": jnp.array(0.3, jnp.float32),
    }

    out = superpoint_consistency_encoder(features, labels, params,
                                         num_superpoints=S, num_heads=8)
    out = jax.block_until_ready(out)

    ref = ref_forward(features, labels, params)
    # bf16 MXU operands (f32 accumulation) -> slightly looser tolerance than f32-only.
    np.testing.assert_allclose(np.asarray(out), ref, atol=3e-2, rtol=3e-2)
    print("KERNEL_OK")
</pallas_src>

<mosaic_0001>
module attributes {stable_mosaic.version = 11 : i64} {
  func.func @superpoint_kernel(%arg0: i32, %arg1: memref<1x16x32xf32, #tpu.memory_space<vmem>>, %arg2: memref<1x1x16xi32, #tpu.memory_space<vmem>>, %arg3: memref<8x32x4xbf16, #tpu.memory_space<vmem>>, %arg4: memref<8x32x4xbf16, #tpu.memory_space<vmem>>, %arg5: memref<8x32x4xbf16, #tpu.memory_space<vmem>>, %arg6: memref<8x1x4xf32, #tpu.memory_space<vmem>>, %arg7: memref<8x1x4xf32, #tpu.memory_space<vmem>>, %arg8: memref<8x1x4xf32, #tpu.memory_space<vmem>>, %arg9: memref<8x4x32xbf16, #tpu.memory_space<vmem>>, %arg10: memref<1x32xf32, #tpu.memory_space<vmem>>, %arg11: memref<32x32xbf16, #tpu.memory_space<vmem>>, %arg12: memref<1x32xf32, #tpu.memory_space<vmem>>, %arg13: memref<1x32xf32, #tpu.memory_space<vmem>>, %arg14: memref<1x32xf32, #tpu.memory_space<vmem>>, %arg15: memref<32x32xbf16, #tpu.memory_space<vmem>>, %arg16: memref<1x32xf32, #tpu.memory_space<vmem>>, %arg17: memref<1x1xf32, #tpu.memory_space<smem>>, %arg18: memref<1x16x32xf32, #tpu.memory_space<vmem>>) attributes {dimension_semantics = [#tpu.dimension_semantics<parallel>], iteration_bounds = array<i64: 2>, scalar_prefetch = 0 : i64, scratch_operands = 0 : i64, tpu.core_type = #tpu.core_type<tc>, window_params = [{transform_indices = @transform_0, window_bounds = array<i64: 1, 16, 32>}, {transform_indices = @transform_1, window_bounds = array<i64: 1, 1, 16>}, {pipeline_mode = #tpu.pipeline_mode<synchronous>, transform_indices = @transform_2, window_bounds = array<i64: 8, 32, 4>}, {pipeline_mode = #tpu.pipeline_mode<synchronous>, transform_indices = @transform_3, window_bounds = array<i64: 8, 32, 4>}, {pipeline_mode = #tpu.pipeline_mode<synchronous>, transform_indices = @transform_4, window_bounds = array<i64: 8, 32, 4>}, {pipeline_mode = #tpu.pipeline_mode<synchronous>, transform_indices = @transform_5, window_bounds = array<i64: 8, 1, 4>}, {pipeline_mode = #tpu.pipeline_mode<synchronous>, transform_indices = @transform_6, window_bounds = array<i64: 8, 1, 4>}, {pipeline_mode = #tpu.pipeline_mode<synchronous>, transform_indices = @transform_7, window_bounds = array<i64: 8, 1, 4>}, {pipeline_mode = #tpu.pipeline_mode<synchronous>, transform_indices = @transform_8, window_bounds = array<i64: 8, 4, 32>}, {pipeline_mode = #tpu.pipeline_mode<synchronous>, transform_indices = @transform_9, window_bounds = array<i64: 1, 32>}, {pipeline_mode = #tpu.pipeline_mode<synchronous>, transform_indices = @transform_10, window_bounds = array<i64: 32, 32>}, {pipeline_mode = #tpu.pipeline_mode<synchronous>, transform_indices = @transform_11, window_bounds = array<i64: 1, 32>}, {pipeline_mode = #tpu.pipeline_mode<synchronous>, transform_indices = @transform_12, window_bounds = array<i64: 1, 32>}, {pipeline_mode = #tpu.pipeline_mode<synchronous>, transform_indices = @transform_13, window_bounds = array<i64: 1, 32>}, {pipeline_mode = #tpu.pipeline_mode<synchronous>, transform_indices = @transform_14, window_bounds = array<i64: 32, 32>}, {pipeline_mode = #tpu.pipeline_mode<synchronous>, transform_indices = @transform_15, window_bounds = array<i64: 1, 32>}, {transform_indices = @transform_16, window_bounds = array<i64: 1, 1>}, {transform_indices = @transform_17, window_bounds = array<i64: 1, 16, 32>}]} {
    %c0 = arith.constant 0 : index
    %c0_0 = arith.constant 0 : index
    %c0_1 = arith.constant 0 : index
    %0 = vector.load %arg1[%c0, %c0_0, %c0_1] : memref<1x16x32xf32, #tpu.memory_space<vmem>>, vector<1x16x32xf32>
    %1 = vector.shape_cast %0 : vector<1x16x32xf32> to vector<16x32xf32>
    %2 = arith.truncf %1 : vector<16x32xf32> to vector<16x32xbf16>
    %c0_2 = arith.constant 0 : index
    %c0_3 = arith.constant 0 : index
    %c0_4 = arith.constant 0 : index
    %3 = vector.load %arg2[%c0_2, %c0_3, %c0_4] : memref<1x1x16xi32, #tpu.memory_space<vmem>>, vector<1x1x16xi32>
    %4 = vector.shape_cast %3 : vector<1x1x16xi32> to vector<1x16xi32>
    %5 = tpu.iota {dimensions = array<i32: 0>} : vector<4x16xi32>
    %6 = vector.broadcast %4 : vector<1x16xi32> to vector<4x16xi32>
    %7 = arith.cmpi eq, %5, %6 : vector<4x16xi32>
    %8 = arith.extui %7 : vector<4x16xi1> to vector<4x16xi32>
    %9 = arith.sitofp %8 : vector<4x16xi32> to vector<4x16xf32>
    %10 = tpu.transpose %9, [1, 0] : vector<4x16xf32> -> vector<16x4xf32>
    %cst = arith.constant dense<0.000000e+00> : vector<4xf32>
    %11 = vector.multi_reduction <add>, %9, %cst [1] : vector<4x16xf32> to vector<4xf32>
    %12 = vector.shape_cast %11 : vector<4xf32> to vector<4x1xf32>
    %13 = arith.truncf %9 : vector<4x16xf32> to vector<4x16xbf16>
    %14 = arith.truncf %10 : vector<16x4xf32> to vector<16x4xbf16>
    %cst_5 = arith.constant dense<0.000000e+00> : vector<16x16xf32>
    %15 = tpu.matmul %14, %13, %cst_5 {dimension_numbers = #tpu.dot_dimension_numbers<[1], [0], [0], [1], [0, 0, 1, 1], [], []>} : vector<16x4xbf16>, vector<4x16xbf16>, vector<16x16xf32> -> vector<16x16xf32>
    %cst_6 = arith.constant 5.000000e-01 : f32
    %16 = vector.broadcast %cst_6 : f32 to vector<16x16xf32>
    %17 = arith.cmpf ogt, %15, %16 : vector<16x16xf32>
    %cst_7 = arith.constant dense<0.000000e+00> : vector<16xf32>
    %18 = vector.multi_reduction <add>, %15, %cst_7 [1] : vector<16x16xf32> to vector<16xf32>
    %19 = vector.shape_cast %18 : vector<16xf32> to vector<16x1xf32>
    %cst_8 = arith.constant 0.000000e+00 : f32
    %20 = vector.broadcast %cst_8 : f32 to vector<16x32xf32>
    %c0_9 = arith.constant 0 : index
    %c0_10 = arith.constant 0 : index
    %21 = vector.load %arg10[%c0_9, %c0_10] : memref<1x32xf32, #tpu.memory_space<vmem>>, vector<1x32xf32>
    %22 = vector.broadcast %21 : vector<1x32xf32> to vector<16x32xf32>
    %23 = arith.addf %20, %22 : vector<16x32xf32>
    %c0_11 = arith.constant 0 : index
    %c0_12 = arith.constant 0 : index
    %c0_13 = arith.constant 0 : index
    %24 = vector.load %arg3[%c0_11, %c0_12, %c0_13] : memref<8x32x4xbf16, #tpu.memory_space<vmem>>, vector<1x32x4xbf16>
    %25 = vector.shape_cast %24 : vector<1x32x4xbf16> to vector<32x4xbf16>
    %cst_14 = arith.constant dense<0.000000e+00> : vector<16x4xf32>
    %26 = tpu.matmul %2, %25, %cst_14 {dimension_numbers = #tpu.dot_dimension_numbers<[1], [0], [0], [1], [0, 0, 1, 1], [], []>} : vector<16x32xbf16>, vector<32x4xbf16>, vector<16x4xf32> -> vector<16x4xf32>
    %c0_15 = arith.constant 0 : index
    %c0_16 = arith.constant 0 : index
    %c0_17 = arith.constant 0 : index
    %27 = vector.load %arg6[%c0_15, %c0_16, %c0_17] : memref<8x1x4xf32, #tpu.memory_space<vmem>>, vector<1x1x4xf32>
    %28 = vector.shape_cast %27 : vector<1x1x4xf32> to vector<1x4xf32>
    %29 = vector.broadcast %28 : vector<1x4xf32> to vector<16x4xf32>
    %30 = arith.addf %26, %29 : vector<16x4xf32>
    %cst_18 = arith.constant 5.000000e-01 : f32
    %31 = vector.broadcast %cst_18 : f32 to vector<16x4xf32>
    %32 = arith.mulf %30, %31 : vector<16x4xf32>
    %c0_19 = arith.constant 0 : index
    %c0_20 = arith.constant 0 : index
    %c0_21 = arith.constant 0 : index
    %33 = vector.load %arg4[%c0_19, %c0_20, %c0_21] : memref<8x32x4xbf16, #tpu.memory_space<vmem>>, vector<1x32x4xbf16>
    %34 = vector.shape_cast %33 : vector<1x32x4xbf16> to vector<32x4xbf16>
    %cst_22 = arith.constant dense<0.000000e+00> : vector<16x4xf32>
    %35 = tpu.matmul %2, %34, %cst_22 {dimension_numbers = #tpu.dot_dimension_numbers<[1], [0], [0], [1], [0, 0, 1, 1], [], []>} : vector<16x32xbf16>, vector<32x4xbf16>, vector<16x4xf32> -> vector<16x4xf32>
    %c0_23 = arith.constant 0 : index
    %c0_24 = arith.constant 0 : index
    %c0_25 = arith.constant 0 : index
    %36 = vector.load %arg7[%c0_23, %c0_24, %c0_25] : memref<8x1x4xf32, #tpu.memory_space<vmem>>, vector<1x1x4xf32>
    %37 = vector.shape_cast %36 : vector<1x1x4xf32> to vector<1x4xf32>
    %38 = vector.broadcast %37 : vector<1x4xf32> to vector<16x4xf32>
    %39 = arith.addf %35, %38 : vector<16x4xf32>
    %c0_26 = arith.constant 0 : index
    %c0_27 = arith.constant 0 : index
    %c0_28 = arith.constant 0 : index
    %40 = vector.load %arg5[%c0_26, %c0_27, %c0_28] : memref<8x32x4xbf16, #tpu.memory_space<vmem>>, vector<1x32x4xbf16>
    %41 = vector.shape_cast %40 : vector<1x32x4xbf16> to vector<32x4xbf16>
    %cst_29 = arith.constant dense<0.000000e+00> : vector<16x4xf32>
    %42 = tpu.matmul %2, %41, %cst_29 {dimension_numbers = #tpu.dot_dimension_numbers<[1], [0], [0], [1], [0, 0, 1, 1], [], []>} : vector<16x32xbf16>, vector<32x4xbf16>, vector<16x4xf32> -> vector<16x4xf32>
    %c0_30 = arith.constant 0 : index
    %c0_31 = arith.constant 0 : index
    %c0_32 = arith.constant 0 : index
    %43 = vector.load %arg8[%c0_30, %c0_31, %c0_32] : memref<8x1x4xf32, #tpu.memory_space<vmem>>, vector<1x1x4xf32>
    %44 = vector.shape_cast %43 : vector<1x1x4xf32> to vector<1x4xf32>
    %45 = vector.broadcast %44 : vector<1x4xf32> to vector<16x4xf32>
    %46 = arith.addf %42, %45 : vector<16x4xf32>
    %47 = arith.truncf %32 : vector<16x4xf32> to vector<16x4xbf16>
    %48 = arith.truncf %39 : vector<16x4xf32> to vector<16x4xbf16>
    %cst_33 = arith.constant dense<0.000000e+00> : vector<16x16xf32>
    %49 = tpu.matmul %47, %48, %cst_33 {dimension_numbers = #tpu.dot_dimension_numbers<[1], [1], [0], [0], [0, 0, 1, 0], [], []>} : vector<16x4xbf16>, vector<16x4xbf16>, vector<16x16xf32> -> vector<16x16xf32>
    %cst_34 = arith.constant -1.000000e+30 : f32
    %50 = vector.broadcast %cst_34 : f32 to vector<16x16xf32>
    %51 = arith.select %17, %49, %50 : vector<16x16xi1>, vector<16x16xf32>
    %cst_35 = arith.constant dense<0xFF800000> : vector<16xf32>
    %52 = vector.multi_reduction <maximumf>, %51, %cst_35 [1] : vector<16x16xf32> to vector<16xf32>
    %53 = vector.shape_cast %52 : vector<16xf32> to vector<16x1xf32>
    %54 = vector.broadcast %53 : vector<16x1xf32> to vector<16x16xf32>
    %55 = arith.subf %51, %54 : vector<16x16xf32>
    %56 = math.exp %55 : vector<16x16xf32>
    %cst_36 = arith.constant dense<0.000000e+00> : vector<16xf32>
    %57 = vector.multi_reduction <add>, %56, %cst_36 [1] : vector<16x16xf32> to vector<16xf32>
    %58 = vector.shape_cast %57 : vector<16xf32> to vector<16x1xf32>
    %59 = arith.truncf %56 : vector<16x16xf32> to vector<16x16xbf16>
    %60 = arith.truncf %46 : vector<16x4xf32> to vector<16x4xbf16>
    %cst_37 = arith.constant dense<0.000000e+00> : vector<16x4xf32>
    %61 = tpu.matmul %59, %60, %cst_37 {dimension_numbers = #tpu.dot_dimension_numbers<[1], [0], [0], [1], [0, 0, 1, 1], [], []>} : vector<16x16xbf16>, vector<16x4xbf16>, vector<16x4xf32> -> vector<16x4xf32>
    %62 = tpu.reciprocal %58 {approx = true} : vector<16x1xf32> -> vector<16x1xf32>
    %63 = vector.broadcast %62 : vector<16x1xf32> to vector<16x4xf32>
    %64 = arith.mulf %61, %63 : vector<16x4xf32>
    %65 = arith.truncf %64 : vector<16x4xf32> to vector<16x4xbf16>
    %c0_38 = arith.constant 0 : index
    %c0_39 = arith.constant 0 : index
    %c0_40 = arith.constant 0 : index
    %66 = vector.load %arg9[%c0_38, %c0_39, %c0_40] : memref<8x4x32xbf16, #tpu.memory_space<vmem>>, vector<1x4x32xbf16>
    %67 = vector.shape_cast %66 : vector<1x4x32xbf16> to vector<4x32xbf16>
    %cst_41 = arith.constant dense<0.000000e+00> : vector<16x32xf32>
    %68 = tpu.matmul %65, %67, %cst_41 {dimension_numbers = #tpu.dot_dimension_numbers<[1], [0], [0], [1], [0, 0, 1, 1], [], []>} : vector<16x4xbf16>, vector<4x32xbf16>, vector<16x32xf32> -> vector<16x32xf32>
    %69 = arith.addf %23, %68 : vector<16x32xf32>
    %c1 = arith.constant 1 : index
    %c0_42 = arith.constant 0 : index
    %c0_43 = arith.constant 0 : index
    %70 = vector.load %arg3[%c1, %c0_42, %c0_43] : memref<8x32x4xbf16, #tpu.memory_space<vmem>>, vector<1x32x4xbf16>
    %71 = vector.shape_cast %70 : vector<1x32x4xbf16> to vector<32x4xbf16>
    %cst_44 = arith.constant dense<0.000000e+00> : vector<16x4xf32>
    %72 = tpu.matmul %2, %71, %cst_44 {dimension_numbers = #tpu.dot_dimension_numbers<[1], [0], [0], [1], [0, 0, 1, 1], [], []>} : vector<16x32xbf16>, vector<32x4xbf16>, vector<16x4xf32> -> vector<16x4xf32>
    %c1_45 = arith.constant 1 : index
    %c0_46 = arith.constant 0 : index
    %c0_47 = arith.constant 0 : index
    %73 = vector.load %arg6[%c1_45, %c0_46, %c0_47] : memref<8x1x4xf32, #tpu.memory_space<vmem>>, vector<1x1x4xf32>
    %74 = vector.shape_cast %73 : vector<1x1x4xf32> to vector<1x4xf32>
    %75 = vector.broadcast %74 : vector<1x4xf32> to vector<16x4xf32>
    %76 = arith.addf %72, %75 : vector<16x4xf32>
    %cst_48 = arith.constant 5.000000e-01 : f32
    %77 = vector.broadcast %cst_48 : f32 to vector<16x4xf32>
    %78 = arith.mulf %76, %77 : vector<16x4xf32>
    %c1_49 = arith.constant 1 : index
    %c0_50 = arith.constant 0 : index
    %c0_51 = arith.constant 0 : index
    %79 = vector.load %arg4[%c1_49, %c0_50, %c0_51] : memref<8x32x4xbf16, #tpu.memory_space<vmem>>, vector<1x32x4xbf16>
    %80 = vector.shape_cast %79 : vector<1x32x4xbf16> to vector<32x4xbf16>
    %cst_52 = arith.constant dense<0.000000e+00> : vector<16x4xf32>
    %81 = tpu.matmul %2, %80, %cst_52 {dimension_numbers = #tpu.dot_dimension_numbers<[1], [0], [0], [1], [0, 0, 1, 1], [], []>} : vector<16x32xbf16>, vector<32x4xbf16>, vector<16x4xf32> -> vector<16x4xf32>
    %c1_53 = arith.constant 1 : index
    %c0_54 = arith.constant 0 : index
    %c0_55 = arith.constant 0 : index
    %82 = vector.load %arg7[%c1_53, %c0_54, %c0_55] : memref<8x1x4xf32, #tpu.memory_space<vmem>>, vector<1x1x4xf32>
    %83 = vector.shape_cast %82 : vector<1x1x4xf32> to vector<1x4xf32>
    %84 = vector.broadcast %83 : vector<1x4xf32> to vector<16x4xf32>
    %85 = arith.addf %81, %84 : vector<16x4xf32>
    %c1_56 = arith.constant 1 : index
    %c0_57 = arith.constant 0 : index
    %c0_58 = arith.constant 0 : index
    %86 = vector.load %arg5[%c1_56, %c0_57, %c0_58] : memref<8x32x4xbf16, #tpu.memory_space<vmem>>, vector<1x32x4xbf16>
    %87 = vector.shape_cast %86 : vector<1x32x4xbf16> to vector<32x4xbf16>
    %cst_59 = arith.constant dense<0.000000e+00> : vector<16x4xf32>
    %88 = tpu.matmul %2, %87, %cst_59 {dimension_numbers = #tpu.dot_dimension_numbers<[1], [0], [0], [1], [0, 0, 1, 1], [], []>} : vector<16x32xbf16>, vector<32x4xbf16>, vector<16x4xf32> -> vector<16x4xf32>
    %c1_60 = arith.constant 1 : index
    %c0_61 = arith.constant 0 : index
    %c0_62 = arith.constant 0 : index
    %89 = vector.load %arg8[%c1_60, %c0_61, %c0_62] : memref<8x1x4xf32, #tpu.memory_space<vmem>>, vector<1x1x4xf32>
    %90 = vector.shape_cast %89 : vector<1x1x4xf32> to vector<1x4xf32>
    %91 = vector.broadcast %90 : vector<1x4xf32> to vector<16x4xf32>
    %92 = arith.addf %88, %91 : vector<16x4xf32>
    %93 = arith.truncf %78 : vector<16x4xf32> to vector<16x4xbf16>
    %94 = arith.truncf %85 : vector<16x4xf32> to vector<16x4xbf16>
    %cst_63 = arith.constant dense<0.000000e+00> : vector<16x16xf32>
    %95 = tpu.matmul %93, %94, %cst_63 {dimension_numbers = #tpu.dot_dimension_numbers<[1], [1], [0], [0], [0, 0, 1, 0], [], []>} : vector<16x4xbf16>, vector<16x4xbf16>, vector<16x16xf32> -> vector<16x16xf32>
    %cst_64 = arith.constant -1.000000e+30 : f32
    %96 = vector.broadcast %cst_64 : f32 to vector<16x16xf32>
    %97 = arith.select %17, %95, %96 : vector<16x16xi1>, vector<16x16xf32>
    %cst_65 = arith.constant dense<0xFF800000> : vector<16xf32>
    %98 = vector.multi_reduction <maximumf>, %97, %cst_65 [1] : vector<16x16xf32> to vector<16xf32>
    %99 = vector.shape_cast %98 : vector<16xf32> to vector<16x1xf32>
    %100 = vector.broadcast %99 : vector<16x1xf32> to vector<16x16xf32>
    %101 = arith.subf %97, %100 : vector<16x16xf32>
    %102 = math.exp %101 : vector<16x16xf32>
    %cst_66 = arith.constant dense<0.000000e+00> : vector<16xf32>
    %103 = vector.multi_reduction <add>, %102, %cst_66 [1] : vector<16x16xf32> to vector<16xf32>
    %104 = vector.shape_cast %103 : vector<16xf32> to vector<16x1xf32>
    %105 = arith.truncf %102 : vector<16x16xf32> to vector<16x16xbf16>
    %106 = arith.truncf %92 : vector<16x4xf32> to vector<16x4xbf16>
    %cst_67 = arith.constant dense<0.000000e+00> : vector<16x4xf32>
    %107 = tpu.matmul %105, %106, %cst_67 {dimension_numbers = #tpu.dot_dimension_numbers<[1], [0], [0], [1], [0, 0, 1, 1], [], []>} : vector<16x16xbf16>, vector<16x4xbf16>, vector<16x4xf32> -> vector<16x4xf32>
    %108 = tpu.reciprocal %104 {approx = true} : vector<16x1xf32> -> vector<16x1xf32>
    %109 = vector.broadcast %108 : vector<16x1xf32> to vector<16x4xf32>
    %110 = arith.mulf %107, %109 : vector<16x4xf32>
    %111 = arith.truncf %110 : vector<16x4xf32> to vector<16x4xbf16>
    %c1_68 = arith.constant 1 : index
    %c0_69 = arith.constant 0 : index
    %c0_70 = arith.constant 0 : index
    %112 = vector.load %arg9[%c1_68, %c0_69, %c0_70] : memref<8x4x32xbf16, #tpu.memory_space<vmem>>, vector<1x4x32xbf16>
    %113 = vector.shape_cast %112 : vector<1x4x32xbf16> to vector<4x32xbf16>
    %cst_71 = arith.constant dense<0.000000e+00> : vector<16x32xf32>
    %114 = tpu.matmul %111, %113, %cst_71 {dimension_numbers = #tpu.dot_dimension_numbers<[1], [0], [0], [1], [0, 0, 1, 1], [], []>} : vector<16x4xbf16>, vector<4x32xbf16>, vector<16x32xf32> -> vector<16x32xf32>
    %115 = arith.addf %69, %114 : vector<16x32xf32>
    %c2 = arith.constant 2 : index
    %c0_72 = arith.constant 0 : index
    %c0_73 = arith.constant 0 : index
    %116 = vector.load %arg3[%c2, %c0_72, %c0_73] : memref<8x32x4xbf16, #tpu.memory_space<vmem>>, vector<1x32x4xbf16>
    %117 = vector.shape_cast %116 : vector<1x32x4xbf16> to vector<32x4xbf16>
    %cst_74 = arith.constant dense<0.000000e+00> : vector<16x4xf32>
    %118 = tpu.matmul %2, %117, %cst_74 {dimension_numbers = #tpu.dot_dimension_numbers<[1], [0], [0], [1], [0, 0, 1, 1], [], []>} : vector<16x32xbf16>, vector<32x4xbf16>, vector<16x4xf32> -> vector<16x4xf32>
    %c2_75 = arith.constant 2 : index
    %c0_76 = arith.constant 0 : index
    %c0_77 = arith.constant 0 : index
    %119 = vector.load %arg6[%c2_75, %c0_76, %c0_77] : memref<8x1x4xf32, #tpu.memory_space<vmem>>, vector<1x1x4xf32>
    %120 = vector.shape_cast %119 : vector<1x1x4xf32> to vector<1x4xf32>
    %121 = vector.broadcast %120 : vector<1x4xf32> to vector<16x4xf32>
    %122 = arith.addf %118, %121 : vector<16x4xf32>
    %cst_78 = arith.constant 5.000000e-01 : f32
    %123 = vector.broadcast %cst_78 : f32 to vector<16x4xf32>
    %124 = arith.mulf %122, %123 : vector<16x4xf32>
    %c2_79 = arith.constant 2 : index
    %c0_80 = arith.constant 0 : index
    %c0_81 = arith.constant 0 : index
    %125 = vector.load %arg4[%c2_79, %c0_80, %c0_81] : memref<8x32x4xbf16, #tpu.memory_space<vmem>>, vector<1x32x4xbf16>
    %126 = vector.shape_cast %125 : vector<1x32x4xbf16> to vector<32x4xbf16>
    %cst_82 = arith.constant dense<0.000000e+00> : vector<16x4xf32>
    %127 = tpu.matmul %2, %126, %cst_82 {dimension_numbers = #tpu.dot_dimension_numbers<[1], [0], [0], [1], [0, 0, 1, 1], [], []>} : vector<16x32xbf16>, vector<32x4xbf16>, vector<16x4xf32> -> vector<16x4xf32>
    %c2_83 = arith.constant 2 : index
    %c0_84 = arith.constant 0 : index
    %c0_85 = arith.constant 0 : index
    %128 = vector.load %arg7[%c2_83, %c0_84, %c0_85] : memref<8x1x4xf32, #tpu.memory_space<vmem>>, vector<1x1x4xf32>
    %129 = vector.shape_cast %128 : vector<1x1x4xf32> to vector<1x4xf32>
    %130 = vector.broadcast %129 : vector<1x4xf32> to vector<16x4xf32>
    %131 = arith.addf %127, %130 : vector<16x4xf32>
    %c2_86 = arith.constant 2 : index
    %c0_87 = arith.constant 0 : index
    %c0_88 = arith.constant 0 : index
    %132 = vector.load %arg5[%c2_86, %c0_87, %c0_88] : memref<8x32x4xbf16, #tpu.memory_space<vmem>>, vector<1x32x4xbf16>
    %133 = vector.shape_cast %132 : vector<1x32x4xbf16> to vector<32x4xbf16>
    %cst_89 = arith.constant dense<0.000000e+00> : vector<16x4xf32>
    %134 = tpu.matmul %2, %133, %cst_89 {dimension_numbers = #tpu.dot_dimension_numbers<[1], [0], [0], [1], [0, 0, 1, 1], [], []>} : vector<16x32xbf16>, vector<32x4xbf16>, vector<16x4xf32> -> vector<16x4xf32>
    %c2_90 = arith.constant 2 : index
    %c0_91 = arith.constant 0 : index
    %c0_92 = arith.constant 0 : index
    %135 = vector.load %arg8[%c2_90, %c0_91, %c0_92] : memref<8x1x4xf32, #tpu.memory_space<vmem>>, vector<1x1x4xf32>
    %136 = vector.shape_cast %135 : vector<1x1x4xf32> to vector<1x4xf32>
    %137 = vector.broadcast %136 : vector<1x4xf32> to vector<16x4xf32>
    %138 = arith.addf %134, %137 : vector<16x4xf32>
    %139 = arith.truncf %124 : vector<16x4xf32> to vector<16x4xbf16>
    %140 = arith.truncf %131 : vector<16x4xf32> to vector<16x4xbf16>
    %cst_93 = arith.constant dense<0.000000e+00> : vector<16x16xf32>
    %141 = tpu.matmul %139, %140, %cst_93 {dimension_numbers = #tpu.dot_dimension_numbers<[1], [1], [0], [0], [0, 0, 1, 0], [], []>} : vector<16x4xbf16>, vector<16x4xbf16>, vector<16x16xf32> -> vector<16x16xf32>
    %cst_94 = arith.constant -1.000000e+30 : f32
    %142 = vector.broadcast %cst_94 : f32 to vector<16x16xf32>
    %143 = arith.select %17, %141, %142 : vector<16x16xi1>, vector<16x16xf32>
    %cst_95 = arith.constant dense<0xFF800000> : vector<16xf32>
    %144 = vector.multi_reduction <maximumf>, %143, %cst_95 [1] : vector<16x16xf32> to vector<16xf32>
    %145 = vector.shape_cast %144 : vector<16xf32> to vector<16x1xf32>
    %146 = vector.broadcast %145 : vector<16x1xf32> to vector<16x16xf32>
    %147 = arith.subf %143, %146 : vector<16x16xf32>
    %148 = math.exp %147 : vector<16x16xf32>
    %cst_96 = arith.constant dense<0.000000e+00> : vector<16xf32>
    %149 = vector.multi_reduction <add>, %148, %cst_96 [1] : vector<16x16xf32> to vector<16xf32>
    %150 = vector.shape_cast %149 : vector<16xf32> to vector<16x1xf32>
    %151 = arith.truncf %148 : vector<16x16xf32> to vector<16x16xbf16>
    %152 = arith.truncf %138 : vector<16x4xf32> to vector<16x4xbf16>
    %cst_97 = arith.constant dense<0.000000e+00> : vector<16x4xf32>
    %153 = tpu.matmul %151, %152, %cst_97 {dimension_numbers = #tpu.dot_dimension_numbers<[1], [0], [0], [1], [0, 0, 1, 1], [], []>} : vector<16x16xbf16>, vector<16x4xbf16>, vector<16x4xf32> -> vector<16x4xf32>
    %154 = tpu.reciprocal %150 {approx = true} : vector<16x1xf32> -> vector<16x1xf32>
    %155 = vector.broadcast %154 : vector<16x1xf32> to vector<16x4xf32>
    %156 = arith.mulf %153, %155 : vector<16x4xf32>
    %157 = arith.truncf %156 : vector<16x4xf32> to vector<16x4xbf16>
    %c2_98 = arith.constant 2 : index
    %c0_99 = arith.constant 0 : index
    %c0_100 = arith.constant 0 : index
    %158 = vector.load %arg9[%c2_98, %c0_99, %c0_100] : memref<8x4x32xbf16, #tpu.memory_space<vmem>>, vector<1x4x32xbf16>
    %159 = vector.shape_cast %158 : vector<1x4x32xbf16> to vector<4x32xbf16>
    %cst_101 = arith.constant dense<0.000000e+00> : vector<16x32xf32>
    %160 = tpu.matmul %157, %159, %cst_101 {dimension_numbers = #tpu.dot_dimension_numbers<[1], [0], [0], [1], [0, 0, 1, 1], [], []>} : vector<16x4xbf16>, vector<4x32xbf16>, vector<16x32xf32> -> vector<16x32xf32>
    %161 = arith.addf %115, %160 : vector<16x32xf32>
    %c3 = arith.constant 3 : index
    %c0_102 = arith.constant 0 : index
    %c0_103 = arith.constant 0 : index
    %162 = vector.load %arg3[%c3, %c0_102, %c0_103] : memref<8x32x4xbf16, #tpu.memory_space<vmem>>, vector<1x32x4xbf16>
    %163 = vector.shape_cast %162 : vector<1x32x4xbf16> to vector<32x4xbf16>
    %cst_104 = arith.constant dense<0.000000e+00> : vector<16x4xf32>
    %164 = tpu.matmul %2, %163, %cst_104 {dimension_numbers = #tpu.dot_dimension_numbers<[1], [0], [0], [1], [0, 0, 1, 1], [], []>} : vector<16x32xbf16>, vector<32x4xbf16>, vector<16x4xf32> -> vector<16x4xf32>
    %c3_105 = arith.constant 3 : index
    %c0_106 = arith.constant 0 : index
    %c0_107 = arith.constant 0 : index
    %165 = vector.load %arg6[%c3_105, %c0_106, %c0_107] : memref<8x1x4xf32, #tpu.memory_space<vmem>>, vector<1x1x4xf32>
    %166 = vector.shape_cast %165 : vector<1x1x4xf32> to vector<1x4xf32>
    %167 = vector.broadcast %166 : vector<1x4xf32> to vector<16x4xf32>
    %168 = arith.addf %164, %167 : vector<16x4xf32>
    %cst_108 = arith.constant 5.000000e-01 : f32
    %169 = vector.broadcast %cst_108 : f32 to vector<16x4xf32>
    %170 = arith.mulf %168, %169 : vector<16x4xf32>
    %c3_109 = arith.constant 3 : index
    %c0_110 = arith.constant 0 : index
    %c0_111 = arith.constant 0 : index
    %171 = vector.load %arg4[%c3_109, %c0_110, %c0_111] : memref<8x32x4xbf16, #tpu.memory_space<vmem>>, vector<1x32x4xbf16>
    %172 = vector.shape_cast %171 : vector<1x32x4xbf16> to vector<32x4xbf16>
    %cst_112 = arith.constant dense<0.000000e+00> : vector<16x4xf32>
    %173 = tpu.matmul %2, %172, %cst_112 {dimension_numbers = #tpu.dot_dimension_numbers<[1], [0], [0], [1], [0, 0, 1, 1], [], []>} : vector<16x32xbf16>, vector<32x4xbf16>, vector<16x4xf32> -> vector<16x4xf32>
    %c3_113 = arith.constant 3 : index
    %c0_114 = arith.constant 0 : index
    %c0_115 = arith.constant 0 : index
    %174 = vector.load %arg7[%c3_113, %c0_114, %c0_115] : memref<8x1x4xf32, #tpu.memory_space<vmem>>, vector<1x1x4xf32>
    %175 = vector.shape_cast %174 : vector<1x1x4xf32> to vector<1x4xf32>
    %176 = vector.broadcast %175 : vector<1x4xf32> to vector<16x4xf32>
    %177 = arith.addf %173, %176 : vector<16x4xf32>
    %c3_116 = arith.constant 3 : index
    %c0_117 = arith.constant 0 : index
    %c0_118 = arith.constant 0 : index
    %178 = vector.load %arg5[%c3_116, %c0_117, %c0_118] : memref<8x32x4xbf16, #tpu.memory_space<vmem>>, vector<1x32x4xbf16>
    %179 = vector.shape_cast %178 : vector<1x32x4xbf16> to vector<32x4xbf16>
    %cst_119 = arith.constant dense<0.000000e+00> : vector<16x4xf32>
    %180 = tpu.matmul %2, %179, %cst_119 {dimension_numbers = #tpu.dot_dimension_numbers<[1], [0], [0], [1], [0, 0, 1, 1], [], []>} : vector<16x32xbf16>, vector<32x4xbf16>, vector<16x4xf32> -> vector<16x4xf32>
    %c3_120 = arith.constant 3 : index
    %c0_121 = arith.constant 0 : index
    %c0_122 = arith.constant 0 : index
    %181 = vector.load %arg8[%c3_120, %c0_121, %c0_122] : memref<8x1x4xf32, #tpu.memory_space<vmem>>, vector<1x1x4xf32>
    %182 = vector.shape_cast %181 : vector<1x1x4xf32> to vector<1x4xf32>
    %183 = vector.broadcast %182 : vector<1x4xf32> to vector<16x4xf32>
    %184 = arith.addf %180, %183 : vector<16x4xf32>
    %185 = arith.truncf %170 : vector<16x4xf32> to vector<16x4xbf16>
    %186 = arith.truncf %177 : vector<16x4xf32> to vector<16x4xbf16>
    %cst_123 = arith.constant dense<0.000000e+00> : vector<16x16xf32>
    %187 = tpu.matmul %185, %186, %cst_123 {dimension_numbers = #tpu.dot_dimension_numbers<[1], [1], [0], [0], [0, 0, 1, 0], [], []>} : vector<16x4xbf16>, vector<16x4xbf16>, vector<16x16xf32> -> vector<16x16xf32>
    %cst_124 = arith.constant -1.000000e+30 : f32
    %188 = vector.broadcast %cst_124 : f32 to vector<16x16xf32>
    %189 = arith.select %17, %187, %188 : vector<16x16xi1>, vector<16x16xf32>
    %cst_125 = arith.constant dense<0xFF800000> : vector<16xf32>
    %190 = vector.multi_reduction <maximumf>, %189, %cst_125 [1] : vector<16x16xf32> to vector<16xf32>
    %191 = vector.shape_cast %190 : vector<16xf32> to vector<16x1xf32>
    %192 = vector.broadcast %191 : vector<16x1xf32> to vector<16x16xf32>
    %193 = arith.subf %189, %192 : vector<16x16xf32>
    %194 = math.exp %193 : vector<16x16xf32>
    %cst_126 = arith.constant dense<0.000000e+00> : vector<16xf32>
    %195 = vector.multi_reduction <add>, %194, %cst_126 [1] : vector<16x16xf32> to vector<16xf32>
    %196 = vector.shape_cast %195 : vector<16xf32> to vector<16x1xf32>
    %197 = arith.truncf %194 : vector<16x16xf32> to vector<16x16xbf16>
    %198 = arith.truncf %184 : vector<16x4xf32> to vector<16x4xbf16>
    %cst_127 = arith.constant dense<0.000000e+00> : vector<16x4xf32>
    %199 = tpu.matmul %197, %198, %cst_127 {dimension_numbers = #tpu.dot_dimension_numbers<[1], [0], [0], [1], [0, 0, 1, 1], [], []>} : vector<16x16xbf16>, vector<16x4xbf16>, vector<16x4xf32> -> vector<16x4xf32>
    %200 = tpu.reciprocal %196 {approx = true} : vector<16x1xf32> -> vector<16x1xf32>
    %201 = vector.broadcast %200 : vector<16x1xf32> to vector<16x4xf32>
    %202 = arith.mulf %199, %201 : vector<16x4xf32>
    %203 = arith.truncf %202 : vector<16x4xf32> to vector<16x4xbf16>
    %c3_128 = arith.constant 3 : index
    %c0_129 = arith.constant 0 : index
    %c0_130 = arith.constant 0 : index
    %204 = vector.load %arg9[%c3_128, %c0_129, %c0_130] : memref<8x4x32xbf16, #tpu.memory_space<vmem>>, vector<1x4x32xbf16>
    %205 = vector.shape_cast %204 : vector<1x4x32xbf16> to vector<4x32xbf16>
    %cst_131 = arith.constant dense<0.000000e+00> : vector<16x32xf32>
    %206 = tpu.matmul %203, %205, %cst_131 {dimension_numbers = #tpu.dot_dimension_numbers<[1], [0], [0], [1], [0, 0, 1, 1], [], []>} : vector<16x4xbf16>, vector<4x32xbf16>, vector<16x32xf32> -> vector<16x32xf32>
    %207 = arith.addf %161, %206 : vector<16x32xf32>
    %c4 = arith.constant 4 : index
    %c0_132 = arith.constant 0 : index
    %c0_133 = arith.constant 0 : index
    %208 = vector.load %arg3[%c4, %c0_132, %c0_133] : memref<8x32x4xbf16, #tpu.memory_space<vmem>>, vector<1x32x4xbf16>
    %209 = vector.shape_cast %208 : vector<1x32x4xbf16> to vector<32x4xbf16>
    %cst_134 = arith.constant dense<0.000000e+00> : vector<16x4xf32>
    %210 = tpu.matmul %2, %209, %cst_134 {dimension_numbers = #tpu.dot_dimension_numbers<[1], [0], [0], [1], [0, 0, 1, 1], [], []>} : vector<16x32xbf16>, vector<32x4xbf16>, vector<16x4xf32> -> vector<16x4xf32>
    %c4_135 = arith.constant 4 : index
    %c0_136 = arith.constant 0 : index
    %c0_137 = arith.constant 0 : index
    %211 = vector.load %arg6[%c4_135, %c0_136, %c0_137] : memref<8x1x4xf32, #tpu.memory_space<vmem>>, vector<1x1x4xf32>
    %212 = vector.shape_cast %211 : vector<1x1x4xf32> to vector<1x4xf32>
    %213 = vector.broadcast %212 : vector<1x4xf32> to vector<16x4xf32>
    %214 = arith.addf %210, %213 : vector<16x4xf32>
    %cst_138 = arith.constant 5.000000e-01 : f32
    %215 = vector.broadcast %cst_138 : f32 to vector<16x4xf32>
    %216 = arith.mulf %214, %215 : vector<16x4xf32>
    %c4_139 = arith.constant 4 : index
    %c0_140 = arith.constant 0 : index
    %c0_141 = arith.constant 0 : index
    %217 = vector.load %arg4[%c4_139, %c0_140, %c0_141] : memref<8x32x4xbf16, #tpu.memory_space<vmem>>, vector<1x32x4xbf16>
    %218 = vector.shape_cast %217 : vector<1x32x4xbf16> to vector<32x4xbf16>
    %cst_142 = arith.constant dense<0.000000e+00> : vector<16x4xf32>
    %219 = tpu.matmul %2, %218, %cst_142 {dimension_numbers = #tpu.dot_dimension_numbers<[1], [0], [0], [1], [0, 0, 1, 1], [], []>} : vector<16x32xbf16>, vector<32x4xbf16>, vector<16x4xf32> -> vector<16x4xf32>
    %c4_143 = arith.constant 4 : index
    %c0_144 = arith.constant 0 : index
    %c0_145 = arith.constant 0 : index
    %220 = vector.load %arg7[%c4_143, %c0_144, %c0_145] : memref<8x1x4xf32, #tpu.memory_space<vmem>>, vector<1x1x4xf32>
    %221 = vector.shape_cast %220 : vector<1x1x4xf32> to vector<1x4xf32>
    %222 = vector.broadcast %221 : vector<1x4xf32> to vector<16x4xf32>
    %223 = arith.addf %219, %222 : vector<16x4xf32>
    %c4_146 = arith.constant 4 : index
    %c0_147 = arith.constant 0 : index
    %c0_148 = arith.constant 0 : index
    %224 = vector.load %arg5[%c4_146, %c0_147, %c0_148] : memref<8x32x4xbf16, #tpu.memory_space<vmem>>, vector<1x32x4xbf16>
    %225 = vector.shape_cast %224 : vector<1x32x4xbf16> to vector<32x4xbf16>
    %cst_149 = arith.constant dense<0.000000e+00> : vector<16x4xf32>
    %226 = tpu.matmul %2, %225, %cst_149 {dimension_numbers = #tpu.dot_dimension_numbers<[1], [0], [0], [1], [0, 0, 1, 1], [], []>} : vector<16x32xbf16>, vector<32x4xbf16>, vector<16x4xf32> -> vector<16x4xf32>
    %c4_150 = arith.constant 4 : index
    %c0_151 = arith.constant 0 : index
    %c0_152 = arith.constant 0 : index
    %227 = vector.load %arg8[%c4_150, %c0_151, %c0_152] : memref<8x1x4xf32, #tpu.memory_space<vmem>>, vector<1x1x4xf32>
    %228 = vector.shape_cast %227 : vector<1x1x4xf32> to vector<1x4xf32>
    %229 = vector.broadcast %228 : vector<1x4xf32> to vector<16x4xf32>
    %230 = arith.addf %226, %229 : vector<16x4xf32>
    %231 = arith.truncf %216 : vector<16x4xf32> to vector<16x4xbf16>
    %232 = arith.truncf %223 : vector<16x4xf32> to vector<16x4xbf16>
    %cst_153 = arith.constant dense<0.000000e+00> : vector<16x16xf32>
    %233 = tpu.matmul %231, %232, %cst_153 {dimension_numbers = #tpu.dot_dimension_numbers<[1], [1], [0], [0], [0, 0, 1, 0], [], []>} : vector<16x4xbf16>, vector<16x4xbf16>, vector<16x16xf32> -> vector<16x16xf32>
    %cst_154 = arith.constant -1.000000e+30 : f32
    %234 = vector.broadcast %cst_154 : f32 to vector<16x16xf32>
    %235 = arith.select %17, %233, %234 : vector<16x16xi1>, vector<16x16xf32>
    %cst_155 = arith.constant dense<0xFF800000> : vector<16xf32>
    %236 = vector.multi_reduction <maximumf>, %235, %cst_155 [1] : vector<16x16xf32> to vector<16xf32>
    %237 = vector.shape_cast %236 : vector<16xf32> to vector<16x1xf32>
    %238 = vector.broadcast %237 : vector<16x1xf32> to vector<16x16xf32>
    %239 = arith.subf %235, %238 : vector<16x16xf32>
    %240 = math.exp %239 : vector<16x16xf32>
    %cst_156 = arith.constant dense<0.000000e+00> : vector<16xf32>
    %241 = vector.multi_reduction <add>, %240, %cst_156 [1] : vector<16x16xf32> to vector<16xf32>
    %242 = vector.shape_cast %241 : vector<16xf32> to vector<16x1xf32>
    %243 = arith.truncf %240 : vector<16x16xf32> to vector<16x16xbf16>
    %244 = arith.truncf %230 : vector<16x4xf32> to vector<16x4xbf16>
    %cst_157 = arith.constant dense<0.000000e+00> : vector<16x4xf32>
    %245 = tpu.matmul %243, %244, %cst_157 {dimension_numbers = #tpu.dot_dimension_numbers<[1], [0], [0], [1], [0, 0, 1, 1], [], []>} : vector<16x16xbf16>, vector<16x4xbf16>, vector<16x4xf32> -> vector<16x4xf32>
    %246 = tpu.reciprocal %242 {approx = true} : vector<16x1xf32> -> vector<16x1xf32>
    %247 = vector.broadcast %246 : vector<16x1xf32> to vector<16x4xf32>
    %248 = arith.mulf %245, %247 : vector<16x4xf32>
    %249 = arith.truncf %248 : vector<16x4xf32> to vector<16x4xbf16>
    %c4_158 = arith.constant 4 : index
    %c0_159 = arith.constant 0 : index
    %c0_160 = arith.constant 0 : index
    %250 = vector.load %arg9[%c4_158, %c0_159, %c0_160] : memref<8x4x32xbf16, #tpu.memory_space<vmem>>, vector<1x4x32xbf16>
    %251 = vector.shape_cast %250 : vector<1x4x32xbf16> to vector<4x32xbf16>
    %cst_161 = arith.constant dense<0.000000e+00> : vector<16x32xf32>
    %252 = tpu.matmul %249, %251, %cst_161 {dimension_numbers = #tpu.dot_dimension_numbers<[1], [0], [0], [1], [0, 0, 1, 1], [], []>} : vector<16x4xbf16>, vector<4x32xbf16>, vector<16x32xf32> -> vector<16x32xf32>
    %253 = arith.addf %207, %252 : vector<16x32xf32>
    %c5 = arith.constant 5 : index
    %c0_162 = arith.constant 0 : index
    %c0_163 = arith.constant 0 : index
    %254 = vector.load %arg3[%c5, %c0_162, %c0_163] : memref<8x32x4xbf16, #tpu.memory_space<vmem>>, vector<1x32x4xbf16>
    %255 = vector.shape_cast %254 : vector<1x32x4xbf16> to vector<32x4xbf16>
    %cst_164 = arith.constant dense<0.000000e+00> : vector<16x4xf32>
    %256 = tpu.matmul %2, %255, %cst_164 {dimension_numbers = #tpu.dot_dimension_numbers<[1], [0], [0], [1], [0, 0, 1, 1], [], []>} : vector<16x32xbf16>, vector<32x4xbf16>, vector<16x4xf32> -> vector<16x4xf32>
    %c5_165 = arith.constant 5 : index
    %c0_166 = arith.constant 0 : index
    %c0_167 = arith.constant 0 : index
    %257 = vector.load %arg6[%c5_165, %c0_166, %c0_167] : memref<8x1x4xf32, #tpu.memory_space<vmem>>, vector<1x1x4xf32>
    %258 = vector.shape_cast %257 : vector<1x1x4xf32> to vector<1x4xf32>
    %259 = vector.broadcast %258 : vector<1x4xf32> to vector<16x4xf32>
    %260 = arith.addf %256, %259 : vector<16x4xf32>
    %cst_168 = arith.constant 5.000000e-01 : f32
    %261 = vector.broadcast %cst_168 : f32 to vector<16x4xf32>
    %262 = arith.mulf %260, %261 : vector<16x4xf32>
    %c5_169 = arith.constant 5 : index
    %c0_170 = arith.constant 0 : index
    %c0_171 = arith.constant 0 : index
    %263 = vector.load %arg4[%c5_169, %c0_170, %c0_171] : memref<8x32x4xbf16, #tpu.memory_space<vmem>>, vector<1x32x4xbf16>
    %264 = vector.shape_cast %263 : vector<1x32x4xbf16> to vector<32x4xbf16>
    %cst_172 = arith.constant dense<0.000000e+00> : vector<16x4xf32>
    %265 = tpu.matmul %2, %264, %cst_172 {dimension_numbers = #tpu.dot_dimension_numbers<[1], [0], [0], [1], [0, 0, 1, 1], [], []>} : vector<16x32xbf16>, vector<32x4xbf16>, vector<16x4xf32> -> vector<16x4xf32>
    %c5_173 = arith.constant 5 : index
    %c0_174 = arith.constant 0 : index
    %c0_175 = arith.constant 0 : index
    %266 = vector.load %arg7[%c5_173, %c0_174, %c0_175] : memref<8x1x4xf32, #tpu.memory_space<vmem>>, vector<1x1x4xf32>
    %267 = vector.shape_cast %266 : vector<1x1x4xf32> to vector<1x4xf32>
    %268 = vector.broadcast %267 : vector<1x4xf32> to vector<16x4xf32>
    %269 = arith.addf %265, %268 : vector<16x4xf32>
    %c5_176 = arith.constant 5 : index
    %c0_177 = arith.constant 0 : index
    %c0_178 = arith.constant 0 : index
    %270 = vector.load %arg5[%c5_176, %c0_177, %c0_178] : memref<8x32x4xbf16, #tpu.memory_space<vmem>>, vector<1x32x4xbf16>
    %271 = vector.shape_cast %270 : vector<1x32x4xbf16> to vector<32x4xbf16>
    %cst_179 = arith.constant dense<0.000000e+00> : vector<16x4xf32>
    %272 = tpu.matmul %2, %271, %cst_179 {dimension_numbers = #tpu.dot_dimension_numbers<[1], [0], [0], [1], [0, 0, 1, 1], [], []>} : vector<16x32xbf16>, vector<32x4xbf16>, vector<16x4xf32> -> vector<16x4xf32>
    %c5_180 = arith.constant 5 : index
    %c0_181 = arith.constant 0 : index
    %c0_182 = arith.constant 0 : index
    %273 = vector.load %arg8[%c5_180, %c0_181, %c0_182] : memref<8x1x4xf32, #tpu.memory_space<vmem>>, vector<1x1x4xf32>
    %274 = vector.shape_cast %273 : vector<1x1x4xf32> to vector<1x4xf32>
    %275 = vector.broadcast %274 : vector<1x4xf32> to vector<16x4xf32>
    %276 = arith.addf %272, %275 : vector<16x4xf32>
    %277 = arith.truncf %262 : vector<16x4xf32> to vector<16x4xbf16>
    %278 = arith.truncf %269 : vector<16x4xf32> to vector<16x4xbf16>
    %cst_183 = arith.constant dense<0.000000e+00> : vector<16x16xf32>
    %279 = tpu.matmul %277, %278, %cst_183 {dimension_numbers = #tpu.dot_dimension_numbers<[1], [1], [0], [0], [0, 0, 1, 0], [], []>} : vector<16x4xbf16>, vector<16x4xbf16>, vector<16x16xf32> -> vector<16x16xf32>
    %cst_184 = arith.constant -1.000000e+30 : f32
    %280 = vector.broadcast %cst_184 : f32 to vector<16x16xf32>
    %281 = arith.select %17, %279, %280 : vector<16x16xi1>, vector<16x16xf32>
    %cst_185 = arith.constant dense<0xFF800000> : vector<16xf32>
    %282 = vector.multi_reduction <maximumf>, %281, %cst_185 [1] : vector<16x16xf32> to vector<16xf32>
    %283 = vector.shape_cast %282 : vector<16xf32> to vector<16x1xf32>
    %284 = vector.broadcast %283 : vector<16x1xf32> to vector<16x16xf32>
    %285 = arith.subf %281, %284 : vector<16x16xf32>
    %286 = math.exp %285 : vector<16x16xf32>
    %cst_186 = arith.constant dense<0.000000e+00> : vector<16xf32>
    %287 = vector.multi_reduction <add>, %286, %cst_186 [1] : vector<16x16xf32> to vector<16xf32>
    %288 = vector.shape_cast %287 : vector<16xf32> to vector<16x1xf32>
    %289 = arith.truncf %286 : vector<16x16xf32> to vector<16x16xbf16>
    %290 = arith.truncf %276 : vector<16x4xf32> to vector<16x4xbf16>
    %cst_187 = arith.constant dense<0.000000e+00> : vector<16x4xf32>
    %291 = tpu.matmul %289, %290, %cst_187 {dimension_numbers = #tpu.dot_dimension_numbers<[1], [0], [0], [1], [0, 0, 1, 1], [], []>} : vector<16x16xbf16>, vector<16x4xbf16>, vector<16x4xf32> -> vector<16x4xf32>
    %292 = tpu.reciprocal %288 {approx = true} : vector<16x1xf32> -> vector<16x1xf32>
    %293 = vector.broadcast %292 : vector<16x1xf32> to vector<16x4xf32>
    %294 = arith.mulf %291, %293 : vector<16x4xf32>
    %295 = arith.truncf %294 : vector<16x4xf32> to vector<16x4xbf16>
    %c5_188 = arith.constant 5 : index
    %c0_189 = arith.constant 0 : index
    %c0_190 = arith.constant 0 : index
    %296 = vector.load %arg9[%c5_188, %c0_189, %c0_190] : memref<8x4x32xbf16, #tpu.memory_space<vmem>>, vector<1x4x32xbf16>
    %297 = vector.shape_cast %296 : vector<1x4x32xbf16> to vector<4x32xbf16>
    %cst_191 = arith.constant dense<0.000000e+00> : vector<16x32xf32>
    %298 = tpu.matmul %295, %297, %cst_191 {dimension_numbers = #tpu.dot_dimension_numbers<[1], [0], [0], [1], [0, 0, 1, 1], [], []>} : vector<16x4xbf16>, vector<4x32xbf16>, vector<16x32xf32> -> vector<16x32xf32>
    %299 = arith.addf %253, %298 : vector<16x32xf32>
    %c6 = arith.constant 6 : index
    %c0_192 = arith.constant 0 : index
    %c0_193 = arith.constant 0 : index
    %300 = vector.load %arg3[%c6, %c0_192, %c0_193] : memref<8x32x4xbf16, #tpu.memory_space<vmem>>, vector<1x32x4xbf16>
    %301 = vector.shape_cast %300 : vector<1x32x4xbf16> to vector<32x4xbf16>
    %cst_194 = arith.constant dense<0.000000e+00> : vector<16x4xf32>
    %302 = tpu.matmul %2, %301, %cst_194 {dimension_numbers = #tpu.dot_dimension_numbers<[1], [0], [0], [1], [0, 0, 1, 1], [], []>} : vector<16x32xbf16>, vector<32x4xbf16>, vector<16x4xf32> -> vector<16x4xf32>
    %c6_195 = arith.constant 6 : index
    %c0_196 = arith.constant 0 : index
    %c0_197 = arith.constant 0 : index
    %303 = vector.load %arg6[%c6_195, %c0_196, %c0_197] : memref<8x1x4xf32, #tpu.memory_space<vmem>>, vector<1x1x4xf32>
    %304 = vector.shape_cast %303 : vector<1x1x4xf32> to vector<1x4xf32>
    %305 = vector.broadcast %304 : vector<1x4xf32> to vector<16x4xf32>
    %306 = arith.addf %302, %305 : vector<16x4xf32>
    %cst_198 = arith.constant 5.000000e-01 : f32
    %307 = vector.broadcast %cst_198 : f32 to vector<16x4xf32>
    %308 = arith.mulf %306, %307 : vector<16x4xf32>
    %c6_199 = arith.constant 6 : index
    %c0_200 = arith.constant 0 : index
    %c0_201 = arith.constant 0 : index
    %309 = vector.load %arg4[%c6_199, %c0_200, %c0_201] : memref<8x32x4xbf16, #tpu.memory_space<vmem>>, vector<1x32x4xbf16>
    %310 = vector.shape_cast %309 : vector<1x32x4xbf16> to vector<32x4xbf16>
    %cst_202 = arith.constant dense<0.000000e+00> : vector<16x4xf32>
    %311 = tpu.matmul %2, %310, %cst_202 {dimension_numbers = #tpu.dot_dimension_numbers<[1], [0], [0], [1], [0, 0, 1, 1], [], []>} : vector<16x32xbf16>, vector<32x4xbf16>, vector<16x4xf32> -> vector<16x4xf32>
    %c6_203 = arith.constant 6 : index
    %c0_204 = arith.constant 0 : index
    %c0_205 = arith.constant 0 : index
    %312 = vector.load %arg7[%c6_203, %c0_204, %c0_205] : memref<8x1x4xf32, #tpu.memory_space<vmem>>, vector<1x1x4xf32>
    %313 = vector.shape_cast %312 : vector<1x1x4xf32> to vector<1x4xf32>
    %314 = vector.broadcast %313 : vector<1x4xf32> to vector<16x4xf32>
    %315 = arith.addf %311, %314 : vector<16x4xf32>
    %c6_206 = arith.constant 6 : index
    %c0_207 = arith.constant 0 : index
    %c0_208 = arith.constant 0 : index
    %316 = vector.load %arg5[%c6_206, %c0_207, %c0_208] : memref<8x32x4xbf16, #tpu.memory_space<vmem>>, vector<1x32x4xbf16>
    %317 = vector.shape_cast %316 : vector<1x32x4xbf16> to vector<32x4xbf16>
    %cst_209 = arith.constant dense<0.000000e+00> : vector<16x4xf32>
    %318 = tpu.matmul %2, %317, %cst_209 {dimension_numbers = #tpu.dot_dimension_numbers<[1], [0], [0], [1], [0, 0, 1, 1], [], []>} : vector<16x32xbf16>, vector<32x4xbf16>, vector<16x4xf32> -> vector<16x4xf32>
    %c6_210 = arith.constant 6 : index
    %c0_211 = arith.constant 0 : index
    %c0_212 = arith.constant 0 : index
    %319 = vector.load %arg8[%c6_210, %c0_211, %c0_212] : memref<8x1x4xf32, #tpu.memory_space<vmem>>, vector<1x1x4xf32>
    %320 = vector.shape_cast %319 : vector<1x1x4xf32> to vector<1x4xf32>
    %321 = vector.broadcast %320 : vector<1x4xf32> to vector<16x4xf32>
    %322 = arith.addf %318, %321 : vector<16x4xf32>
    %323 = arith.truncf %308 : vector<16x4xf32> to vector<16x4xbf16>
    %324 = arith.truncf %315 : vector<16x4xf32> to vector<16x4xbf16>
    %cst_213 = arith.constant dense<0.000000e+00> : vector<16x16xf32>
    %325 = tpu.matmul %323, %324, %cst_213 {dimension_numbers = #tpu.dot_dimension_numbers<[1], [1], [0], [0], [0, 0, 1, 0], [], []>} : vector<16x4xbf16>, vector<16x4xbf16>, vector<16x16xf32> -> vector<16x16xf32>
    %cst_214 = arith.constant -1.000000e+30 : f32
    %326 = vector.broadcast %cst_214 : f32 to vector<16x16xf32>
    %327 = arith.select %17, %325, %326 : vector<16x16xi1>, vector<16x16xf32>
    %cst_215 = arith.constant dense<0xFF800000> : vector<16xf32>
    %328 = vector.multi_reduction <maximumf>, %327, %cst_215 [1] : vector<16x16xf32> to vector<16xf32>
    %329 = vector.shape_cast %328 : vector<16xf32> to vector<16x1xf32>
    %330 = vector.broadcast %329 : vector<16x1xf32> to vector<16x16xf32>
    %331 = arith.subf %327, %330 : vector<16x16xf32>
    %332 = math.exp %331 : vector<16x16xf32>
    %cst_216 = arith.constant dense<0.000000e+00> : vector<16xf32>
    %333 = vector.multi_reduction <add>, %332, %cst_216 [1] : vector<16x16xf32> to vector<16xf32>
    %334 = vector.shape_cast %333 : vector<16xf32> to vector<16x1xf32>
    %335 = arith.truncf %332 : vector<16x16xf32> to vector<16x16xbf16>
    %336 = arith.truncf %322 : vector<16x4xf32> to vector<16x4xbf16>
    %cst_217 = arith.constant dense<0.000000e+00> : vector<16x4xf32>
    %337 = tpu.matmul %335, %336, %cst_217 {dimension_numbers = #tpu.dot_dimension_numbers<[1], [0], [0], [1], [0, 0, 1, 1], [], []>} : vector<16x16xbf16>, vector<16x4xbf16>, vector<16x4xf32> -> vector<16x4xf32>
    %338 = tpu.reciprocal %334 {approx = true} : vector<16x1xf32> -> vector<16x1xf32>
    %339 = vector.broadcast %338 : vector<16x1xf32> to vector<16x4xf32>
    %340 = arith.mulf %337, %339 : vector<16x4xf32>
    %341 = arith.truncf %340 : vector<16x4xf32> to vector<16x4xbf16>
    %c6_218 = arith.constant 6 : index
    %c0_219 = arith.constant 0 : index
    %c0_220 = arith.constant 0 : index
    %342 = vector.load %arg9[%c6_218, %c0_219, %c0_220] : memref<8x4x32xbf16, #tpu.memory_space<vmem>>, vector<1x4x32xbf16>
    %343 = vector.shape_cast %342 : vector<1x4x32xbf16> to vector<4x32xbf16>
    %cst_221 = arith.constant dense<0.000000e+00> : vector<16x32xf32>
    %344 = tpu.matmul %341, %343, %cst_221 {dimension_numbers = #tpu.dot_dimension_numbers<[1], [0], [0], [1], [0, 0, 1, 1], [], []>} : vector<16x4xbf16>, vector<4x32xbf16>, vector<16x32xf32> -> vector<16x32xf32>
    %345 = arith.addf %299, %344 : vector<16x32xf32>
    %c7 = arith.constant 7 : index
    %c0_222 = arith.constant 0 : index
    %c0_223 = arith.constant 0 : index
    %346 = vector.load %arg3[%c7, %c0_222, %c0_223] : memref<8x32x4xbf16, #tpu.memory_space<vmem>>, vector<1x32x4xbf16>
    %347 = vector.shape_cast %346 : vector<1x32x4xbf16> to vector<32x4xbf16>
    %cst_224 = arith.constant dense<0.000000e+00> : vector<16x4xf32>
    %348 = tpu.matmul %2, %347, %cst_224 {dimension_numbers = #tpu.dot_dimension_numbers<[1], [0], [0], [1], [0, 0, 1, 1], [], []>} : vector<16x32xbf16>, vector<32x4xbf16>, vector<16x4xf32> -> vector<16x4xf32>
    %c7_225 = arith.constant 7 : index
    %c0_226 = arith.constant 0 : index
    %c0_227 = arith.constant 0 : index
    %349 = vector.load %arg6[%c7_225, %c0_226, %c0_227] : memref<8x1x4xf32, #tpu.memory_space<vmem>>, vector<1x1x4xf32>
    %350 = vector.shape_cast %349 : vector<1x1x4xf32> to vector<1x4xf32>
    %351 = vector.broadcast %350 : vector<1x4xf32> to vector<16x4xf32>
    %352 = arith.addf %348, %351 : vector<16x4xf32>
    %cst_228 = arith.constant 5.000000e-01 : f32
    %353 = vector.broadcast %cst_228 : f32 to vector<16x4xf32>
    %354 = arith.mulf %352, %353 : vector<16x4xf32>
    %c7_229 = arith.constant 7 : index
    %c0_230 = arith.constant 0 : index
    %c0_231 = arith.constant 0 : index
    %355 = vector.load %arg4[%c7_229, %c0_230, %c0_231] : memref<8x32x4xbf16, #tpu.memory_space<vmem>>, vector<1x32x4xbf16>
    %356 = vector.shape_cast %355 : vector<1x32x4xbf16> to vector<32x4xbf16>
    %cst_232 = arith.constant dense<0.000000e+00> : vector<16x4xf32>
    %357 = tpu.matmul %2, %356, %cst_232 {dimension_numbers = #tpu.dot_dimension_numbers<[1], [0], [0], [1], [0, 0, 1, 1], [], []>} : vector<16x32xbf16>, vector<32x4xbf16>, vector<16x4xf32> -> vector<16x4xf32>
    %c7_233 = arith.constant 7 : index
    %c0_234 = arith.constant 0 : index
    %c0_235 = arith.constant 0 : index
    %358 = vector.load %arg7[%c7_233, %c0_234, %c0_235] : memref<8x1x4xf32, #tpu.memory_space<vmem>>, vector<1x1x4xf32>
    %359 = vector.shape_cast %358 : vector<1x1x4xf32> to vector<1x4xf32>
    %360 = vector.broadcast %359 : vector<1x4xf32> to vector<16x4xf32>
    %361 = arith.addf %357, %360 : vector<16x4xf32>
    %c7_236 = arith.constant 7 : index
    %c0_237 = arith.constant 0 : index
    %c0_238 = arith.constant 0 : index
    %362 = vector.load %arg5[%c7_236, %c0_237, %c0_238] : memref<8x32x4xbf16, #tpu.memory_space<vmem>>, vector<1x32x4xbf16>
    %363 = vector.shape_cast %362 : vector<1x32x4xbf16> to vector<32x4xbf16>
    %cst_239 = arith.constant dense<0.000000e+00> : vector<16x4xf32>
    %364 = tpu.matmul %2, %363, %cst_239 {dimension_numbers = #tpu.dot_dimension_numbers<[1], [0], [0], [1], [0, 0, 1, 1], [], []>} : vector<16x32xbf16>, vector<32x4xbf16>, vector<16x4xf32> -> vector<16x4xf32>
    %c7_240 = arith.constant 7 : index
    %c0_241 = arith.constant 0 : index
    %c0_242 = arith.constant 0 : index
    %365 = vector.load %arg8[%c7_240, %c0_241, %c0_242] : memref<8x1x4xf32, #tpu.memory_space<vmem>>, vector<1x1x4xf32>
    %366 = vector.shape_cast %365 : vector<1x1x4xf32> to vector<1x4xf32>
    %367 = vector.broadcast %366 : vector<1x4xf32> to vector<16x4xf32>
    %368 = arith.addf %364, %367 : vector<16x4xf32>
    %369 = arith.truncf %354 : vector<16x4xf32> to vector<16x4xbf16>
    %370 = arith.truncf %361 : vector<16x4xf32> to vector<16x4xbf16>
    %cst_243 = arith.constant dense<0.000000e+00> : vector<16x16xf32>
    %371 = tpu.matmul %369, %370, %cst_243 {dimension_numbers = #tpu.dot_dimension_numbers<[1], [1], [0], [0], [0, 0, 1, 0], [], []>} : vector<16x4xbf16>, vector<16x4xbf16>, vector<16x16xf32> -> vector<16x16xf32>
    %cst_244 = arith.constant -1.000000e+30 : f32
    %372 = vector.broadcast %cst_244 : f32 to vector<16x16xf32>
    %373 = arith.select %17, %371, %372 : vector<16x16xi1>, vector<16x16xf32>
    %cst_245 = arith.constant dense<0xFF800000> : vector<16xf32>
    %374 = vector.multi_reduction <maximumf>, %373, %cst_245 [1] : vector<16x16xf32> to vector<16xf32>
    %375 = vector.shape_cast %374 : vector<16xf32> to vector<16x1xf32>
    %376 = vector.broadcast %375 : vector<16x1xf32> to vector<16x16xf32>
    %377 = arith.subf %373, %376 : vector<16x16xf32>
    %378 = math.exp %377 : vector<16x16xf32>
    %cst_246 = arith.constant dense<0.000000e+00> : vector<16xf32>
    %379 = vector.multi_reduction <add>, %378, %cst_246 [1] : vector<16x16xf32> to vector<16xf32>
    %380 = vector.shape_cast %379 : vector<16xf32> to vector<16x1xf32>
    %381 = arith.truncf %378 : vector<16x16xf32> to vector<16x16xbf16>
    %382 = arith.truncf %368 : vector<16x4xf32> to vector<16x4xbf16>
    %cst_247 = arith.constant dense<0.000000e+00> : vector<16x4xf32>
    %383 = tpu.matmul %381, %382, %cst_247 {dimension_numbers = #tpu.dot_dimension_numbers<[1], [0], [0], [1], [0, 0, 1, 1], [], []>} : vector<16x16xbf16>, vector<16x4xbf16>, vector<16x4xf32> -> vector<16x4xf32>
    %384 = tpu.reciprocal %380 {approx = true} : vector<16x1xf32> -> vector<16x1xf32>
    %385 = vector.broadcast %384 : vector<16x1xf32> to vector<16x4xf32>
    %386 = arith.mulf %383, %385 : vector<16x4xf32>
    %387 = arith.truncf %386 : vector<16x4xf32> to vector<16x4xbf16>
    %c7_248 = arith.constant 7 : index
    %c0_249 = arith.constant 0 : index
    %c0_250 = arith.constant 0 : index
    %388 = vector.load %arg9[%c7_248, %c0_249, %c0_250] : memref<8x4x32xbf16, #tpu.memory_space<vmem>>, vector<1x4x32xbf16>
    %389 = vector.shape_cast %388 : vector<1x4x32xbf16> to vector<4x32xbf16>
    %cst_251 = arith.constant dense<0.000000e+00> : vector<16x32xf32>
    %390 = tpu.matmul %387, %389, %cst_251 {dimension_numbers = #tpu.dot_dimension_numbers<[1], [0], [0], [1], [0, 0, 1, 1], [], []>} : vector<16x4xbf16>, vector<4x32xbf16>, vector<16x32xf32> -> vector<16x32xf32>
    %391 = arith.addf %345, %390 : vector<16x32xf32>
    %392 = arith.truncf %391 : vector<16x32xf32> to vector<16x32xbf16>
    %cst_252 = arith.constant dense<0.000000e+00> : vector<4x32xf32>
    %393 = tpu.matmul %13, %392, %cst_252 {dimension_numbers = #tpu.dot_dimension_numbers<[1], [0], [0], [1], [0, 0, 1, 1], [], []>} : vector<4x16xbf16>, vector<16x32xbf16>, vector<4x32xf32> -> vector<4x32xf32>
    %cst_253 = arith.constant 1.000000e+00 : f32
    %394 = vector.broadcast %cst_253 : f32 to vector<4x1xf32>
    %395 = arith.maximumf %12, %394 : vector<4x1xf32>
    %396 = tpu.reciprocal %395 {approx = true} : vector<4x1xf32> -> vector<4x1xf32>
    %397 = vector.broadcast %396 : vector<4x1xf32> to vector<4x32xf32>
    %398 = arith.mulf %393, %397 : vector<4x32xf32>
    %399 = arith.truncf %398 : vector<4x32xf32> to vector<4x32xbf16>
    %c0_254 = arith.constant 0 : index
    %c0_255 = arith.constant 0 : index
    %400 = vector.load %arg11[%c0_254, %c0_255] : memref<32x32xbf16, #tpu.memory_space<vmem>>, vector<32x32xbf16>
    %cst_256 = arith.constant dense<0.000000e+00> : vector<4x32xf32>
    %401 = tpu.matmul %399, %400, %cst_256 {dimension_numbers = #tpu.dot_dimension_numbers<[1], [0], [0], [1], [0, 0, 1, 1], [], []>} : vector<4x32xbf16>, vector<32x32xbf16>, vector<4x32xf32> -> vector<4x32xf32>
    %c0_257 = arith.constant 0 : index
    %c0_258 = arith.constant 0 : index
    %402 = vector.load %arg12[%c0_257, %c0_258] : memref<1x32xf32, #tpu.memory_space<vmem>>, vector<1x32xf32>
    %403 = vector.broadcast %402 : vector<1x32xf32> to vector<4x32xf32>
    %404 = arith.addf %401, %403 : vector<4x32xf32>
    %cst_259 = arith.constant dense<0.000000e+00> : vector<4xf32>
    %405 = vector.multi_reduction <add>, %404, %cst_259 [1] : vector<4x32xf32> to vector<4xf32>
    %406 = vector.shape_cast %405 : vector<4xf32> to vector<4x1xf32>
    %cst_260 = arith.constant 3.200000e+01 : f32
    %407 = vector.broadcast %cst_260 : f32 to vector<4x1xf32>
    %408 = arith.divf %406, %407 : vector<4x1xf32>
    %409 = vector.broadcast %408 : vector<4x1xf32> to vector<4x32xf32>
    %410 = arith.subf %404, %409 : vector<4x32xf32>
    %411 = arith.mulf %410, %410 : vector<4x32xf32>
    %cst_261 = arith.constant dense<0.000000e+00> : vector<4xf32>
    %412 = vector.multi_reduction <add>, %411, %cst_261 [1] : vector<4x32xf32> to vector<4xf32>
    %413 = vector.shape_cast %412 : vector<4xf32> to vector<4x1xf32>
    %cst_262 = arith.constant 3.200000e+01 : f32
    %414 = vector.broadcast %cst_262 : f32 to vector<4x1xf32>
    %415 = arith.divf %413, %414 : vector<4x1xf32>
    %416 = vector.broadcast %408 : vector<4x1xf32> to vector<4x32xf32>
    %417 = arith.subf %404, %416 : vector<4x32xf32>
    %cst_263 = arith.constant 9.99999974E-6 : f32
    %418 = vector.broadcast %cst_263 : f32 to vector<4x1xf32>
    %419 = arith.addf %415, %418 : vector<4x1xf32>
    %420 = math.rsqrt %419 : vector<4x1xf32>
    %421 = vector.broadcast %420 : vector<4x1xf32> to vector<4x32xf32>
    %422 = arith.mulf %417, %421 : vector<4x32xf32>
    %c0_264 = arith.constant 0 : index
    %c0_265 = arith.constant 0 : index
    %423 = vector.load %arg13[%c0_264, %c0_265] : memref<1x32xf32, #tpu.memory_space<vmem>>, vector<1x32xf32>
    %424 = vector.broadcast %423 : vector<1x32xf32> to vector<4x32xf32>
    %425 = arith.mulf %422, %424 : vector<4x32xf32>
    %c0_266 = arith.constant 0 : index
    %c0_267 = arith.constant 0 : index
    %426 = vector.load %arg14[%c0_266, %c0_267] : memref<1x32xf32, #tpu.memory_space<vmem>>, vector<1x32xf32>
    %427 = vector.broadcast %426 : vector<1x32xf32> to vector<4x32xf32>
    %428 = arith.addf %425, %427 : vector<4x32xf32>
    %cst_268 = arith.constant 5.000000e-01 : f32
    %429 = vector.broadcast %cst_268 : f32 to vector<4x32xf32>
    %430 = arith.mulf %429, %428 : vector<4x32xf32>
    %cst_269 = arith.constant 0.707106769 : f32
    %431 = vector.broadcast %cst_269 : f32 to vector<4x32xf32>
    %432 = arith.mulf %428, %431 : vector<4x32xf32>
    %433 = math.erf %432 : vector<4x32xf32>
    %cst_270 = arith.constant 1.000000e+00 : f32
    %434 = vector.broadcast %cst_270 : f32 to vector<4x32xf32>
    %435 = arith.addf %434, %433 : vector<4x32xf32>
    %436 = arith.mulf %430, %435 : vector<4x32xf32>
    %437 = arith.truncf %436 : vector<4x32xf32> to vector<4x32xbf16>
    %c0_271 = arith.constant 0 : index
    %c0_272 = arith.constant 0 : index
    %438 = vector.load %arg15[%c0_271, %c0_272] : memref<32x32xbf16, #tpu.memory_space<vmem>>, vector<32x32xbf16>
    %cst_273 = arith.constant dense<0.000000e+00> : vector<4x32xf32>
    %439 = tpu.matmul %437, %438, %cst_273 {dimension_numbers = #tpu.dot_dimension_numbers<[1], [0], [0], [1], [0, 0, 1, 1], [], []>} : vector<4x32xbf16>, vector<32x32xbf16>, vector<4x32xf32> -> vector<4x32xf32>
    %c0_274 = arith.constant 0 : index
    %c0_275 = arith.constant 0 : index
    %440 = vector.load %arg16[%c0_274, %c0_275] : memref<1x32xf32, #tpu.memory_space<vmem>>, vector<1x32xf32>
    %441 = vector.broadcast %440 : vector<1x32xf32> to vector<4x32xf32>
    %442 = arith.addf %439, %441 : vector<4x32xf32>
    %443 = arith.truncf %442 : vector<4x32xf32> to vector<4x32xbf16>
    %cst_276 = arith.constant dense<0.000000e+00> : vector<16x32xf32>
    %444 = tpu.matmul %14, %443, %cst_276 {dimension_numbers = #tpu.dot_dimension_numbers<[1], [0], [0], [1], [0, 0, 1, 1], [], []>} : vector<16x4xbf16>, vector<4x32xbf16>, vector<16x32xf32> -> vector<16x32xf32>
    %c0_277 = arith.constant 0 : index
    %c0_278 = arith.constant 0 : index
    %445 = memref.load %arg17[%c0_277, %c0_278] : memref<1x1xf32, #tpu.memory_space<smem>>
    %cst_279 = arith.constant 3.000000e+00 : f32
    %446 = vector.broadcast %cst_279 : f32 to vector<16x1xf32>
    %447 = arith.cmpf oge, %19, %446 : vector<16x1xf32>
    %cst_280 = arith.constant 1.000000e+00 : f32
    %448 = arith.subf %cst_280, %445 : f32
    %449 = vector.broadcast %448 : f32 to vector<16x32xf32>
    %450 = arith.mulf %449, %1 : vector<16x32xf32>
    %451 = vector.broadcast %445 : f32 to vector<16x32xf32>
    %452 = arith.mulf %451, %444 : vector<16x32xf32>
    %453 = arith.addf %450, %452 : vector<16x32xf32>
    %454 = vector.shape_cast %447 : vector<16x1xi1> to vector<16x1xi1>
    %455 = vector.broadcast %454 : vector<16x1xi1> to vector<16x32xi1>
    %456 = arith.select %455, %453, %1 : vector<16x32xi1>, vector<16x32xf32>
    %c0_281 = arith.constant 0 : index
    %c0_282 = arith.constant 0 : index
    %c0_283 = arith.constant 0 : index
    %457 = vector.load %arg18[%c0_281, %c0_282, %c0_283] : memref<1x16x32xf32, #tpu.memory_space<vmem>>, vector<1x16x32xf32>
    %458 = vector.shape_cast %457 : vector<1x16x32xf32> to vector<16x32xf32>
    %459 = vector.shape_cast %456 : vector<16x32xf32> to vector<1x16x32xf32>
    tpu.vector_store %arg18[%c0_281, %c0_282, %c0_283], %459 {strides = array<i32>} : memref<1x16x32xf32, #tpu.memory_space<vmem>>, vector<1x16x32xf32>,
    return
  }
  func.func @transform_0(%arg0: i32) -> (i32, i32, i32) {
    %c0_i32 = arith.constant 0 : i32
    %c0_i32_0 = arith.constant 0 : i32
    %c0_i32_1 = arith.constant 0 : i32
    return %arg0, %c0_i32, %c0_i32_0 : i32, i32, i32
  }
  func.func @transform_1(%arg0: i32) -> (i32, i32, i32) {
    %c0_i32 = arith.constant 0 : i32
    %c0_i32_0 = arith.constant 0 : i32
    %c0_i32_1 = arith.constant 0 : i32
    return %arg0, %c0_i32, %c0_i32_0 : i32, i32, i32
  }
  func.func @transform_2(%arg0: i32) -> (i32, i32, i32) {
    %c0_i32 = arith.constant 0 : i32
    %c0_i32_0 = arith.constant 0 : i32
    %c0_i32_1 = arith.constant 0 : i32
    %c0_i32_2 = arith.constant 0 : i32
    return %c0_i32, %c0_i32_0, %c0_i32_1 : i32, i32, i32
  }
  func.func @transform_3(%arg0: i32) -> (i32, i32, i32) {
    %c0_i32 = arith.constant 0 : i32
    %c0_i32_0 = arith.constant 0 : i32
    %c0_i32_1 = arith.constant 0 : i32
    %c0_i32_2 = arith.constant 0 : i32
    return %c0_i32, %c0_i32_0, %c0_i32_1 : i32, i32, i32
  }
  func.func @transform_4(%arg0: i32) -> (i32, i32, i32) {
    %c0_i32 = arith.constant 0 : i32
    %c0_i32_0 = arith.constant 0 : i32
    %c0_i32_1 = arith.constant 0 : i32
    %c0_i32_2 = arith.constant 0 : i32
    return %c0_i32, %c0_i32_0, %c0_i32_1 : i32, i32, i32
  }
  func.func @transform_5(%arg0: i32) -> (i32, i32, i32) {
    %c0_i32 = arith.constant 0 : i32
    %c0_i32_0 = arith.constant 0 : i32
    %c0_i32_1 = arith.constant 0 : i32
    %c0_i32_2 = arith.constant 0 : i32
    return %c0_i32, %c0_i32_0, %c0_i32_1 : i32, i32, i32
  }
  func.func @transform_6(%arg0: i32) -> (i32, i32, i32) {
    %c0_i32 = arith.constant 0 : i32
    %c0_i32_0 = arith.constant 0 : i32
    %c0_i32_1 = arith.constant 0 : i32
    %c0_i32_2 = arith.constant 0 : i32
    return %c0_i32, %c0_i32_0, %c0_i32_1 : i32, i32, i32
  }
  func.func @transform_7(%arg0: i32) -> (i32, i32, i32) {
    %c0_i32 = arith.constant 0 : i32
    %c0_i32_0 = arith.constant 0 : i32
    %c0_i32_1 = arith.constant 0 : i32
    %c0_i32_2 = arith.constant 0 : i32
    return %c0_i32, %c0_i32_0, %c0_i32_1 : i32, i32, i32
  }
  func.func @transform_8(%arg0: i32) -> (i32, i32, i32) {
    %c0_i32 = arith.constant 0 : i32
    %c0_i32_0 = arith.constant 0 : i32
    %c0_i32_1 = arith.constant 0 : i32
    %c0_i32_2 = arith.constant 0 : i32
    return %c0_i32, %c0_i32_0, %c0_i32_1 : i32, i32, i32
  }
  func.func @transform_9(%arg0: i32) -> (i32, i32) {
    %c0_i32 = arith.constant 0 : i32
    %c0_i32_0 = arith.constant 0 : i32
    %c0_i32_1 = arith.constant 0 : i32
    return %c0_i32, %c0_i32_0 : i32, i32
  }
  func.func @transform_10(%arg0: i32) -> (i32, i32) {
    %c0_i32 = arith.constant 0 : i32
    %c0_i32_0 = arith.constant 0 : i32
    %c0_i32_1 = arith.constant 0 : i32
    return %c0_i32, %c0_i32_0 : i32, i32
  }
  func.func @transform_11(%arg0: i32) -> (i32, i32) {
    %c0_i32 = arith.constant 0 : i32
    %c0_i32_0 = arith.constant 0 : i32
    %c0_i32_1 = arith.constant 0 : i32
    return %c0_i32, %c0_i32_0 : i32, i32
  }
  func.func @transform_12(%arg0: i32) -> (i32, i32) {
    %c0_i32 = arith.constant 0 : i32
    %c0_i32_0 = arith.constant 0 : i32
    %c0_i32_1 = arith.constant 0 : i32
    return %c0_i32, %c0_i32_0 : i32, i32
  }
  func.func @transform_13(%arg0: i32) -> (i32, i32) {
    %c0_i32 = arith.constant 0 : i32
    %c0_i32_0 = arith.constant 0 : i32
    %c0_i32_1 = arith.constant 0 : i32
    return %c0_i32, %c0_i32_0 : i32, i32
  }
  func.func @transform_14(%arg0: i32) -> (i32, i32) {
    %c0_i32 = arith.constant 0 : i32
    %c0_i32_0 = arith.constant 0 : i32
    %c0_i32_1 = arith.constant 0 : i32
    return %c0_i32, %c0_i32_0 : i32, i32
  }
  func.func @transform_15(%arg0: i32) -> (i32, i32) {
    %c0_i32 = arith.constant 0 : i32
    %c0_i32_0 = arith.constant 0 : i32
    %c0_i32_1 = arith.constant 0 : i32
    return %c0_i32, %c0_i32_0 : i32, i32
  }
  func.func @transform_16(%arg0: i32) -> (i32, i32) {
    %c0_i32 = arith.constant 0 : i32
    %c0_i32_0 = arith.constant 0 : i32
    %c0_i32_1 = arith.constant 0 : i32
    return %c0_i32, %c0_i32_0 : i32, i32
  }
  func.func @transform_17(%arg0: i32) -> (i32, i32, i32) {
    %c0_i32 = arith.constant 0 : i32
    %c0_i32_0 = arith.constant 0 : i32
    %c0_i32_1 = arith.constant 0 : i32
    return %arg0, %c0_i32, %c0_i32_0 : i32, i32, i32
  }
}

</mosaic_0001>

<llo_original>
// kernel: tpu_custom_call.1
$region0: #{tpu_custom_call.1}
  #allocation0 [shape = 'u32[]', space=smem, size = 0x4, offset = 0x4, fixed_abs, tag = 'smem constant byte address 0x4 - core index']
  #allocation1 [shape = 'u32[144,128]{1,0:T(1,128)}', space=vmem, size = 0x12000, scoped, tag = 'internal scratch']
  #allocation2 [shape = 'f32[1,1]{1,0:T(1,128)S(6)}', space=smem, size = 0x200, scoped, tag = 'scoped memory for tpu_custom_call.1']
  %s0 = inlined_call_operand.vmem [shape: f32[2,16,32], index: 0, kind: input, shape index: {}]
  %s1 = inlined_call_operand.vmem [shape: s32[2,1,16], index: 1, kind: input, shape index: {}]
  %s2 = inlined_call_operand.vmem [shape: bf16[8,32,4], index: 2, kind: input, shape index: {}]
  %s3 = inlined_call_operand.vmem [shape: bf16[8,32,4], index: 3, kind: input, shape index: {}]
  %s4 = inlined_call_operand.vmem [shape: bf16[8,32,4], index: 4, kind: input, shape index: {}]
  %s5 = inlined_call_operand.vmem [shape: f32[8,1,4], index: 5, kind: input, shape index: {}]
  %s6 = inlined_call_operand.vmem [shape: f32[8,1,4], index: 6, kind: input, shape index: {}]
  %s7 = inlined_call_operand.vmem [shape: f32[8,1,4], index: 7, kind: input, shape index: {}]
  %s8 = inlined_call_operand.vmem [shape: bf16[8,4,32], index: 8, kind: input, shape index: {}]
  %s9 = inlined_call_operand.vmem [shape: f32[1,32], index: 9, kind: input, shape index: {}]
  %s10 = inlined_call_operand.vmem [shape: bf16[32,32], index: 10, kind: input, shape index: {}]
  %s11 = inlined_call_operand.vmem [shape: f32[1,32], index: 11, kind: input, shape index: {}]
  %s12 = inlined_call_operand.vmem [shape: f32[1,32], index: 12, kind: input, shape index: {}]
  %s13 = inlined_call_operand.vmem [shape: f32[1,32], index: 13, kind: input, shape index: {}]
  %s14 = inlined_call_operand.vmem [shape: bf16[32,32], index: 14, kind: input, shape index: {}]
  %s15 = inlined_call_operand.vmem [shape: f32[1,32], index: 15, kind: input, shape index: {}]
  %s16 = inlined_call_operand.<no memory space> [shape: f32[1,1], index: 16, kind: input, shape index: {}]
  %s17 = inlined_call_operand.hbm [shape: f32[2,16,32], index: 17, kind: output, shape index: {}]
  %s18 = sld [smem:[#allocation0]]
  $region101: #{tpu_custom_call.1} parent=0
    _
  %s20 = ssub.s32 1, %s18
  %s21 = scalar_select 0, %s20, %s18
  %22 = sst [smem:[#allocation2]] %s16
  $region1: #{tpu_custom_call.1} parent=0
    #allocation3 [shape = 'u8[16384]{0}', space=vmem, size = 0x4000, scoped, tag = 'output window, operand 0']
    #allocation4 [shape = 's32[2]{0}', space=sflag, size = 0x8, scoped, tag = 'scoped memory for tpu_custom_call.1']
    %23 = vsyncpa [#allocation4], 0
    %s24 = scalar_lea.sflag [#allocation4], 1
    %25 = vsyncpa %s24, 0
    loop: start=0, step=1, limit=4
    $region2: #{tpu_custom_call.1} parent=1 // loop_pre_header
      _
    $region3: #{tpu_custom_call.1} parent=1 // loop_header
      %s27 = sphi 0, %s31
      %p28 = scmp.ge.s32.totalorder %s27, 4
      %s37 = sphi 0, %s39
      %s40 = sphi 0, %s37
      %s41 = sphi 0, %s40
      %s57 = sphi 0, %s41
      %s63 = sphi 0, %s65
      %s66 = sphi 0, %s63
      %s67 = sphi 0, %s66
      %s83 = sphi 0, %s67
      %s87 = sphi 0, %s87
      %s89 = sphi 0, %s87
      %s90 = sphi 0, %s89
      %s104 = sphi 0, %s90
      %s108 = sphi 0, %s108
      %s110 = sphi 0, %s108
      %s111 = sphi 0, %s110
      %s125 = sphi 0, %s111
      %s129 = sphi 0, %s129
      %s131 = sphi 0, %s129
      %s132 = sphi 0, %s131
      %s146 = sphi 0, %s132
      %s150 = sphi 0, %s150
      %s152 = sphi 0, %s150
      %s153 = sphi 0, %s152
      %s167 = sphi 0, %s153
      %s171 = sphi 0, %s171
      %s173 = sphi 0, %s171
      %s174 = sphi 0, %s173
      %s188 = sphi 0, %s174
      %s192 = sphi 0, %s192
      %s194 = sphi 0, %s192
      %s195 = sphi 0, %s194
      %s209 = sphi 0, %s195
      %s213 = sphi 0, %s213
      %s215 = sphi 0, %s213
      %s216 = sphi 0, %s215
      %s230 = sphi 0, %s216
      %s234 = sphi 0, %s234
      %s236 = sphi 0, %s234
      %s237 = sphi 0, %s236
      %s251 = sphi 0, %s237
      %s255 = sphi 0, %s255
      %s257 = sphi 0, %s255
      %s258 = sphi 0, %s257
      %s272 = sphi 0, %s258
      %s276 = sphi 0, %s276
      %s278 = sphi 0, %s276
      %s279 = sphi 0, %s278
      %s293 = sphi 0, %s279
      %s297 = sphi 0, %s297
      %s299 = sphi 0, %s297
      %s300 = sphi 0, %s299
      %s314 = sphi 0, %s300
      %s318 = sphi 0, %s318
      %s320 = sphi 0, %s318
      %s321 = sphi 0, %s320
      %s335 = sphi 0, %s321
      %s339 = sphi 0, %s339
      %s341 = sphi 0, %s339
      %s342 = sphi 0, %s341
      %s356 = sphi 0, %s342
      %s360 = sphi 0, %s360
      %s362 = sphi 0, %s360
      %s363 = sphi 0, %s362
      %s377 = sphi 0, %s363
      %s381 = sphi 0, %s381
      %s383 = sphi 0, %s381
      %s384 = sphi 0, %s383
      %s398 = sphi 0, %s384
      %s404 = sphi 0, %s406
      %s407 = sphi 0, %s404
      %s408 = sphi 0, %s407
      %s424 = sphi 0, %s408
    $region4: #{tpu_custom_call.1} parent=1 // loop_header_branch
      %30 = sbr.rel (%p28) target = $region8
    $region5: #{tpu_custom_call.1} parent=1 // loop_body
      %s32 = ssub.s32 %s27, 1
      %s33 = ssub.s32 %s27, 2
      %s34 = sadd.s32 %s27, 1
      %s35 = ssub.s32 %s27, %s34
      %p36 = scmp.eq.s32.totalorder %s35, 0
      %s38 = sadd.s32 %s37, 1
      %s39 = scalar_select %p36, %s37, %s38
      %p42 = pneg %p36
      %p43 = scmp.eq.s32.totalorder %s27, 1
      %p44 = por %p42, %p43
      %p45 = scmp.ne.s32.totalorder %s37, %s40
      %p46 = scmp.eq.s32.totalorder %s27, 0
      %p47 = por %p45, %p46
      %p48 = scmp.ne.s32.totalorder %s37, %s40
      %p49 = scmp.eq.s32.totalorder %s32, 1
      %p50 = por %p48, %p49
      %p51 = scmp.ne.s32.totalorder %s40, %s41
      %p52 = scmp.eq.s32.totalorder %s32, 0
      %p53 = por %p51, %p52
      %p54 = scmp.ne.s32.totalorder %s40, %s41
      %p55 = scmp.eq.s32.totalorder %s33, 1
      %p56 = por %p54, %p55
      %p58 = scmp.ne.s32.totalorder %s41, %s57
      %p59 = scmp.eq.s32.totalorder %s33, 0
      %p60 = por %p58, %p59
      %s61 = ssub.s32 %s27, %s34
      %p62 = scmp.eq.s32.totalorder %s61, 0
      %s64 = sadd.s32 %s63, 1
      %s65 = scalar_select %p62, %s63, %s64
      %p68 = pneg %p62
      %p69 = scmp.eq.s32.totalorder %s27, 1
      %p70 = por %p68, %p69
      %p71 = scmp.ne.s32.totalorder %s63, %s66
      %p72 = scmp.eq.s32.totalorder %s27, 0
      %p73 = por %p71, %p72
      %p74 = scmp.ne.s32.totalorder %s63, %s66
      %p75 = scmp.eq.s32.totalorder %s32, 1
      %p76 = por %p74, %p75
      %p77 = scmp.ne.s32.totalorder %s66, %s67
      %p78 = scmp.eq.s32.totalorder %s32, 0
      %p79 = por %p77, %p78
      %p80 = scmp.ne.s32.totalorder %s66, %s67
      %p81 = scmp.eq.s32.totalorder %s33, 1
      %p82 = por %p80, %p81
      %p84 = scmp.ne.s32.totalorder %s67, %s83
      %p85 = scmp.eq.s32.totalorder %s33, 0
      %p86 = por %p84, %p85
      %s88 = sadd.s32 %s87, 1
      %p91 = scmp.eq.s32.totalorder %s27, 1
      %p92 = scmp.ne.s32.totalorder %s87, %s89
      %p93 = scmp.eq.s32.totalorder %s27, 0
      %p94 = por %p92, %p93
      %p95 = scmp.ne.s32.totalorder %s87, %s89
      %p96 = scmp.eq.s32.totalorder %s32, 1
      %p97 = por %p95, %p96
      %p98 = scmp.ne.s32.totalorder %s89, %s90
      %p99 = scmp.eq.s32.totalorder %s32, 0
      %p100 = por %p98, %p99
      %p101 = scmp.ne.s32.totalorder %s89, %s90
      %p102 = scmp.eq.s32.totalorder %s33, 1
      %p103 = por %p101, %p102
      %p105 = scmp.ne.s32.totalorder %s90, %s104
      %p106 = scmp.eq.s32.totalorder %s33, 0
      %p107 = por %p105, %p106
      %s109 = sadd.s32 %s108, 1
      %p112 = scmp.eq.s32.totalorder %s27, 1
      %p113 = scmp.ne.s32.totalorder %s108, %s110
      %p114 = scmp.eq.s32.totalorder %s27, 0
      %p115 = por %p113, %p114
      %p116 = scmp.ne.s32.totalorder %s108, %s110
      %p117 = scmp.eq.s32.totalorder %s32, 1
      %p118 = por %p116, %p117
      %p119 = scmp.ne.s32.totalorder %s110, %s111
      %p120 = scmp.eq.s32.totalorder %s32, 0
      %p121 = por %p119, %p120
      %p122 = scmp.ne.s32.totalorder %s110, %s111
      %p123 = scmp.eq.s32.totalorder %s33, 1
      %p124 = por %p122, %p123
      %p126 = scmp.ne.s32.totalorder %s111, %s125
      %p127 = scmp.eq.s32.totalorder %s33, 0
      %p128 = por %p126, %p127
      %s130 = sadd.s32 %s129, 1
      %p133 = scmp.eq.s32.totalorder %s27, 1
      %p134 = scmp.ne.s32.totalorder %s129, %s131
      %p135 = scmp.eq.s32.totalorder %s27, 0
      %p136 = por %p134, %p135
      %p137 = scmp.ne.s32.totalorder %s129, %s131
      %p138 = scmp.eq.s32.totalorder %s32, 1
      %p139 = por %p137, %p138
      %p140 = scmp.ne.s32.totalorder %s131, %s132
      %p141 = scmp.eq.s32.totalorder %s32, 0
      %p142 = por %p140, %p141
      %p143 = scmp.ne.s32.totalorder %s131, %s132
      %p144 = scmp.eq.s32.totalorder %s33, 1
      %p145 = por %p143, %p144
      %p147 = scmp.ne.s32.totalorder %s132, %s146
      %p148 = scmp.eq.s32.totalorder %s33, 0
      %p149 = por %p147, %p148
      %s151 = sadd.s32 %s150, 1
      %p154 = scmp.eq.s32.totalorder %s27, 1
      %p155 = scmp.ne.s32.totalorder %s150, %s152
      %p156 = scmp.eq.s32.totalorder %s27, 0
      %p157 = por %p155, %p156
      %p158 = scmp.ne.s32.totalorder %s150, %s152
      %p159 = scmp.eq.s32.totalorder %s32, 1
      %p160 = por %p158, %p159
      %p161 = scmp.ne.s32.totalorder %s152, %s153
      %p162 = scmp.eq.s32.totalorder %s32, 0
      %p163 = por %p161, %p162
      %p164 = scmp.ne.s32.totalorder %s152, %s153
      %p165 = scmp.eq.s32.totalorder %s33, 1
      %p166 = por %p164, %p165
      %p168 = scmp.ne.s32.totalorder %s153, %s167
      %p169 = scmp.eq.s32.totalorder %s33, 0
      %p170 = por %p168, %p169
      %s172 = sadd.s32 %s171, 1
      %p175 = scmp.eq.s32.totalorder %s27, 1
      %p176 = scmp.ne.s32.totalorder %s171, %s173
      %p177 = scmp.eq.s32.totalorder %s27, 0
      %p178 = por %p176, %p177
      %p179 = scmp.ne.s32.totalorder %s171, %s173
      %p180 = scmp.eq.s32.totalorder %s32, 1
      %p181 = por %p179, %p180
      %p182 = scmp.ne.s32.totalorder %s173, %s174
      %p183 = scmp.eq.s32.totalorder %s32, 0
      %p184 = por %p182, %p183
      %p185 = scmp.ne.s32.totalorder %s173, %s174
      %p186 = scmp.eq.s32.totalorder %s33, 1
      %p187 = por %p185, %p186
      %p189 = scmp.ne.s32.totalorder %s174, %s188
      %p190 = scmp.eq.s32.totalorder %s33, 0
      %p191 = por %p189, %p190
      %s193 = sadd.s32 %s192, 1
      %p196 = scmp.eq.s32.totalorder %s27, 1
      %p197 = scmp.ne.s32.totalorder %s192, %s194
      %p198 = scmp.eq.s32.totalorder %s27, 0
      %p199 = por %p197, %p198
      %p200 = scmp.ne.s32.totalorder %s192, %s194
      %p201 = scmp.eq.s32.totalorder %s32, 1
      %p202 = por %p200, %p201
      %p203 = scmp.ne.s32.totalorder %s194, %s195
      %p204 = scmp.eq.s32.totalorder %s32, 0
      %p205 = por %p203, %p204
      %p206 = scmp.ne.s32.totalorder %s194, %s195
      %p207 = scmp.eq.s32.totalorder %s33, 1
      %p208 = por %p206, %p207
      %p210 = scmp.ne.s32.totalorder %s195, %s209
      %p211 = scmp.eq.s32.totalorder %s33, 0
      %p212 = por %p210, %p211
      %s214 = sadd.s32 %s213, 1
      %p217 = scmp.eq.s32.totalorder %s27, 1
      %p218 = scmp.ne.s32.totalorder %s213, %s215
      %p219 = scmp.eq.s32.totalorder %s27, 0
      %p220 = por %p218, %p219
      %p221 = scmp.ne.s32.totalorder %s213, %s215
      %p222 = scmp.eq.s32.totalorder %s32, 1
      %p223 = por %p221, %p222
      %p224 = scmp.ne.s32.totalorder %s215, %s216
      %p225 = scmp.eq.s32.totalorder %s32, 0
      %p226 = por %p224, %p225
      %p227 = scmp.ne.s32.totalorder %s215, %s216
      %p228 = scmp.eq.s32.totalorder %s33, 1
      %p229 = por %p227, %p228
      %p231 = scmp.ne.s32.totalorder %s216, %s230
      %p232 = scmp.eq.s32.totalorder %s33, 0
      %p233 = por %p231, %p232
      %s235 = sadd.s32 %s234, 1
      %p238 = scmp.eq.s32.totalorder %s27, 1
      %p239 = scmp.ne.s32.totalorder %s234, %s236
      %p240 = scmp.eq.s32.totalorder %s27, 0
      %p241 = por %p239, %p240
      %p242 = scmp.ne.s32.totalorder %s234, %s236
      %p243 = scmp.eq.s32.totalorder %s32, 1
      %p244 = por %p242, %p243
      %p245 = scmp.ne.s32.totalorder %s236, %s237
      %p246 = scmp.eq.s32.totalorder %s32, 0
      %p247 = por %p245, %p246
      %p248 = scmp.ne.s32.totalorder %s236, %s237
      %p249 = scmp.eq.s32.totalorder %s33, 1
      %p250 = por %p248, %p249
      %p252 = scmp.ne.s32.totalorder %s237, %s251
      %p253 = scmp.eq.s32.totalorder %s33, 0
      %p254 = por %p252, %p253
      %s256 = sadd.s32 %s255, 1
      %p259 = scmp.eq.s32.totalorder %s27, 1
      %p260 = scmp.ne.s32.totalorder %s255, %s257
      %p261 = scmp.eq.s32.totalorder %s27, 0
      %p262 = por %p260, %p261
      %p263 = scmp.ne.s32.totalorder %s255, %s257
      %p264 = scmp.eq.s32.totalorder %s32, 1
      %p265 = por %p263, %p264
      %p266 = scmp.ne.s32.totalorder %s257, %s258
      %p267 = scmp.eq.s32.totalorder %s32, 0
      %p268 = por %p266, %p267
      %p269 = scmp.ne.s32.totalorder %s257, %s258
      %p270 = scmp.eq.s32.totalorder %s33, 1
      %p271 = por %p269, %p270
      %p273 = scmp.ne.s32.totalorder %s258, %s272
      %p274 = scmp.eq.s32.totalorder %s33, 0
      %p275 = por %p273, %p274
      %s277 = sadd.s32 %s276, 1
      %p280 = scmp.eq.s32.totalorder %s27, 1
      %p281 = scmp.ne.s32.totalorder %s276, %s278
      %p282 = scmp.eq.s32.totalorder %s27, 0
      %p283 = por %p281, %p282
      %p284 = scmp.ne.s32.totalorder %s276, %s278
      %p285 = scmp.eq.s32.totalorder %s32, 1
      %p286 = por %p284, %p285
      %p287 = scmp.ne.s32.totalorder %s278, %s279
      %p288 = scmp.eq.s32.totalorder %s32, 0
      %p289 = por %p287, %p288
      %p290 = scmp.ne.s32.totalorder %s278, %s279
      %p291 = scmp.eq.s32.totalorder %s33, 1
      %p292 = por %p290, %p291
      %p294 = scmp.ne.s32.totalorder %s279, %s293
      %p295 = scmp.eq.s32.totalorder %s33, 0
      %p296 = por %p294, %p295
      %s298 = sadd.s32 %s297, 1
      %p301 = scmp.eq.s32.totalorder %s27, 1
      %p302 = scmp.ne.s32.totalorder %s297, %s299
      %p303 = scmp.eq.s32.totalorder %s27, 0
      %p304 = por %p302, %p303
      %p305 = scmp.ne.s32.totalorder %s297, %s299
      %p306 = scmp.eq.s32.totalorder %s32, 1
      %p307 = por %p305, %p306
      %p308 = scmp.ne.s32.totalorder %s299, %s300
      %p309 = scmp.eq.s32.totalorder %s32, 0
      %p310 = por %p308, %p309
      %p311 = scmp.ne.s32.totalorder %s299, %s300
      %p312 = scmp.eq.s32.totalorder %s33, 1
      %p313 = por %p311, %p312
      %p315 = scmp.ne.s32.totalorder %s300, %s314
      %p316 = scmp.eq.s32.totalorder %s33, 0
      %p317 = por %p315, %p316
      %s319 = sadd.s32 %s318, 1
      %p322 = scmp.eq.s32.totalorder %s27, 1
      %p323 = scmp.ne.s32.totalorder %s318, %s320
      %p324 = scmp.eq.s32.totalorder %s27, 0
      %p325 = por %p323, %p324
      %p326 = scmp.ne.s32.totalorder %s318, %s320
      %p327 = scmp.eq.s32.totalorder %s32, 1
      %p328 = por %p326, %p327
      %p329 = scmp.ne.s32.totalorder %s320, %s321
      %p330 = scmp.eq.s32.totalorder %s32, 0
      %p331 = por %p329, %p330
      %p332 = scmp.ne.s32.totalorder %s320, %s321
      %p333 = scmp.eq.s32.totalorder %s33, 1
      %p334 = por %p332, %p333
      %p336 = scmp.ne.s32.totalorder %s321, %s335
      %p337 = scmp.eq.s32.totalorder %s33, 0
      %p338 = por %p336, %p337
      %s340 = sadd.s32 %s339, 1
      %p343 = scmp.eq.s32.totalorder %s27, 1
      %p344 = scmp.ne.s32.totalorder %s339, %s341
      %p345 = scmp.eq.s32.totalorder %s27, 0
      %p346 = por %p344, %p345
      %p347 = scmp.ne.s32.totalorder %s339, %s341
      %p348 = scmp.eq.s32.totalorder %s32, 1
      %p349 = por %p347, %p348
      %p350 = scmp.ne.s32.totalorder %s341, %s342
      %p351 = scmp.eq.s32.totalorder %s32, 0
      %p352 = por %p350, %p351
      %p353 = scmp.ne.s32.totalorder %s341, %s342
      %p354 = scmp.eq.s32.totalorder %s33, 1
      %p355 = por %p353, %p354
      %p357 = scmp.ne.s32.totalorder %s342, %s356
      %p358 = scmp.eq.s32.totalorder %s33, 0
      %p359 = por %p357, %p358
      %s361 = sadd.s32 %s360, 1
      %p364 = scmp.eq.s32.totalorder %s27, 1
      %p365 = scmp.ne.s32.totalorder %s360, %s362
      %p366 = scmp.eq.s32.totalorder %s27, 0
      %p367 = por %p365, %p366
      %p368 = scmp.ne.s32.totalorder %s360, %s362
      %p369 = scmp.eq.s32.totalorder %s32, 1
      %p370 = por %p368, %p369
      %p371 = scmp.ne.s32.totalorder %s362, %s363
      %p372 = scmp.eq.s32.totalorder %s32, 0
      %p373 = por %p371, %p372
      %p374 = scmp.ne.s32.totalorder %s362, %s363
      %p375 = scmp.eq.s32.totalorder %s33, 1
      %p376 = por %p374, %p375
      %p378 = scmp.ne.s32.totalorder %s363, %s377
      %p379 = scmp.eq.s32.totalorder %s33, 0
      %p380 = por %p378, %p379
      %s382 = sadd.s32 %s381, 1
      %p385 = scmp.eq.s32.totalorder %s27, 1
      %p386 = scmp.ne.s32.totalorder %s381, %s383
      %p387 = scmp.eq.s32.totalorder %s27, 0
      %p388 = por %p386, %p387
      %p389 = scmp.ne.s32.totalorder %s381, %s383
      %p390 = scmp.eq.s32.totalorder %s32, 1
      %p391 = por %p389, %p390
      %p392 = scmp.ne.s32.totalorder %s383, %s384
      %p393 = scmp.eq.s32.totalorder %s32, 0
      %p394 = por %p392, %p393
      %p395 = scmp.ne.s32.totalorder %s383, %s384
      %p396 = scmp.eq.s32.totalorder %s33, 1
      %p397 = por %p395, %p396
      %p399 = scmp.ne.s32.totalorder %s384, %s398
      %p400 = scmp.eq.s32.totalorder %s33, 0
      %p401 = por %p399, %p400
      %s402 = ssub.s32 %s27, %s34
      %p403 = scmp.eq.s32.totalorder %s402, 0
      %s405 = sadd.s32 %s404, 1
      %s406 = scalar_select %p403, %s404, %s405
      %p409 = pneg %p403
      %p410 = scmp.eq.s32.totalorder %s27, 1
      %p411 = por %p409, %p410
      %p412 = scmp.ne.s32.totalorder %s404, %s407
      %p413 = scmp.eq.s32.totalorder %s27, 0
      %p414 = por %p412, %p413
      %p415 = scmp.ne.s32.totalorder %s404, %s407
      %p416 = scmp.eq.s32.totalorder %s32, 1
      %p417 = por %p415, %p416
      %p418 = scmp.ne.s32.totalorder %s407, %s408
      %p419 = scmp.eq.s32.totalorder %s32, 0
      %p420 = por %p418, %p419
      %p421 = scmp.ne.s32.totalorder %s407, %s408
      %p422 = scmp.eq.s32.totalorder %s33, 1
      %p423 = por %p421, %p422
      %p425 = scmp.ne.s32.totalorder %s408, %s424
      %p426 = scmp.eq.s32.totalorder %s33, 0
      %p427 = por %p425, %p426
      %p428 = scmp.le.s32.totalorder 1, %s27
      %p429 = scmp.lt.s32.totalorder %s27, 3
      %p430 = pnand %p428, %p429
      %p431 = pneg %p430
      // Predicated region
      $region9: #{tpu_custom_call.1} parent=5 // pred_check
        _
      $region10: #{tpu_custom_call.1} parent=5 // pred_check_branch
        %433 = sbr.rel (%p430) target = $region12
      $region11: #{tpu_custom_call.1} parent=5 // pred_region
        %s434 = ssub.s32 %s27, 1
        // Predicated region
        $region13: #{tpu_custom_call.1} parent=11 // pred_check
          %p435 = pneg %p100
        $region14: #{tpu_custom_call.1} parent=11 // pred_check_branch
          %437 = sbr.rel (%p435) target = $region16
        $region15: #{tpu_custom_call.1} parent=11 // pred_region
          _
        $region16: #{tpu_custom_call.1} parent=11 // pred_fallthru
          _
        // Predicated region
        $region17: #{tpu_custom_call.1} parent=11 // pred_check
          %p438 = pneg %p121
        $region18: #{tpu_custom_call.1} parent=11 // pred_check_branch
          %440 = sbr.rel (%p438) target = $region20
        $region19: #{tpu_custom_call.1} parent=11 // pred_region
          _
        $region20: #{tpu_custom_call.1} parent=11 // pred_fallthru
          _
        // Predicated region
        $region21: #{tpu_custom_call.1} parent=11 // pred_check
          %p441 = pneg %p142
        $region22: #{tpu_custom_call.1} parent=11 // pred_check_branch
          %443 = sbr.rel (%p441) target = $region24
        $region23: #{tpu_custom_call.1} parent=11 // pred_region
          _
        $region24: #{tpu_custom_call.1} parent=11 // pred_fallthru
          _
        // Predicated region
        $region25: #{tpu_custom_call.1} parent=11 // pred_check
          %p444 = pneg %p163
        $region26: #{tpu_custom_call.1} parent=11 // pred_check_branch
          %446 = sbr.rel (%p444) target = $region28
        $region27: #{tpu_custom_call.1} parent=11 // pred_region
          _
        $region28: #{tpu_custom_call.1} parent=11 // pred_fallthru
          _
        // Predicated region
        $region29: #{tpu_custom_call.1} parent=11 // pred_check
          %p447 = pneg %p184
        $region30: #{tpu_custom_call.1} parent=11 // pred_check_branch
          %449 = sbr.rel (%p447) target = $region32
        $region31: #{tpu_custom_call.1} parent=11 // pred_region
          _
        $region32: #{tpu_custom_call.1} parent=11 // pred_fallthru
          _
        // Predicated region
        $region33: #{tpu_custom_call.1} parent=11 // pred_check
          %p450 = pneg %p205
        $region34: #{tpu_custom_call.1} parent=11 // pred_check_branch
          %452 = sbr.rel (%p450) target = $region36
        $region35: #{tpu_custom_call.1} parent=11 // pred_region
          _
        $region36: #{tpu_custom_call.1} parent=11 // pred_fallthru
          _
        // Predicated region
        $region37: #{tpu_custom_call.1} parent=11 // pred_check
          %p453 = pneg %p226
        $region38: #{tpu_custom_call.1} parent=11 // pred_check_branch
          %455 = sbr.rel (%p453) target = $region40
        $region39: #{tpu_custom_call.1} parent=11 // pred_region
          _
        $region40: #{tpu_custom_call.1} parent=11 // pred_fallthru
          _
        // Predicated region
        $region41: #{tpu_custom_call.1} parent=11 // pred_check
          %p456 = pneg %p247
        $region42: #{tpu_custom_call.1} parent=11 // pred_check_branch
          %458 = sbr.rel (%p456) target = $region44
        $region43: #{tpu_custom_call.1} parent=11 // pred_region
          _
        $region44: #{tpu_custom_call.1} parent=11 // pred_fallthru
          _
        // Predicated region
        $region45: #{tpu_custom_call.1} parent=11 // pred_check
          %p459 = pneg %p268
        $region46: #{tpu_custom_call.1} parent=11 // pred_check_branch
          %461 = sbr.rel (%p459) target = $region48
        $region47: #{tpu_custom_call.1} parent=11 // pred_region
          _
        $region48: #{tpu_custom_call.1} parent=11 // pred_fallthru
          _
        // Predicated region
        $region49: #{tpu_custom_call.1} parent=11 // pred_check
          %p462 = pneg %p289
        $region50: #{tpu_custom_call.1} parent=11 // pred_check_branch
          %464 = sbr.rel (%p462) target = $region52
        $region51: #{tpu_custom_call.1} parent=11 // pred_region
          _
        $region52: #{tpu_custom_call.1} parent=11 // pred_fallthru
          _
        // Predicated region
        $region53: #{tpu_custom_call.1} parent=11 // pred_check
          %p465 = pneg %p310
        $region54: #{tpu_custom_call.1} parent=11 // pred_check_branch
          %467 = sbr.rel (%p465) target = $region56
        $region55: #{tpu_custom_call.1} parent=11 // pred_region
          _
        $region56: #{tpu_custom_call.1} parent=11 // pred_fallthru
          _
        // Predicated region
        $region57: #{tpu_custom_call.1} parent=11 // pred_check
          %p468 = pneg %p331
        $region58: #{tpu_custom_call.1} parent=11 // pred_check_branch
          %470 = sbr.rel (%p468) target = $region60
        $region59: #{tpu_custom_call.1} parent=11 // pred_region
          _
        $region60: #{tpu_custom_call.1} parent=11 // pred_fallthru
          _
        // Predicated region
        $region61: #{tpu_custom_call.1} parent=11 // pred_check
          %p471 = pneg %p352
        $region62: #{tpu_custom_call.1} parent=11 // pred_check_branch
          %473 = sbr.rel (%p471) target = $region64
        $region63: #{tpu_custom_call.1} parent=11 // pred_region
          _
        $region64: #{tpu_custom_call.1} parent=11 // pred_fallthru
          _
        // Predicated region
        $region65: #{tpu_custom_call.1} parent=11 // pred_check
          %p474 = pneg %p373
        $region66: #{tpu_custom_call.1} parent=11 // pred_check_branch
          %476 = sbr.rel (%p474) target = $region68
        $region67: #{tpu_custom_call.1} parent=11 // pred_region
          _
        $region68: #{tpu_custom_call.1} parent=11 // pred_fallthru
          _
        // Predicated region
        $region69: #{tpu_custom_call.1} parent=11 // pred_check
          %p477 = pneg %p394
        $region70: #{tpu_custom_call.1} parent=11 // pred_check_branch
          %479 = sbr.rel (%p477) target = $region72
        $region71: #{tpu_custom_call.1} parent=11 // pred_region
          _
        $region72: #{tpu_custom_call.1} parent=11 // pred_fallthru
          _
      $region12: #{tpu_custom_call.1} parent=5 // pred_fallthru
        _
      %p480 = scmp.lt.s32.totalorder %s27, 2
      // Predicated region
      $region73: #{tpu_custom_call.1} parent=5 // pred_check
        %p481 = pneg %p480
      $region74: #{tpu_custom_call.1} parent=5 // pred_check_branch
        %483 = sbr.rel (%p481) target = $region76
      $region75: #{tpu_custom_call.1} parent=5 // pred_region
        // Predicated region
        $region77: #{tpu_custom_call.1} parent=75 // pred_check
          %p484 = pneg %p47
        $region78: #{tpu_custom_call.1} parent=75 // pred_check_branch
          %486 = sbr.rel (%p484) target = $region80
        $region79: #{tpu_custom_call.1} parent=75 // pred_region
          %p487 = scmp.lt.s32.totalorder %s27, 1
          %s488 = scalar_select %p487, %s27, 1
          %s489 = smul.addr %s488, 2
          %s490 = smul.addr %s489, 8
          %s491 = scalar_lea.vmem %s0, %s490
        $region80: #{tpu_custom_call.1} parent=75 // pred_fallthru
          _
        // Predicated region
        $region81: #{tpu_custom_call.1} parent=75 // pred_check
          %p492 = pneg %p73
        $region82: #{tpu_custom_call.1} parent=75 // pred_check_branch
          %494 = sbr.rel (%p492) target = $region84
        $region83: #{tpu_custom_call.1} parent=75 // pred_region
          %p495 = scmp.lt.s32.totalorder %s27, 1
          %s496 = scalar_select %p495, %s27, 1
          %s497 = scalar_lea.vmem %s1, %s496
        $region84: #{tpu_custom_call.1} parent=75 // pred_fallthru
          _
      $region76: #{tpu_custom_call.1} parent=5 // pred_fallthru
        _
      %p498 = scmp.le.s32.totalorder 1, %s27
      %p499 = scmp.lt.s32.totalorder %s27, 3
      %p500 = pnand %p498, %p499
      %p501 = pneg %p500
      // Predicated region
      $region85: #{tpu_custom_call.1} parent=5 // pred_check
        _
      $region86: #{tpu_custom_call.1} parent=5 // pred_check_branch
        %503 = sbr.rel (%p500) target = $region88
      $region87: #{tpu_custom_call.1} parent=5 // pred_region
        %s504 = ssub.s32 %s27, 1
        %p505 = scmp.lt.s32.totalorder %s32, 1
        %s506 = scalar_select %p505, %s32, 1
        %s507 = smul.addr %s506, 2
        %s508 = smul.addr %s507, 8
        %s509 = scalar_lea.vmem %s0, %s508
        %p510 = pneg %p53
        %p511 = pneg %p50
        %p512 = scmp.lt.s32.totalorder %s32, 1
        %s513 = scalar_select %p512, %s32, 1
        %s514 = scalar_lea.vmem %s1, %s513
        %p515 = pneg %p79
        %p516 = pneg %p76
        %p517 = pneg %p100
        %p518 = pneg %p97
        %p519 = pneg %p121
        %p520 = pneg %p118
        %p521 = pneg %p142
        %p522 = pneg %p139
        %p523 = pneg %p163
        %p524 = pneg %p160
        %p525 = pneg %p184
        %p526 = pneg %p181
        %p527 = pneg %p205
        %p528 = pneg %p202
        %p529 = pneg %p226
        %p530 = pneg %p223
        %p531 = pneg %p247
        %p532 = pneg %p244
        %p533 = pneg %p268
        %p534 = pneg %p265
        %p535 = pneg %p289
        %p536 = pneg %p286
        %p537 = pneg %p310
        %p538 = pneg %p307
        %p539 = pneg %p331
        %p540 = pneg %p328
        %p541 = pneg %p352
        %p542 = pneg %p349
        %p543 = pneg %p373
        %p544 = pneg %p370
        %p545 = pneg %p394
        %p546 = pneg %p391
        %p547 = pneg %p420
        %p548 = pneg %p417
        %s549 = sand.u32 %s407, 1
        %s550 = scalar_lea.sflag [#allocation4], %s549
        %s551 = sand.u32 %s407, 1
        %s552 = smul.addr %s551, 16
        %s553 = scalar_lea.vmem [#allocation3], %s552
        %p554 = scmp.lt.s32.totalorder %s32, 1
        %s555 = scalar_select %p554, %s32, 1
        %s556 = smul.addr %s555, 2
        %s557 = smul.addr %s556, 8
        %s558 = scalar_lea.vmem %s0, %s557
        %p559 = scmp.lt.s32.totalorder %s32, 1
        %s560 = scalar_select %p559, %s32, 1
        %s561 = scalar_lea.vmem %s1, %s560
        %v563 = vld [vmem:[%s558] sm:$0xff]
        %v564 = vld [vmem:[%s558 + $0x8] sm:$0xff]
        %v565 = vpack.c.bf16 %v564, %v563
        %v566 = vld [vmem:[%s561] sm:$0x1]
        %v567 = vlaneseq
        %v568 = vshrl.u32 %v567, 7
        %v569 = vlaneseq
        %v570 = vshrl.u32 %v569, 7
        %v571 = vsub.s32 0, %v570
        %v572 = vrot.slane %v566, %v571
        %vm573 = vcmp.eq.s32.totalorder %v568, %v572
        %v574 = vsel %vm573, 1, 0
        %v575 = vcvt.s32.f32 %v574
        %576 = vxpose.xlu0.b32.start [1/16] %v575, 128
        %577 = vxpose.xlu0.b32.cont [2/16] 0.0, 128
        %578 = vxpose.xlu0.b32.cont [3/16] 0.0, 128
        %579 = vxpose.xlu0.b32.cont [4/16] 0.0, 128
        %580 = vxpose.xlu0.b32.cont [5/16] 0.0, 128
        %581 = vxpose.xlu0.b32.cont [6/16] 0.0, 128
        %582 = vxpose.xlu0.b32.cont [7/16] 0.0, 128
        %583 = vxpose.xlu0.b32.cont [8/16] 0.0, 128
        %584 = vxpose.xlu0.b32.cont [9/16] 0.0, 128
        %585 = vxpose.xlu0.b32.cont [10/16] 0.0, 128
        %586 = vxpose.xlu0.b32.cont [11/16] 0.0, 128
        %587 = vxpose.xlu0.b32.cont [12/16] 0.0, 128
        %588 = vxpose.xlu0.b32.cont [13/16] 0.0, 128
        %589 = vxpose.xlu0.b32.cont [14/16] 0.0, 128
        %590 = vxpose.xlu0.b32.cont [15/16] 0.0, 128
        %591 = vxpose.xlu0.b32.end [16/16] 0.0, 128
        %v592 = vpop.trf.xlu0
        %v593 = vpop.trf.xlu0
        %v594 = vpop.trf.xlu0
        %v595 = vpop.trf.xlu0
        %v596 = vpop.trf.xlu0
        %v597 = vpop.trf.xlu0
        %v598 = vpop.trf.xlu0
        %v599 = vpop.trf.xlu0
        %v600 = vpop.trf.xlu0
        %v601 = vpop.trf.xlu0
        %v602 = vpop.trf.xlu0
        %v603 = vpop.trf.xlu0
        %v604 = vpop.trf.xlu0
        %v605 = vpop.trf.xlu0
        %v606 = vpop.trf.xlu0
        %v607 = vpop.trf.xlu0
        %vm608 = vcmask 125952
        %v609 = vsel %vm608, %v575, 0.0
        %610 = vadd.xlane.f32.xlu0 %v609
        %v611 = vpop.xlane.xlu0 %610
        %v612 = vpack.c.bf16 %v575, %v575
        %v613 = vpack.c.bf16 %v593, %v592
        %vm614 = vcmask 31744
        %v616 = vsel %vm614, %v613, 0
        %vm618 = vcmask 1041408
        %v620 = vsel %vm618, %v612, 0
        %622 = vmatprep.subr.bf16.mxu0 0
        %623 = vmatpush1.bf16.msra.mxu0 %v620
        %624 = vmatprep.subr.bf16.mxu0 0
        %625 = vmatpush1.bf16.msra.mxu0 0
        %626 = vmatprep.subr.bf16.mxu0 0
        %627 = vmatpush1.bf16.msra.mxu0 0
        %628 = vmatprep.subr.bf16.mxu0 0
        %629 = vmatpush1.bf16.msra.mxu0 0
        %630 = vmatprep.subr.bf16.mxu0 0
        %631 = vmatpush1.bf16.msra.mxu0 0
        %632 = vmatprep.subr.bf16.mxu0 0
        %633 = vmatpush1.bf16.msra.mxu0 0
        %634 = vmatprep.subr.bf16.mxu0 0
        %635 = vmatpush1.bf16.msra.mxu0 0
        %636 = vmatprep.subr.bf16.mxu0 0
        %637 = vmatpush1.bf16.msra.mxu0 0
        %638 = vmatprep.subr.bf16.mxu0 0
        %639 = vmatpush1.bf16.msra.mxu0 0
        %640 = vmatprep.subr.bf16.mxu0 0
        %641 = vmatpush1.bf16.msra.mxu0 0
        %642 = vmatprep.subr.bf16.mxu0 0
        %643 = vmatpush1.bf16.msra.mxu0 0
        %644 = vmatprep.subr.bf16.mxu0 0
        %645 = vmatpush1.bf16.msra.mxu0 0
        %646 = vmatprep.subr.bf16.mxu0 0
        %647 = vmatpush1.bf16.msra.mxu0 0
        %648 = vmatprep.subr.bf16.mxu0 0
        %649 = vmatpush1.bf16.msra.mxu0 0
        %650 = vmatprep.subr.bf16.mxu0 0
        %651 = vmatpush1.bf16.msra.mxu0 0
        %652 = vmatprep.subr.bf16.mxu0 0
        %653 = vmatpush1.bf16.msra.mxu0 0
        %654 = vmatprep.mubr.bf16.mxu0 0
        %655 = vmatmul.mubr.bf16.gmra.mrb[0].mxu0 %v616
        %v656 = vpop.f32.mrb[0].mxu0
        %v657 = vadd.f32 0.0, %v656
        %v658 = vpop.f32.mrb[0].mxu0
        %v659 = vpop.f32.mrb[0].mxu0
        %v660 = vadd.f32 0.0, %v659
        %v661 = vpop.f32.mrb[0].mxu0
        %662 = vdwg.mxu0
        %vm663 = vcmp.gt.f32.partialorder %v657, 0.5
        %vm664 = vcmp.gt.f32.partialorder %v660, 0.5
        %vm665 = vcmask 130048
        %v666 = vsel %vm665, %v657, 0.0
        %667 = vadd.xlane.f32.xlu0 %v666
        %v668 = vpop.xlane.xlu0 %667
        %v669 = vsel %vm665, %v660, 0.0
        %670 = vadd.xlane.f32.xlu0 %v669
        %v671 = vpop.xlane.xlu0 %670
        %v672 = vld [vmem:[%s9] sm:$0x1]
        %v674 = vlaneseq
        %v675 = vshrl.u32 %v674, 7
        %v676 = vsub.s32 0, %v675
        %v677 = vrot.slane %v672, %v676
        %v679 = vadd.f32 %v677, 0.0
        %v680 = vld [vmem:[%s2] sm:$0xf]
        %v681 = vld [vmem:[%s2 + $0x4] sm:$0xf]
        %v682 = vld [vmem:[%s2 + $0x8] sm:$0xf]
        %v683 = vld [vmem:[%s2 + $0xc] sm:$0xf]
        %v684 = vld [vmem:[%s5] sm:$0x1]
        %v686 = vlaneseq
        %v687 = vshrl.u32 %v686, 7
        %v688 = vsub.s32 0, %v687
        %v689 = vrot.slane %v684, %v688
        %v695 = vunpack.c.l.b16 %v680
        %v696 = vunpack.c.l.b16 %v681
        %v697 = vunpack.c.l.b16 %v682
        %v698 = vunpack.c.l.b16 %v683
        %v699 = vpack.c.b16 %v696, %v695
        %v700 = vpack.c.b16 %v698, %v697
        %vm703 = vcmask 261120
        %v705 = vsel %vm703, %v565, 0
        %707 = vmatprep.subr.bf16.mxu0 0
        %708 = vmatpush1.bf16.msra.mxu0 %v699
        %709 = vmatprep.subr.bf16.mxu0 0
        %710 = vmatpush1.bf16.msra.mxu0 %v700
        %711 = vmatprep.subr.bf16.mxu0 0
        %712 = vmatpush1.bf16.msra.mxu0 0
        %713 = vmatprep.subr.bf16.mxu0 0
        %714 = vmatpush1.bf16.msra.mxu0 0
        %715 = vmatprep.subr.bf16.mxu0 0
        %716 = vmatpush1.bf16.msra.mxu0 0
        %717 = vmatprep.subr.bf16.mxu0 0
        %718 = vmatpush1.bf16.msra.mxu0 0
        %719 = vmatprep.subr.bf16.mxu0 0
        %720 = vmatpush1.bf16.msra.mxu0 0
        %721 = vmatprep.subr.bf16.mxu0 0
        %722 = vmatpush1.bf16.msra.mxu0 0
        %723 = vmatprep.subr.bf16.mxu0 0
        %724 = vmatpush1.bf16.msra.mxu0 0
        %725 = vmatprep.subr.bf16.mxu0 0
        %726 = vmatpush1.bf16.msra.mxu0 0
        %727 = vmatprep.subr.bf16.mxu0 0
        %728 = vmatpush1.bf16.msra.mxu0 0
        %729 = vmatprep.subr.bf16.mxu0 0
        %730 = vmatpush1.bf16.msra.mxu0 0
        %731 = vmatprep.subr.bf16.mxu0 0
        %732 = vmatpush1.bf16.msra.mxu0 0
        %733 = vmatprep.subr.bf16.mxu0 0
        %734 = vmatpush1.bf16.msra.mxu0 0
        %735 = vmatprep.subr.bf16.mxu0 0
        %736 = vmatpush1.bf16.msra.mxu0 0
        %737 = vmatprep.subr.bf16.mxu0 0
        %738 = vmatpush1.bf16.msra.mxu0 0
        %739 = vmatprep.mubr.bf16.mxu0 0
        %740 = vmatmul.mubr.bf16.gmra.mrb[0].mxu0 %v705
        %v741 = vpop.f32.mrb[0].mxu0
        %v742 = vadd.f32 %v689, %v741
        %v743 = vpop.f32.mrb[0].mxu0
        %v744 = vpop.f32.mrb[0].mxu0
        %v745 = vadd.f32 %v689, %v744
        %v746 = vpop.f32.mrb[0].mxu0
        %747 = vdwg.mxu0
        %v748 = vmul.f32 %v742, 0.5
        %v749 = vmul.f32 %v745, 0.5
        %v750 = vld [vmem:[%s3] sm:$0xf]
        %v751 = vld [vmem:[%s3 + $0x4] sm:$0xf]
        %v752 = vld [vmem:[%s3 + $0x8] sm:$0xf]
        %v753 = vld [vmem:[%s3 + $0xc] sm:$0xf]
        %v754 = vld [vmem:[%s6] sm:$0x1]
        %v756 = vlaneseq
        %v757 = vshrl.u32 %v756, 7
        %v758 = vsub.s32 0, %v757
        %v759 = vrot.slane %v754, %v758
        %v765 = vunpack.c.l.b16 %v750
        %v766 = vunpack.c.l.b16 %v751
        %v767 = vunpack.c.l.b16 %v752
        %v768 = vunpack.c.l.b16 %v753
        %v769 = vpack.c.b16 %v766, %v765
        %v770 = vpack.c.b16 %v768, %v767
        %773 = vmatprep.subr.bf16.mxu0 0
        %774 = vmatpush1.bf16.msra.mxu0 %v769
        %775 = vmatprep.subr.bf16.mxu0 0
        %776 = vmatpush1.bf16.msra.mxu0 %v770
        %777 = vmatprep.subr.bf16.mxu0 0
        %778 = vmatpush1.bf16.msra.mxu0 0
        %779 = vmatprep.subr.bf16.mxu0 0
        %780 = vmatpush1.bf16.msra.mxu0 0
        %781 = vmatprep.subr.bf16.mxu0 0
        %782 = vmatpush1.bf16.msra.mxu0 0
        %783 = vmatprep.subr.bf16.mxu0 0
        %784 = vmatpush1.bf16.msra.mxu0 0
        %785 = vmatprep.subr.bf16.mxu0 0
        %786 = vmatpush1.bf16.msra.mxu0 0
        %787 = vmatprep.subr.bf16.mxu0 0
        %788 = vmatpush1.bf16.msra.mxu0 0
        %789 = vmatprep.subr.bf16.mxu0 0
        %790 = vmatpush1.bf16.msra.mxu0 0
        %791 = vmatprep.subr.bf16.mxu0 0
        %792 = vmatpush1.bf16.msra.mxu0 0
        %793 = vmatprep.subr.bf16.mxu0 0
        %794 = vmatpush1.bf16.msra.mxu0 0
        %795 = vmatprep.subr.bf16.mxu0 0
        %796 = vmatpush1.bf16.msra.mxu0 0
        %797 = vmatprep.subr.bf16.mxu0 0
        %798 = vmatpush1.bf16.msra.mxu0 0
        %799 = vmatprep.subr.bf16.mxu0 0
        %800 = vmatpush1.bf16.msra.mxu0 0
        %801 = vmatprep.subr.bf16.mxu0 0
        %802 = vmatpush1.bf16.msra.mxu0 0
        %803 = vmatprep.subr.bf16.mxu0 0
        %804 = vmatpush1.bf16.msra.mxu0 0
        %805 = vmatprep.mubr.bf16.mxu0 0
        %806 = vmatmul.mubr.bf16.gmra.mrb[0].mxu0 %v705
        %v807 = vpop.f32.mrb[0].mxu0
        %v808 = vadd.f32 %v759, %v807
        %v809 = vpop.f32.mrb[0].mxu0
        %v810 = vpop.f32.mrb[0].mxu0
        %v811 = vadd.f32 %v759, %v810
        %v812 = vpop.f32.mrb[0].mxu0
        %813 = vdwg.mxu0
        %v814 = vld [vmem:[%s4] sm:$0xf]
        %v815 = vld [vmem:[%s4 + $0x4] sm:$0xf]
        %v816 = vld [vmem:[%s4 + $0x8] sm:$0xf]
        %v817 = vld [vmem:[%s4 + $0xc] sm:$0xf]
        %v818 = vld [vmem:[%s7] sm:$0x1]
        %v820 = vlaneseq
        %v821 = vshrl.u32 %v820, 7
        %v822 = vsub.s32 0, %v821
        %v823 = vrot.slane %v818, %v822
        %v829 = vunpack.c.l.b16 %v814
        %v830 = vunpack.c.l.b16 %v815
        %v831 = vunpack.c.l.b16 %v816
        %v832 = vunpack.c.l.b16 %v817
        %v833 = vpack.c.b16 %v830, %v829
        %v834 = vpack.c.b16 %v832, %v831
        %837 = vmatprep.subr.bf16.mxu0 0
        %838 = vmatpush1.bf16.msra.mxu0 %v833
        %839 = vmatprep.subr.bf16.mxu0 0
        %840 = vmatpush1.bf16.msra.mxu0 %v834
        %841 = vmatprep.subr.bf16.mxu0 0
        %842 = vmatpush1.bf16.msra.mxu0 0
        %843 = vmatprep.subr.bf16.mxu0 0
        %844 = vmatpush1.bf16.msra.mxu0 0
        %845 = vmatprep.subr.bf16.mxu0 0
        %846 = vmatpush1.bf16.msra.mxu0 0
        %847 = vmatprep.subr.bf16.mxu0 0
        %848 = vmatpush1.bf16.msra.mxu0 0
        %849 = vmatprep.subr.bf16.mxu0 0
        %850 = vmatpush1.bf16.msra.mxu0 0
        %851 = vmatprep.subr.bf16.mxu0 0
        %852 = vmatpush1.bf16.msra.mxu0 0
        %853 = vmatprep.subr.bf16.mxu0 0
        %854 = vmatpush1.bf16.msra.mxu0 0
        %855 = vmatprep.subr.bf16.mxu0 0
        %856 = vmatpush1.bf16.msra.mxu0 0
        %857 = vmatprep.subr.bf16.mxu0 0
        %858 = vmatpush1.bf16.msra.mxu0 0
        %859 = vmatprep.subr.bf16.mxu0 0
        %860 = vmatpush1.bf16.msra.mxu0 0
        %861 = vmatprep.subr.bf16.mxu0 0
        %862 = vmatpush1.bf16.msra.mxu0 0
        %863 = vmatprep.subr.bf16.mxu0 0
        %864 = vmatpush1.bf16.msra.mxu0 0
        %865 = vmatprep.subr.bf16.mxu0 0
        %866 = vmatpush1.bf16.msra.mxu0 0
        %867 = vmatprep.subr.bf16.mxu0 0
        %868 = vmatpush1.bf16.msra.mxu0 0
        %869 = vmatprep.mubr.bf16.mxu0 0
        %870 = vmatmul.mubr.bf16.gmra.mrb[0].mxu0 %v705
        %v871 = vpop.f32.mrb[0].mxu0
        %v872 = vadd.f32 %v823, %v871
        %v873 = vpop.f32.mrb[0].mxu0
        %v874 = vpop.f32.mrb[0].mxu0
        %v875 = vadd.f32 %v823, %v874
        %v876 = vpop.f32.mrb[0].mxu0
        %877 = vdwg.mxu0
        %v878 = vpack.c.bf16 %v749, %v748
        %v879 = vpack.c.bf16 %v811, %v808
        %v881 = vsel %vm614, %v878, 0
        %v884 = vsel %vm614, %v879, 0
        %886 = vmatprep.subr.bf16.mxu0 0
        %887 = vmatpush1.bf16.xpose.msra.mxu0 %v884
        %888 = vmatprep.subr.bf16.mxu0 0
        %889 = vmatpush1.bf16.xpose.msra.mxu0 0
        %890 = vmatprep.subr.bf16.mxu0 0
        %891 = vmatpush1.bf16.xpose.msra.mxu0 0
        %892 = vmatprep.subr.bf16.mxu0 0
        %893 = vmatpush1.bf16.xpose.msra.mxu0 0
        %894 = vmatprep.subr.bf16.mxu0 0
        %895 = vmatpush1.bf16.xpose.msra.mxu0 0
        %896 = vmatprep.subr.bf16.mxu0 0
        %897 = vmatpush1.bf16.xpose.msra.mxu0 0
        %898 = vmatprep.subr.bf16.mxu0 0
        %899 = vmatpush1.bf16.xpose.msra.mxu0 0
        %900 = vmatprep.subr.bf16.mxu0 0
        %901 = vmatpush1.bf16.xpose.msra.mxu0 0
        %902 = vmatprep.subr.bf16.mxu0 0
        %903 = vmatpush1.bf16.xpose.msra.mxu0 0
        %904 = vmatprep.subr.bf16.mxu0 0
        %905 = vmatpush1.bf16.xpose.msra.mxu0 0
        %906 = vmatprep.subr.bf16.mxu0 0
        %907 = vmatpush1.bf16.xpose.msra.mxu0 0
        %908 = vmatprep.subr.bf16.mxu0 0
        %909 = vmatpush1.bf16.xpose.msra.mxu0 0
        %910 = vmatprep.subr.bf16.mxu0 0
        %911 = vmatpush1.bf16.xpose.msra.mxu0 0
        %912 = vmatprep.subr.bf16.mxu0 0
        %913 = vmatpush1.bf16.xpose.msra.mxu0 0
        %914 = vmatprep.subr.bf16.mxu0 0
        %915 = vmatpush1.bf16.xpose.msra.mxu0 0
        %916 = vmatprep.subr.bf16.mxu0 0
        %917 = vmatpush1.bf16.xpose.msra.mxu0 0
        %918 = vmatprep.mubr.bf16.mxu0 0
        %919 = vmatmul.mubr.bf16.gmra.mrb[0].mxu0 %v881
        %v920 = vpop.f32.mrb[0].mxu0
        %v921 = vadd.f32 0.0, %v920
        %v922 = vpop.f32.mrb[0].mxu0
        %v923 = vpop.f32.mrb[0].mxu0
        %v924 = vadd.f32 0.0, %v923
        %v925 = vpop.f32.mrb[0].mxu0
        %926 = vdwg.mxu0
        %v927 = vsel %vm663, %v921, -1e+30
        %v928 = vsel %vm664, %v924, -1e+30
        %v929 = vsel %vm665, %v927, -inf
        %930 = vmax.xlane.f32.xlu0 %v929
        %v931 = vpop.xlane.xlu0 %930
        %v932 = vsel %vm665, %v928, -inf
        %933 = vmax.xlane.f32.xlu0 %v932
        %v934 = vpop.xlane.xlu0 %933
        %v935 = vsub.f32 %v927, %v931
        %v936 = vsub.f32 %v928, %v934
        %v937 = vmul.f32 %v935, 1.442695
        %v938 = vpow.pop %v937
        %v939 = vmul.f32 %v936, 1.442695
        %v940 = vpow.pop %v939
        %v941 = vsel %vm665, %v938, 0.0
        %942 = vadd.xlane.f32.xlu0 %v941
        %v943 = vpop.xlane.xlu0 %942
        %v944 = vsel %vm665, %v940, 0.0
        %945 = vadd.xlane.f32.xlu0 %v944
        %v946 = vpop.xlane.xlu0 %945
        %v947 = vpack.c.bf16 %v940, %v938
        %v948 = vpack.c.bf16 %v875, %v872
        %v950 = vsel %vm665, %v947, 0
        %952 = vmatprep.subr.bf16.mxu0 0
        %953 = vmatpush1.bf16.msra.mxu0 %v948
        %954 = vmatprep.subr.bf16.mxu0 0
        %955 = vmatpush1.bf16.msra.mxu0 0
        %956 = vmatprep.subr.bf16.mxu0 0
        %957 = vmatpush1.bf16.msra.mxu0 0
        %958 = vmatprep.subr.bf16.mxu0 0
        %959 = vmatpush1.bf16.msra.mxu0 0
        %960 = vmatprep.subr.bf16.mxu0 0
        %961 = vmatpush1.bf16.msra.mxu0 0
        %962 = vmatprep.subr.bf16.mxu0 0
        %963 = vmatpush1.bf16.msra.mxu0 0
        %964 = vmatprep.subr.bf16.mxu0 0
        %965 = vmatpush1.bf16.msra.mxu0 0
        %966 = vmatprep.subr.bf16.mxu0 0
        %967 = vmatpush1.bf16.msra.mxu0 0
        %968 = vmatprep.subr.bf16.mxu0 0
        %969 = vmatpush1.bf16.msra.mxu0 0
        %970 = vmatprep.subr.bf16.mxu0 0
        %971 = vmatpush1.bf16.msra.mxu0 0
        %972 = vmatprep.subr.bf16.mxu0 0
        %973 = vmatpush1.bf16.msra.mxu0 0
        %974 = vmatprep.subr.bf16.mxu0 0
        %975 = vmatpush1.bf16.msra.mxu0 0
        %976 = vmatprep.subr.bf16.mxu0 0
        %977 = vmatpush1.bf16.msra.mxu0 0
        %978 = vmatprep.subr.bf16.mxu0 0
        %979 = vmatpush1.bf16.msra.mxu0 0
        %980 = vmatprep.subr.bf16.mxu0 0
        %981 = vmatpush1.bf16.msra.mxu0 0
        %982 = vmatprep.subr.bf16.mxu0 0
        %983 = vmatpush1.bf16.msra.mxu0 0
        %984 = vmatprep.mubr.bf16.mxu0 0
        %985 = vmatmul.mubr.bf16.gmra.mrb[0].mxu0 %v950
        %v986 = vpop.f32.mrb[0].mxu0
        %v987 = vadd.f32 0.0, %v986
        %v988 = vpop.f32.mrb[0].mxu0
        %v989 = vpop.f32.mrb[0].mxu0
        %v990 = vadd.f32 0.0, %v989
        %v991 = vpop.f32.mrb[0].mxu0
        %992 = vdwg.mxu0
        %v993 = vrcp.pop %v943
        %v994 = vrcp.pop %v946
        %v995 = vmul.f32 %v987, %v993
        %v996 = vmul.f32 %v990, %v994
        %v997 = vpack.c.bf16 %v996, %v995
        %v998 = vld [vmem:[%s8] sm:$0x3]
        %v1000 = vsel %vm614, %v997, 0
        %v1003 = vsel %vm618, %v998, 0
        %1005 = vmatprep.subr.bf16.mxu0 0
        %1006 = vmatpush1.bf16.msra.mxu0 %v1003
        %1007 = vmatprep.subr.bf16.mxu0 0
        %1008 = vmatpush1.bf16.msra.mxu0 0
        %1009 = vmatprep.subr.bf16.mxu0 0
        %1010 = vmatpush1.bf16.msra.mxu0 0
        %1011 = vmatprep.subr.bf16.mxu0 0
        %1012 = vmatpush1.bf16.msra.mxu0 0
        %1013 = vmatprep.subr.bf16.mxu0 0
        %1014 = vmatpush1.bf16.msra.mxu0 0
        %1015 = vmatprep.subr.bf16.mxu0 0
        %1016 = vmatpush1.bf16.msra.mxu0 0
        %1017 = vmatprep.subr.bf16.mxu0 0
        %1018 = vmatpush1.bf16.msra.mxu0 0
        %1019 = vmatprep.subr.bf16.mxu0 0
        %1020 = vmatpush1.bf16.msra.mxu0 0
        %1021 = vmatprep.subr.bf16.mxu0 0
        %1022 = vmatpush1.bf16.msra.mxu0 0
        %1023 = vmatprep.subr.bf16.mxu0 0
        %1024 = vmatpush1.bf16.msra.mxu0 0
        %1025 = vmatprep.subr.bf16.mxu0 0
        %1026 = vmatpush1.bf16.msra.mxu0 0
        %1027 = vmatprep.subr.bf16.mxu0 0
        %1028 = vmatpush1.bf16.msra.mxu0 0
        %1029 = vmatprep.subr.bf16.mxu0 0
        %1030 = vmatpush1.bf16.msra.mxu0 0
        %1031 = vmatprep.subr.bf16.mxu0 0
        %1032 = vmatpush1.bf16.msra.mxu0 0
        %1033 = vmatprep.subr.bf16.mxu0 0
        %1034 = vmatpush1.bf16.msra.mxu0 0
        %1035 = vmatprep.subr.bf16.mxu0 0
        %1036 = vmatpush1.bf16.msra.mxu0 0
        %1037 = vmatprep.mubr.bf16.mxu0 0
        %1038 = vmatmul.mubr.bf16.gmra.mrb[0].mxu0 %v1000
        %v1039 = vpop.f32.mrb[0].mxu0
        %v1040 = vadd.f32 0.0, %v1039
        %v1041 = vpop.f32.mrb[0].mxu0
        %v1042 = vpop.f32.mrb[0].mxu0
        %v1043 = vadd.f32 0.0, %v1042
        %v1044 = vpop.f32.mrb[0].mxu0
        %1045 = vdwg.mxu0
        %v1046 = vadd.f32 %v679, %v1040
        %v1047 = vadd.f32 %v679, %v1043
        %s1048 = scalar_lea.vmem %s2, 16
        %v1049 = vld [vmem:[%s1048] sm:$0xf]
        %v1050 = vld [vmem:[%s1048 + $0x4] sm:$0xf]
        %v1051 = vld [vmem:[%s1048 + $0x8] sm:$0xf]
        %v1052 = vld [vmem:[%s1048 + $0xc] sm:$0xf]
        %s1053 = scalar_lea.vmem %s5, 1
        %v1054 = vld [vmem:[%s1053] sm:$0x1]
        %v1056 = vlaneseq
        %v1057 = vshrl.u32 %v1056, 7
        %v1058 = vsub.s32 0, %v1057
        %v1059 = vrot.slane %v1054, %v1058
        %v1065 = vunpack.c.l.b16 %v1049
        %v1066 = vunpack.c.l.b16 %v1050
        %v1067 = vunpack.c.l.b16 %v1051
        %v1068 = vunpack.c.l.b16 %v1052
        %v1069 = vpack.c.b16 %v1066, %v1065
        %v1070 = vpack.c.b16 %v1068, %v1067
        %1073 = vmatprep.subr.bf16.mxu0 0
        %1074 = vmatpush1.bf16.msra.mxu0 %v1069
        %1075 = vmatprep.subr.bf16.mxu0 0
        %1076 = vmatpush1.bf16.msra.mxu0 %v1070
        %1077 = vmatprep.subr.bf16.mxu0 0
        %1078 = vmatpush1.bf16.msra.mxu0 0
        %1079 = vmatprep.subr.bf16.mxu0 0
        %1080 = vmatpush1.bf16.msra.mxu0 0
        %1081 = vmatprep.subr.bf16.mxu0 0
        %1082 = vmatpush1.bf16.msra.mxu0 0
        %1083 = vmatprep.subr.bf16.mxu0 0
        %1084 = vmatpush1.bf16.msra.mxu0 0
        %1085 = vmatprep.subr.bf16.mxu0 0
        %1086 = vmatpush1.bf16.msra.mxu0 0
        %1087 = vmatprep.subr.bf16.mxu0 0
        %1088 = vmatpush1.bf16.msra.mxu0 0
        %1089 = vmatprep.subr.bf16.mxu0 0
        %1090 = vmatpush1.bf16.msra.mxu0 0
        %1091 = vmatprep.subr.bf16.mxu0 0
        %1092 = vmatpush1.bf16.msra.mxu0 0
        %1093 = vmatprep.subr.bf16.mxu0 0
        %1094 = vmatpush1.bf16.msra.mxu0 0
        %1095 = vmatprep.subr.bf16.mxu0 0
        %1096 = vmatpush1.bf16.msra.mxu0 0
        %1097 = vmatprep.subr.bf16.mxu0 0
        %1098 = vmatpush1.bf16.msra.mxu0 0
        %1099 = vmatprep.subr.bf16.mxu0 0
        %1100 = vmatpush1.bf16.msra.mxu0 0
        %1101 = vmatprep.subr.bf16.mxu0 0
        %1102 = vmatpush1.bf16.msra.mxu0 0
        %1103 = vmatprep.subr.bf16.mxu0 0
        %1104 = vmatpush1.bf16.msra.mxu0 0
        %1105 = vmatprep.mubr.bf16.mxu0 0
        %1106 = vmatmul.mubr.bf16.gmra.mrb[0].mxu0 %v705
        %v1107 = vpop.f32.mrb[0].mxu0
        %v1108 = vadd.f32 %v1059, %v1107
        %v1109 = vpop.f32.mrb[0].mxu0
        %v1110 = vpop.f32.mrb[0].mxu0
        %v1111 = vadd.f32 %v1059, %v1110
        %v1112 = vpop.f32.mrb[0].mxu0
        %1113 = vdwg.mxu0
        %v1114 = vmul.f32 %v1108, 0.5
        %v1115 = vmul.f32 %v1111, 0.5
        %s1116 = scalar_lea.vmem %s3, 16
        %v1117 = vld [vmem:[%s1116] sm:$0xf]
        %v1118 = vld [vmem:[%s1116 + $0x4] sm:$0xf]
        %v1119 = vld [vmem:[%s1116 + $0x8] sm:$0xf]
        %v1120 = vld [vmem:[%s1116 + $0xc] sm:$0xf]
        %s1121 = scalar_lea.vmem %s6, 1
        %v1122 = vld [vmem:[%s1121] sm:$0x1]
        %v1124 = vlaneseq
        %v1125 = vshrl.u32 %v1124, 7
        %v1126 = vsub.s32 0, %v1125
        %v1127 = vrot.slane %v1122, %v1126
        %v1133 = vunpack.c.l.b16 %v1117
        %v1134 = vunpack.c.l.b16 %v1118
        %v1135 = vunpack.c.l.b16 %v1119
        %v1136 = vunpack.c.l.b16 %v1120
        %v1137 = vpack.c.b16 %v1134, %v1133
        %v1138 = vpack.c.b16 %v1136, %v1135
        %1141 = vmatprep.subr.bf16.mxu0 0
        %1142 = vmatpush1.bf16.msra.mxu0 %v1137
        %1143 = vmatprep.subr.bf16.mxu0 0
        %1144 = vmatpush1.bf16.msra.mxu0 %v1138
        %1145 = vmatprep.subr.bf16.mxu0 0
        %1146 = vmatpush1.bf16.msra.mxu0 0
        %1147 = vmatprep.subr.bf16.mxu0 0
        %1148 = vmatpush1.bf16.msra.mxu0 0
        %1149 = vmatprep.subr.bf16.mxu0 0
        %1150 = vmatpush1.bf16.msra.mxu0 0
        %1151 = vmatprep.subr.bf16.mxu0 0
        %1152 = vmatpush1.bf16.msra.mxu0 0
        %1153 = vmatprep.subr.bf16.mxu0 0
        %1154 = vmatpush1.bf16.msra.mxu0 0
        %1155 = vmatprep.subr.bf16.mxu0 0
        %1156 = vmatpush1.bf16.msra.mxu0 0
        %1157 = vmatprep.subr.bf16.mxu0 0
        %1158 = vmatpush1.bf16.msra.mxu0 0
        %1159 = vmatprep.subr.bf16.mxu0 0
        %1160 = vmatpush1.bf16.msra.mxu0 0
        %1161 = vmatprep.subr.bf16.mxu0 0
        %1162 = vmatpush1.bf16.msra.mxu0 0
        %1163 = vmatprep.subr.bf16.mxu0 0
        %1164 = vmatpush1.bf16.msra.mxu0 0
        %1165 = vmatprep.subr.bf16.mxu0 0
        %1166 = vmatpush1.bf16.msra.mxu0 0
        %1167 = vmatprep.subr.bf16.mxu0 0
        %1168 = vmatpush1.bf16.msra.mxu0 0
        %1169 = vmatprep.subr.bf16.mxu0 0
        %1170 = vmatpush1.bf16.msra.mxu0 0
        %1171 = vmatprep.subr.bf16.mxu0 0
        %1172 = vmatpush1.bf16.msra.mxu0 0
        %1173 = vmatprep.mubr.bf16.mxu0 0
        %1174 = vmatmul.mubr.bf16.gmra.mrb[0].mxu0 %v705
        %v1175 = vpop.f32.mrb[0].mxu0
        %v1176 = vadd.f32 %v1127, %v1175
        %v1177 = vpop.f32.mrb[0].mxu0
        %v1178 = vpop.f32.mrb[0].mxu0
        %v1179 = vadd.f32 %v1127, %v1178
        %v1180 = vpop.f32.mrb[0].mxu0
        %1181 = vdwg.mxu0
        %s1182 = scalar_lea.vmem %s4, 16
        %v1183 = vld [vmem:[%s1182] sm:$0xf]
        %v1184 = vld [vmem:[%s1182 + $0x4] sm:$0xf]
        %v1185 = vld [vmem:[%s1182 + $0x8] sm:$0xf]
        %v1186 = vld [vmem:[%s1182 + $0xc] sm:$0xf]
        %s1187 = scalar_lea.vmem %s7, 1
        %v1188 = vld [vmem:[%s1187] sm:$0x1]
        %v1190 = vlaneseq
        %v1191 = vshrl.u32 %v1190, 7
        %v1192 = vsub.s32 0, %v1191
        %v1193 = vrot.slane %v1188, %v1192
        %v1199 = vunpack.c.l.b16 %v1183
        %v1200 = vunpack.c.l.b16 %v1184
        %v1201 = vunpack.c.l.b16 %v1185
        %v1202 = vunpack.c.l.b16 %v1186
        %v1203 = vpack.c.b16 %v1200, %v1199
        %v1204 = vpack.c.b16 %v1202, %v1201
        %1207 = vmatprep.subr.bf16.mxu0 0
        %1208 = vmatpush1.bf16.msra.mxu0 %v1203
        %1209 = vmatprep.subr.bf16.mxu0 0
        %1210 = vmatpush1.bf16.msra.mxu0 %v1204
        %1211 = vmatprep.subr.bf16.mxu0 0
        %1212 = vmatpush1.bf16.msra.mxu0 0
        %1213 = vmatprep.subr.bf16.mxu0 0
        %1214 = vmatpush1.bf16.msra.mxu0 0
        %1215 = vmatprep.subr.bf16.mxu0 0
        %1216 = vmatpush1.bf16.msra.mxu0 0
        %1217 = vmatprep.subr.bf16.mxu0 0
        %1218 = vmatpush1.bf16.msra.mxu0 0
        %1219 = vmatprep.subr.bf16.mxu0 0
        %1220 = vmatpush1.bf16.msra.mxu0 0
        %1221 = vmatprep.subr.bf16.mxu0 0
        %1222 = vmatpush1.bf16.msra.mxu0 0
        %1223 = vmatprep.subr.bf16.mxu0 0
        %1224 = vmatpush1.bf16.msra.mxu0 0
        %1225 = vmatprep.subr.bf16.mxu0 0
        %1226 = vmatpush1.bf16.msra.mxu0 0
        %1227 = vmatprep.subr.bf16.mxu0 0
        %1228 = vmatpush1.bf16.msra.mxu0 0
        %1229 = vmatprep.subr.bf16.mxu0 0
        %1230 = vmatpush1.bf16.msra.mxu0 0
        %1231 = vmatprep.subr.bf16.mxu0 0
        %1232 = vmatpush1.bf16.msra.mxu0 0
        %1233 = vmatprep.subr.bf16.mxu0 0
        %1234 = vmatpush1.bf16.msra.mxu0 0
        %1235 = vmatprep.subr.bf16.mxu0 0
        %1236 = vmatpush1.bf16.msra.mxu0 0
        %1237 = vmatprep.subr.bf16.mxu0 0
        %1238 = vmatpush1.bf16.msra.mxu0 0
        %1239 = vmatprep.mubr.bf16.mxu0 0
        %1240 = vmatmul.mubr.bf16.gmra.mrb[0].mxu0 %v705
        %v1241 = vpop.f32.mrb[0].mxu0
        %v1242 = vadd.f32 %v1193, %v1241
        %v1243 = vpop.f32.mrb[0].mxu0
        %v1244 = vpop.f32.mrb[0].mxu0
        %v1245 = vadd.f32 %v1193, %v1244
        %v1246 = vpop.f32.mrb[0].mxu0
        %1247 = vdwg.mxu0
        %v1248 = vpack.c.bf16 %v1115, %v1114
        %v1249 = vpack.c.bf16 %v1179, %v1176
        %v1251 = vsel %vm614, %v1248, 0
        %v1254 = vsel %vm614, %v1249, 0
        %1256 = vmatprep.subr.bf16.mxu0 0
        %1257 = vmatpush1.bf16.xpose.msra.mxu0 %v1254
        %1258 = vmatprep.subr.bf16.mxu0 0
        %1259 = vmatpush1.bf16.xpose.msra.mxu0 0
        %1260 = vmatprep.subr.bf16.mxu0 0
        %1261 = vmatpush1.bf16.xpose.msra.mxu0 0
        %1262 = vmatprep.subr.bf16.mxu0 0
        %1263 = vmatpush1.bf16.xpose.msra.mxu0 0
        %1264 = vmatprep.subr.bf16.mxu0 0
        %1265 = vmatpush1.bf16.xpose.msra.mxu0 0
        %1266 = vmatprep.subr.bf16.mxu0 0
        %1267 = vmatpush1.bf16.xpose.msra.mxu0 0
        %1268 = vmatprep.subr.bf16.mxu0 0
        %1269 = vmatpush1.bf16.xpose.msra.mxu0 0
        %1270 = vmatprep.subr.bf16.mxu0 0
        %1271 = vmatpush1.bf16.xpose.msra.mxu0 0
        %1272 = vmatprep.subr.bf16.mxu0 0
        %1273 = vmatpush1.bf16.xpose.msra.mxu0 0
        %1274 = vmatprep.subr.bf16.mxu0 0
        %1275 = vmatpush1.bf16.xpose.msra.mxu0 0
        %1276 = vmatprep.subr.bf16.mxu0 0
        %1277 = vmatpush1.bf16.xpose.msra.mxu0 0
        %1278 = vmatprep.subr.bf16.mxu0 0
        %1279 = vmatpush1.bf16.xpose.msra.mxu0 0
        %1280 = vmatprep.subr.bf16.mxu0 0
        %1281 = vmatpush1.bf16.xpose.msra.mxu0 0
        %1282 = vmatprep.subr.bf16.mxu0 0
        %1283 = vmatpush1.bf16.xpose.msra.mxu0 0
        %1284 = vmatprep.subr.bf16.mxu0 0
        %1285 = vmatpush1.bf16.xpose.msra.mxu0 0
        %1286 = vmatprep.subr.bf16.mxu0 0
        %1287 = vmatpush1.bf16.xpose.msra.mxu0 0
        %1288 = vmatprep.mubr.bf16.mxu0 0
        %1289 = vmatmul.mubr.bf16.gmra.mrb[0].mxu0 %v1251
        %v1290 = vpop.f32.mrb[0].mxu0
        %v1291 = vadd.f32 0.0, %v1290
        %v1292 = vpop.f32.mrb[0].mxu0
        %v1293 = vpop.f32.mrb[0].mxu0
        %v1294 = vadd.f32 0.0, %v1293
        %v1295 = vpop.f32.mrb[0].mxu0
        %1296 = vdwg.mxu0
        %v1297 = vsel %vm663, %v1291, -1e+30
        %v1298 = vsel %vm664, %v1294, -1e+30
        %v1299 = vsel %vm665, %v1297, -inf
        %1300 = vmax.xlane.f32.xlu0 %v1299
        %v1301 = vpop.xlane.xlu0 %1300
        %v1302 = vsel %vm665, %v1298, -inf
        %1303 = vmax.xlane.f32.xlu0 %v1302
        %v1304 = vpop.xlane.xlu0 %1303
        %v1305 = vsub.f32 %v1297, %v1301
        %v1306 = vsub.f32 %v1298, %v1304
        %v1307 = vmul.f32 %v1305, 1.442695
        %v1308 = vpow.pop %v1307
        %v1309 = vmul.f32 %v1306, 1.442695
        %v1310 = vpow.pop %v1309
        %v1311 = vsel %vm665, %v1308, 0.0
        %1312 = vadd.xlane.f32.xlu0 %v1311
        %v1313 = vpop.xlane.xlu0 %1312
        %v1314 = vsel %vm665, %v1310, 0.0
        %1315 = vadd.xlane.f32.xlu0 %v1314
        %v1316 = vpop.xlane.xlu0 %1315
        %v1317 = vpack.c.bf16 %v1310, %v1308
        %v1318 = vpack.c.bf16 %v1245, %v1242
        %v1320 = vsel %vm665, %v1317, 0
        %1322 = vmatprep.subr.bf16.mxu0 0
        %1323 = vmatpush1.bf16.msra.mxu0 %v1318
        %1324 = vmatprep.subr.bf16.mxu0 0
        %1325 = vmatpush1.bf16.msra.mxu0 0
        %1326 = vmatprep.subr.bf16.mxu0 0
        %1327 = vmatpush1.bf16.msra.mxu0 0
        %1328 = vmatprep.subr.bf16.mxu0 0
        %1329 = vmatpush1.bf16.msra.mxu0 0
        %1330 = vmatprep.subr.bf16.mxu0 0
        %1331 = vmatpush1.bf16.msra.mxu0 0
        %1332 = vmatprep.subr.bf16.mxu0 0
        %1333 = vmatpush1.bf16.msra.mxu0 0
        %1334 = vmatprep.subr.bf16.mxu0 0
        %1335 = vmatpush1.bf16.msra.mxu0 0
        %1336 = vmatprep.subr.bf16.mxu0 0
        %1337 = vmatpush1.bf16.msra.mxu0 0
        %1338 = vmatprep.subr.bf16.mxu0 0
        %1339 = vmatpush1.bf16.msra.mxu0 0
        %1340 = vmatprep.subr.bf16.mxu0 0
        %1341 = vmatpush1.bf16.msra.mxu0 0
        %1342 = vmatprep.subr.bf16.mxu0 0
        %1343 = vmatpush1.bf16.msra.mxu0 0
        %1344 = vmatprep.subr.bf16.mxu0 0
        %1345 = vmatpush1.bf16.msra.mxu0 0
        %1346 = vmatprep.subr.bf16.mxu0 0
        %1347 = vmatpush1.bf16.msra.mxu0 0
        %1348 = vmatprep.subr.bf16.mxu0 0
        %1349 = vmatpush1.bf16.msra.mxu0 0
        %1350 = vmatprep.subr.bf16.mxu0 0
        %1351 = vmatpush1.bf16.msra.mxu0 0
        %1352 = vmatprep.subr.bf16.mxu0 0
        %1353 = vmatpush1.bf16.msra.mxu0 0
        %1354 = vmatprep.mubr.bf16.mxu0 0
        %1355 = vmatmul.mubr.bf16.gmra.mrb[0].mxu0 %v1320
        %v1356 = vpop.f32.mrb[0].mxu0
        %v1357 = vadd.f32 0.0, %v1356
        %v1358 = vpop.f32.mrb[0].mxu0
        %v1359 = vpop.f32.mrb[0].mxu0
        %v1360 = vadd.f32 0.0, %v1359
        %v1361 = vpop.f32.mrb[0].mxu0
        %1362 = vdwg.mxu0
        %v1363 = vrcp.pop %v1313
        %v1364 = vrcp.pop %v1316
        %v1365 = vmul.f32 %v1357, %v1363
        %v1366 = vmul.f32 %v1360, %v1364
        %v1367 = vpack.c.bf16 %v1366, %v1365
        %s1368 = scalar_lea.vmem %s8, 2
        %v1369 = vld [vmem:[%s1368] sm:$0x3]
        %v1371 = vsel %vm614, %v1367, 0
        %v1374 = vsel %vm618, %v1369, 0
        %1376 = vmatprep.subr.bf16.mxu0 0
        %1377 = vmatpush1.bf16.msra.mxu0 %v1374
        %1378 = vmatprep.subr.bf16.mxu0 0
        %1379 = vmatpush1.bf16.msra.mxu0 0
        %1380 = vmatprep.subr.bf16.mxu0 0
        %1381 = vmatpush1.bf16.msra.mxu0 0
        %1382 = vmatprep.subr.bf16.mxu0 0
        %1383 = vmatpush1.bf16.msra.mxu0 0
        %1384 = vmatprep.subr.bf16.mxu0 0
        %1385 = vmatpush1.bf16.msra.mxu0 0
        %1386 = vmatprep.subr.bf16.mxu0 0
        %1387 = vmatpush1.bf16.msra.mxu0 0
        %1388 = vmatprep.subr.bf16.mxu0 0
        %1389 = vmatpush1.bf16.msra.mxu0 0
        %1390 = vmatprep.subr.bf16.mxu0 0
        %1391 = vmatpush1.bf16.msra.mxu0 0
        %1392 = vmatprep.subr.bf16.mxu0 0
        %1393 = vmatpush1.bf16.msra.mxu0 0
        %1394 = vmatprep.subr.bf16.mxu0 0
        %1395 = vmatpush1.bf16.msra.mxu0 0
        %1396 = vmatprep.subr.bf16.mxu0 0
        %1397 = vmatpush1.bf16.msra.mxu0 0
        %1398 = vmatprep.subr.bf16.mxu0 0
        %1399 = vmatpush1.bf16.msra.mxu0 0
        %1400 = vmatprep.subr.bf16.mxu0 0
        %1401 = vmatpush1.bf16.msra.mxu0 0
        %1402 = vmatprep.subr.bf16.mxu0 0
        %1403 = vmatpush1.bf16.msra.mxu0 0
        %1404 = vmatprep.subr.bf16.mxu0 0
        %1405 = vmatpush1.bf16.msra.mxu0 0
        %1406 = vmatprep.subr.bf16.mxu0 0
        %1407 = vmatpush1.bf16.msra.mxu0 0
        %1408 = vmatprep.mubr.bf16.mxu0 0
        %1409 = vmatmul.mubr.bf16.gmra.mrb[0].mxu0 %v1371
        %v1410 = vpop.f32.mrb[0].mxu0
        %v1411 = vadd.f32 0.0, %v1410
        %v1412 = vpop.f32.mrb[0].mxu0
        %v1413 = vpop.f32.mrb[0].mxu0
        %v1414 = vadd.f32 0.0, %v1413
        %v1415 = vpop.f32.mrb[0].mxu0
        %1416 = vdwg.mxu0
        %v1417 = vadd.f32 %v1046, %v1411
        %v1418 = vadd.f32 %v1047, %v1414
        %s1419 = scalar_lea.vmem %s2, 32
        %v1420 = vld [vmem:[%s1419] sm:$0xf]
        %v1421 = vld [vmem:[%s1419 + $0x4] sm:$0xf]
        %v1422 = vld [vmem:[%s1419 + $0x8] sm:$0xf]
        %v1423 = vld [vmem:[%s1419 + $0xc] sm:$0xf]
        %s1424 = scalar_lea.vmem %s5, 2
        %v1425 = vld [vmem:[%s1424] sm:$0x1]
        %v1427 = vlaneseq
        %v1428 = vshrl.u32 %v1427, 7
        %v1429 = vsub.s32 0, %v1428
        %v1430 = vrot.slane %v1425, %v1429
        %v1436 = vunpack.c.l.b16 %v1420
        %v1437 = vunpack.c.l.b16 %v1421
        %v1438 = vunpack.c.l.b16 %v1422
        %v1439 = vunpack.c.l.b16 %v1423
        %v1440 = vpack.c.b16 %v1437, %v1436
        %v1441 = vpack.c.b16 %v1439, %v1438
        %1444 = vmatprep.subr.bf16.mxu0 0
        %1445 = vmatpush1.bf16.msra.mxu0 %v1440
        %1446 = vmatprep.subr.bf16.mxu0 0
        %1447 = vmatpush1.bf16.msra.mxu0 %v1441
        %1448 = vmatprep.subr.bf16.mxu0 0
        %1449 = vmatpush1.bf16.msra.mxu0 0
        %1450 = vmatprep.subr.bf16.mxu0 0
        %1451 = vmatpush1.bf16.msra.mxu0 0
        %1452 = vmatprep.subr.bf16.mxu0 0
        %1453 = vmatpush1.bf16.msra.mxu0 0
        %1454 = vmatprep.subr.bf16.mxu0 0
        %1455 = vmatpush1.bf16.msra.mxu0 0
        %1456 = vmatprep.subr.bf16.mxu0 0
        %1457 = vmatpush1.bf16.msra.mxu0 0
        %1458 = vmatprep.subr.bf16.mxu0 0
        %1459 = vmatpush1.bf16.msra.mxu0 0
        %1460 = vmatprep.subr.bf16.mxu0 0
        %1461 = vmatpush1.bf16.msra.mxu0 0
        %1462 = vmatprep.subr.bf16.mxu0 0
        %1463 = vmatpush1.bf16.msra.mxu0 0
        %1464 = vmatprep.subr.bf16.mxu0 0
        %1465 = vmatpush1.bf16.msra.mxu0 0
        %1466 = vmatprep.subr.bf16.mxu0 0
        %1467 = vmatpush1.bf16.msra.mxu0 0
        %1468 = vmatprep.subr.bf16.mxu0 0
        %1469 = vmatpush1.bf16.msra.mxu0 0
        %1470 = vmatprep.subr.bf16.mxu0 0
        %1471 = vmatpush1.bf16.msra.mxu0 0
        %1472 = vmatprep.subr.bf16.mxu0 0
        %1473 = vmatpush1.bf16.msra.mxu0 0
        %1474 = vmatprep.subr.bf16.mxu0 0
        %1475 = vmatpush1.bf16.msra.mxu0 0
        %1476 = vmatprep.mubr.bf16.mxu0 0
        %1477 = vmatmul.mubr.bf16.gmra.mrb[0].mxu0 %v705
        %v1478 = vpop.f32.mrb[0].mxu0
        %v1479 = vadd.f32 %v1430, %v1478
        %v1480 = vpop.f32.mrb[0].mxu0
        %v1481 = vpop.f32.mrb[0].mxu0
        %v1482 = vadd.f32 %v1430, %v1481
        %v1483 = vpop.f32.mrb[0].mxu0
        %1484 = vdwg.mxu0
        %v1485 = vmul.f32 %v1479, 0.5
        %v1486 = vmul.f32 %v1482, 0.5
        %s1487 = scalar_lea.vmem %s3, 32
        %v1488 = vld [vmem:[%s1487] sm:$0xf]
        %v1489 = vld [vmem:[%s1487 + $0x4] sm:$0xf]
        %v1490 = vld [vmem:[%s1487 + $0x8] sm:$0xf]
        %v1491 = vld [vmem:[%s1487 + $0xc] sm:$0xf]
        %s1492 = scalar_lea.vmem %s6, 2
        %v1493 = vld [vmem:[%s1492] sm:$0x1]
        %v1495 = vlaneseq
        %v1496 = vshrl.u32 %v1495, 7
        %v1497 = vsub.s32 0, %v1496
        %v1498 = vrot.slane %v1493, %v1497
        %v1504 = vunpack.c.l.b16 %v1488
        %v1505 = vunpack.c.l.b16 %v1489
        %v1506 = vunpack.c.l.b16 %v1490
        %v1507 = vunpack.c.l.b16 %v1491
        %v1508 = vpack.c.b16 %v1505, %v1504
        %v1509 = vpack.c.b16 %v1507, %v1506
        %1512 = vmatprep.subr.bf16.mxu0 0
        %1513 = vmatpush1.bf16.msra.mxu0 %v1508
        %1514 = vmatprep.subr.bf16.mxu0 0
        %1515 = vmatpush1.bf16.msra.mxu0 %v1509
        %1516 = vmatprep.subr.bf16.mxu0 0
        %1517 = vmatpush1.bf16.msra.mxu0 0
        %1518 = vmatprep.subr.bf16.mxu0 0
        %1519 = vmatpush1.bf16.msra.mxu0 0
        %1520 = vmatprep.subr.bf16.mxu0 0
        %1521 = vmatpush1.bf16.msra.mxu0 0
        %1522 = vmatprep.subr.bf16.mxu0 0
        %1523 = vmatpush1.bf16.msra.mxu0 0
        %1524 = vmatprep.subr.bf16.mxu0 0
        %1525 = vmatpush1.bf16.msra.mxu0 0
        %1526 = vmatprep.subr.bf16.mxu0 0
        %1527 = vmatpush1.bf16.msra.mxu0 0
        %1528 = vmatprep.subr.bf16.mxu0 0
        %1529 = vmatpush1.bf16.msra.mxu0 0
        %1530 = vmatprep.subr.bf16.mxu0 0
        %1531 = vmatpush1.bf16.msra.mxu0 0
        %1532 = vmatprep.subr.bf16.mxu0 0
        %1533 = vmatpush1.bf16.msra.mxu0 0
        %1534 = vmatprep.subr.bf16.mxu0 0
        %1535 = vmatpush1.bf16.msra.mxu0 0
        %1536 = vmatprep.subr.bf16.mxu0 0
        %1537 = vmatpush1.bf16.msra.mxu0 0
        %1538 = vmatprep.subr.bf16.mxu0 0
        %1539 = vmatpush1.bf16.msra.mxu0 0
        %1540 = vmatprep.subr.bf16.mxu0 0
        %1541 = vmatpush1.bf16.msra.mxu0 0
        %1542 = vmatprep.subr.bf16.mxu0 0
        %1543 = vmatpush1.bf16.msra.mxu0 0
        %1544 = vmatprep.mubr.bf16.mxu0 0
        %1545 = vmatmul.mubr.bf16.gmra.mrb[0].mxu0 %v705
        %v1546 = vpop.f32.mrb[0].mxu0
        %v1547 = vadd.f32 %v1498, %v1546
        %v1548 = vpop.f32.mrb[0].mxu0
        %v1549 = vpop.f32.mrb[0].mxu0
        %v1550 = vadd.f32 %v1498, %v1549
        %v1551 = vpop.f32.mrb[0].mxu0
        %1552 = vdwg.mxu0
        %s1553 = scalar_lea.vmem %s4, 32
        %v1554 = vld [vmem:[%s1553] sm:$0xf]
        %v1555 = vld [vmem:[%s1553 + $0x4] sm:$0xf]
        %v1556 = vld [vmem:[%s1553 + $0x8] sm:$0xf]
        %v1557 = vld [vmem:[%s1553 + $0xc] sm:$0xf]
        %s1558 = scalar_lea.vmem %s7, 2
        %v1559 = vld [vmem:[%s1558] sm:$0x1]
        %v1561 = vlaneseq
        %v1562 = vshrl.u32 %v1561, 7
        %v1563 = vsub.s32 0, %v1562
        %v1564 = vrot.slane %v1559, %v1563
        %v1570 = vunpack.c.l.b16 %v1554
        %v1571 = vunpack.c.l.b16 %v1555
        %v1572 = vunpack.c.l.b16 %v1556
        %v1573 = vunpack.c.l.b16 %v1557
        %v1574 = vpack.c.b16 %v1571, %v1570
        %v1575 = vpack.c.b16 %v1573, %v1572
        %1578 = vmatprep.subr.bf16.mxu0 0
        %1579 = vmatpush1.bf16.msra.mxu0 %v1574
        %1580 = vmatprep.subr.bf16.mxu0 0
        %1581 = vmatpush1.bf16.msra.mxu0 %v1575
        %1582 = vmatprep.subr.bf16.mxu0 0
        %1583 = vmatpush1.bf16.msra.mxu0 0
        %1584 = vmatprep.subr.bf16.mxu0 0
        %1585 = vmatpush1.bf16.msra.mxu0 0
        %1586 = vmatprep.subr.bf16.mxu0 0
        %1587 = vmatpush1.bf16.msra.mxu0 0
        %1588 = vmatprep.subr.bf16.mxu0 0
        %1589 = vmatpush1.bf16.msra.mxu0 0
        %1590 = vmatprep.subr.bf16.mxu0 0
        %1591 = vmatpush1.bf16.msra.mxu0 0
        %1592 = vmatprep.subr.bf16.mxu0 0
        %1593 = vmatpush1.bf16.msra.mxu0 0
        %1594 = vmatprep.subr.bf16.mxu0 0
        %1595 = vmatpush1.bf16.msra.mxu0 0
        %1596 = vmatprep.subr.bf16.mxu0 0
        %1597 = vmatpush1.bf16.msra.mxu0 0
        %1598 = vmatprep.subr.bf16.mxu0 0
        %1599 = vmatpush1.bf16.msra.mxu0 0
        %1600 = vmatprep.subr.bf16.mxu0 0
        %1601 = vmatpush1.bf16.msra.mxu0 0
        %1602 = vmatprep.subr.bf16.mxu0 0
        %1603 = vmatpush1.bf16.msra.mxu0 0
        %1604 = vmatprep.subr.bf16.mxu0 0
        %1605 = vmatpush1.bf16.msra.mxu0 0
        %1606 = vmatprep.subr.bf16.mxu0 0
        %1607 = vmatpush1.bf16.msra.mxu0 0
        %1608 = vmatprep.subr.bf16.mxu0 0
        %1609 = vmatpush1.bf16.msra.mxu0 0
        %1610 = vmatprep.mubr.bf16.mxu0 0
        %1611 = vmatmul.mubr.bf16.gmra.mrb[0].mxu0 %v705
        %v1612 = vpop.f32.mrb[0].mxu0
        %v1613 = vadd.f32 %v1564, %v1612
        %v1614 = vpop.f32.mrb[0].mxu0
        %v1615 = vpop.f32.mrb[0].mxu0
        %v1616 = vadd.f32 %v1564, %v1615
        %v1617 = vpop.f32.mrb[0].mxu0
        %1618 = vdwg.mxu0
        %v1619 = vpack.c.bf16 %v1486, %v1485
        %v1620 = vpack.c.bf16 %v1550, %v1547
        %v1622 = vsel %vm614, %v1619, 0
        %v1625 = vsel %vm614, %v1620, 0
        %1627 = vmatprep.subr.bf16.mxu0 0
        %1628 = vmatpush1.bf16.xpose.msra.mxu0 %v1625
        %1629 = vmatprep.subr.bf16.mxu0 0
        %1630 = vmatpush1.bf16.xpose.msra.mxu0 0
        %1631 = vmatprep.subr.bf16.mxu0 0
        %1632 = vmatpush1.bf16.xpose.msra.mxu0 0
        %1633 = vmatprep.subr.bf16.mxu0 0
        %1634 = vmatpush1.bf16.xpose.msra.mxu0 0
        %1635 = vmatprep.subr.bf16.mxu0 0
        %1636 = vmatpush1.bf16.xpose.msra.mxu0 0
        %1637 = vmatprep.subr.bf16.mxu0 0
        %1638 = vmatpush1.bf16.xpose.msra.mxu0 0
        %1639 = vmatprep.subr.bf16.mxu0 0
        %1640 = vmatpush1.bf16.xpose.msra.mxu0 0
        %1641 = vmatprep.subr.bf16.mxu0 0
        %1642 = vmatpush1.bf16.xpose.msra.mxu0 0
        %1643 = vmatprep.subr.bf16.mxu0 0
        %1644 = vmatpush1.bf16.xpose.msra.mxu0 0
        %1645 = vmatprep.subr.bf16.mxu0 0
        %1646 = vmatpush1.bf16.xpose.msra.mxu0 0
        %1647 = vmatprep.subr.bf16.mxu0 0
        %1648 = vmatpush1.bf16.xpose.msra.mxu0 0
        %1649 = vmatprep.subr.bf16.mxu0 0
        %1650 = vmatpush1.bf16.xpose.msra.mxu0 0
        %1651 = vmatprep.subr.bf16.mxu0 0
        %1652 = vmatpush1.bf16.xpose.msra.mxu0 0
        %1653 = vmatprep.subr.bf16.mxu0 0
        %1654 = vmatpush1.bf16.xpose.msra.mxu0 0
        %1655 = vmatprep.subr.bf16.mxu0 0
        %1656 = vmatpush1.bf16.xpose.msra.mxu0 0
        %1657 = vmatprep.subr.bf16.mxu0 0
        %1658 = vmatpush1.bf16.xpose.msra.mxu0 0
        %1659 = vmatprep.mubr.bf16.mxu0 0
        %1660 = vmatmul.mubr.bf16.gmra.mrb[0].mxu0 %v1622
        %v1661 = vpop.f32.mrb[0].mxu0
        %v1662 = vadd.f32 0.0, %v1661
        %v1663 = vpop.f32.mrb[0].mxu0
        %v1664 = vpop.f32.mrb[0].mxu0
        %v1665 = vadd.f32 0.0, %v1664
        %v1666 = vpop.f32.mrb[0].mxu0
        %1667 = vdwg.mxu0
        %v1668 = vsel %vm663, %v1662, -1e+30
        %v1669 = vsel %vm664, %v1665, -1e+30
        %v1670 = vsel %vm665, %v1668, -inf
        %1671 = vmax.xlane.f32.xlu0 %v1670
        %v1672 = vpop.xlane.xlu0 %1671
        %v1673 = vsel %vm665, %v1669, -inf
        %1674 = vmax.xlane.f32.xlu0 %v1673
        %v1675 = vpop.xlane.xlu0 %1674
        %v1676 = vsub.f32 %v1668, %v1672
        %v1677 = vsub.f32 %v1669, %v1675
        %v1678 = vmul.f32 %v1676, 1.442695
        %v1679 = vpow.pop %v1678
        %v1680 = vmul.f32 %v1677, 1.442695
        %v1681 = vpow.pop %v1680
        %v1682 = vsel %vm665, %v1679, 0.0
        %1683 = vadd.xlane.f32.xlu0 %v1682
        %v1684 = vpop.xlane.xlu0 %1683
        %v1685 = vsel %vm665, %v1681, 0.0
        %1686 = vadd.xlane.f32.xlu0 %v1685
        %v1687 = vpop.xlane.xlu0 %1686
        %v1688 = vpack.c.bf16 %v1681, %v1679
        %v1689 = vpack.c.bf16 %v1616, %v1613
        %v1691 = vsel %vm665, %v1688, 0
        %1693 = vmatprep.subr.bf16.mxu0 0
        %1694 = vmatpush1.bf16.msra.mxu0 %v1689
        %1695 = vmatprep.subr.bf16.mxu0 0
        %1696 = vmatpush1.bf16.msra.mxu0 0
        %1697 = vmatprep.subr.bf16.mxu0 0
        %1698 = vmatpush1.bf16.msra.mxu0 0
        %1699 = vmatprep.subr.bf16.mxu0 0
        %1700 = vmatpush1.bf16.msra.mxu0 0
        %1701 = vmatprep.subr.bf16.mxu0 0
        %1702 = vmatpush1.bf16.msra.mxu0 0
        %1703 = vmatprep.subr.bf16.mxu0 0
        %1704 = vmatpush1.bf16.msra.mxu0 0
        %1705 = vmatprep.subr.bf16.mxu0 0
        %1706 = vmatpush1.bf16.msra.mxu0 0
        %1707 = vmatprep.subr.bf16.mxu0 0
        %1708 = vmatpush1.bf16.msra.mxu0 0
        %1709 = vmatprep.subr.bf16.mxu0 0
        %1710 = vmatpush1.bf16.msra.mxu0 0
        %1711 = vmatprep.subr.bf16.mxu0 0
        %1712 = vmatpush1.bf16.msra.mxu0 0
        %1713 = vmatprep.subr.bf16.mxu0 0
        %1714 = vmatpush1.bf16.msra.mxu0 0
        %1715 = vmatprep.subr.bf16.mxu0 0
        %1716 = vmatpush1.bf16.msra.mxu0 0
        %1717 = vmatprep.subr.bf16.mxu0 0
        %1718 = vmatpush1.bf16.msra.mxu0 0
        %1719 = vmatprep.subr.bf16.mxu0 0
        %1720 = vmatpush1.bf16.msra.mxu0 0
        %1721 = vmatprep.subr.bf16.mxu0 0
        %1722 = vmatpush1.bf16.msra.mxu0 0
        %1723 = vmatprep.subr.bf16.mxu0 0
        %1724 = vmatpush1.bf16.msra.mxu0 0
        %1725 = vmatprep.mubr.bf16.mxu0 0
        %1726 = vmatmul.mubr.bf16.gmra.mrb[0].mxu0 %v1691
        %v1727 = vpop.f32.mrb[0].mxu0
        %v1728 = vadd.f32 0.0, %v1727
        %v1729 = vpop.f32.mrb[0].mxu0
        %v1730 = vpop.f32.mrb[0].mxu0
        %v1731 = vadd.f32 0.0, %v1730
        %v1732 = vpop.f32.mrb[0].mxu0
        %1733 = vdwg.mxu0
        %v1734 = vrcp.pop %v1684
        %v1735 = vrcp.pop %v1687
        %v1736 = vmul.f32 %v1728, %v1734
        %v1737 = vmul.f32 %v1731, %v1735
        %v1738 = vpack.c.bf16 %v1737, %v1736
        %s1739 = scalar_lea.vmem %s8, 4
        %v1740 = vld [vmem:[%s1739] sm:$0x3]
        %v1742 = vsel %vm614, %v1738, 0
        %v1745 = vsel %vm618, %v1740, 0
        %1747 = vmatprep.subr.bf16.mxu0 0
        %1748 = vmatpush1.bf16.msra.mxu0 %v1745
        %1749 = vmatprep.subr.bf16.mxu0 0
        %1750 = vmatpush1.bf16.msra.mxu0 0
        %1751 = vmatprep.subr.bf16.mxu0 0
        %1752 = vmatpush1.bf16.msra.mxu0 0
        %1753 = vmatprep.subr.bf16.mxu0 0
        %1754 = vmatpush1.bf16.msra.mxu0 0
        %1755 = vmatprep.subr.bf16.mxu0 0
        %1756 = vmatpush1.bf16.msra.mxu0 0
        %1757 = vmatprep.subr.bf16.mxu0 0
        %1758 = vmatpush1.bf16.msra.mxu0 0
        %1759 = vmatprep.subr.bf16.mxu0 0
        %1760 = vmatpush1.bf16.msra.mxu0 0
        %1761 = vmatprep.subr.bf16.mxu0 0
        %1762 = vmatpush1.bf16.msra.mxu0 0
        %1763 = vmatprep.subr.bf16.mxu0 0
        %1764 = vmatpush1.bf16.msra.mxu0 0
        %1765 = vmatprep.subr.bf16.mxu0 0
        %1766 = vmatpush1.bf16.msra.mxu0 0
        %1767 = vmatprep.subr.bf16.mxu0 0
        %1768 = vmatpush1.bf16.msra.mxu0 0
        %1769 = vmatprep.subr.bf16.mxu0 0
        %1770 = vmatpush1.bf16.msra.mxu0 0
        %1771 = vmatprep.subr.bf16.mxu0 0
        %1772 = vmatpush1.bf16.msra.mxu0 0
        %1773 = vmatprep.subr.bf16.mxu0 0
        %1774 = vmatpush1.bf16.msra.mxu0 0
        %1775 = vmatprep.subr.bf16.mxu0 0
        %1776 = vmatpush1.bf16.msra.mxu0 0
        %1777 = vmatprep.subr.bf16.mxu0 0
        %1778 = vmatpush1.bf16.msra.mxu0 0
        %1779 = vmatprep.mubr.bf16.mxu0 0
        %1780 = vmatmul.mubr.bf16.gmra.mrb[0].mxu0 %v1742
        %v1781 = vpop.f32.mrb[0].mxu0
        %v1782 = vadd.f32 0.0, %v1781
        %v1783 = vpop.f32.mrb[0].mxu0
        %v1784 = vpop.f32.mrb[0].mxu0
        %v1785 = vadd.f32 0.0, %v1784
        %v1786 = vpop.f32.mrb[0].mxu0
        %1787 = vdwg.mxu0
        %v1788 = vadd.f32 %v1417, %v1782
        %v1789 = vadd.f32 %v1418, %v1785
        %s1790 = scalar_lea.vmem %s2, 48
        %v1791 = vld [vmem:[%s1790] sm:$0xf]
        %v1792 = vld [vmem:[%s1790 + $0x4] sm:$0xf]
        %v1793 = vld [vmem:[%s1790 + $0x8] sm:$0xf]
        %v1794 = vld [vmem:[%s1790 + $0xc] sm:$0xf]
        %s1795 = scalar_lea.vmem %s5, 3
        %v1796 = vld [vmem:[%s1795] sm:$0x1]
        %v1798 = vlaneseq
        %v1799 = vshrl.u32 %v1798, 7
        %v1800 = vsub.s32 0, %v1799
        %v1801 = vrot.slane %v1796, %v1800
        %v1807 = vunpack.c.l.b16 %v1791
        %v1808 = vunpack.c.l.b16 %v1792
        %v1809 = vunpack.c.l.b16 %v1793
        %v1810 = vunpack.c.l.b16 %v1794
        %v1811 = vpack.c.b16 %v1808, %v1807
        %v1812 = vpack.c.b16 %v1810, %v1809
        %1815 = vmatprep.subr.bf16.mxu0 0
        %1816 = vmatpush1.bf16.msra.mxu0 %v1811
        %1817 = vmatprep.subr.bf16.mxu0 0
        %1818 = vmatpush1.bf16.msra.mxu0 %v1812
        %1819 = vmatprep.subr.bf16.mxu0 0
        %1820 = vmatpush1.bf16.msra.mxu0 0
        %1821 = vmatprep.subr.bf16.mxu0 0
        %1822 = vmatpush1.bf16.msra.mxu0 0
        %1823 = vmatprep.subr.bf16.mxu0 0
        %1824 = vmatpush1.bf16.msra.mxu0 0
        %1825 = vmatprep.subr.bf16.mxu0 0
        %1826 = vmatpush1.bf16.msra.mxu0 0
        %1827 = vmatprep.subr.bf16.mxu0 0
        %1828 = vmatpush1.bf16.msra.mxu0 0
        %1829 = vmatprep.subr.bf16.mxu0 0
        %1830 = vmatpush1.bf16.msra.mxu0 0
        %1831 = vmatprep.subr.bf16.mxu0 0
        %1832 = vmatpush1.bf16.msra.mxu0 0
        %1833 = vmatprep.subr.bf16.mxu0 0
        %1834 = vmatpush1.bf16.msra.mxu0 0
        %1835 = vmatprep.subr.bf16.mxu0 0
        %1836 = vmatpush1.bf16.msra.mxu0 0
        %1837 = vmatprep.subr.bf16.mxu0 0
        %1838 = vmatpush1.bf16.msra.mxu0 0
        %1839 = vmatprep.subr.bf16.mxu0 0
        %1840 = vmatpush1.bf16.msra.mxu0 0
        %1841 = vmatprep.subr.bf16.mxu0 0
        %1842 = vmatpush1.bf16.msra.mxu0 0
        %1843 = vmatprep.subr.bf16.mxu0 0
        %1844 = vmatpush1.bf16.msra.mxu0 0
        %1845 = vmatprep.subr.bf16.mxu0 0
        %1846 = vmatpush1.bf16.msra.mxu0 0
        %1847 = vmatprep.mubr.bf16.mxu0 0
        %1848 = vmatmul.mubr.bf16.gmra.mrb[0].mxu0 %v705
        %v1849 = vpop.f32.mrb[0].mxu0
        %v1850 = vadd.f32 %v1801, %v1849
        %v1851 = vpop.f32.mrb[0].mxu0
        %v1852 = vpop.f32.mrb[0].mxu0
        %v1853 = vadd.f32 %v1801, %v1852
        %v1854 = vpop.f32.mrb[0].mxu0
        %1855 = vdwg.mxu0
        %v1856 = vmul.f32 %v1850, 0.5
        %v1857 = vmul.f32 %v1853, 0.5
        %s1858 = scalar_lea.vmem %s3, 48
        %v1859 = vld [vmem:[%s1858] sm:$0xf]
        %v1860 = vld [vmem:[%s1858 + $0x4] sm:$0xf]
        %v1861 = vld [vmem:[%s1858 + $0x8] sm:$0xf]
        %v1862 = vld [vmem:[%s1858 + $0xc] sm:$0xf]
        %s1863 = scalar_lea.vmem %s6, 3
        %v1864 = vld [vmem:[%s1863] sm:$0x1]
        %v1866 = vlaneseq
        %v1867 = vshrl.u32 %v1866, 7
        %v1868 = vsub.s32 0, %v1867
        %v1869 = vrot.slane %v1864, %v1868
        %v1875 = vunpack.c.l.b16 %v1859
        %v1876 = vunpack.c.l.b16 %v1860
        %v1877 = vunpack.c.l.b16 %v1861
        %v1878 = vunpack.c.l.b16 %v1862
        %v1879 = vpack.c.b16 %v1876, %v1875
        %v1880 = vpack.c.b16 %v1878, %v1877
        %1883 = vmatprep.subr.bf16.mxu0 0
        %1884 = vmatpush1.bf16.msra.mxu0 %v1879
        %1885 = vmatprep.subr.bf16.mxu0 0
        %1886 = vmatpush1.bf16.msra.mxu0 %v1880
        %1887 = vmatprep.subr.bf16.mxu0 0
        %1888 = vmatpush1.bf16.msra.mxu0 0
        %1889 = vmatprep.subr.bf16.mxu0 0
        %1890 = vmatpush1.bf16.msra.mxu0 0
        %1891 = vmatprep.subr.bf16.mxu0 0
        %1892 = vmatpush1.bf16.msra.mxu0 0
        %1893 = vmatprep.subr.bf16.mxu0 0
        %1894 = vmatpush1.bf16.msra.mxu0 0
        %1895 = vmatprep.subr.bf16.mxu0 0
        %1896 = vmatpush1.bf16.msra.mxu0 0
        %1897 = vmatprep.subr.bf16.mxu0 0
        %1898 = vmatpush1.bf16.msra.mxu0 0
        %1899 = vmatprep.subr.bf16.mxu0 0
        %1900 = vmatpush1.bf16.msra.mxu0 0
        %1901 = vmatprep.subr.bf16.mxu0 0
        %1902 = vmatpush1.bf16.msra.mxu0 0
        %1903 = vmatprep.subr.bf16.mxu0 0
        %1904 = vmatpush1.bf16.msra.mxu0 0
        %1905 = vmatprep.subr.bf16.mxu0 0
        %1906 = vmatpush1.bf16.msra.mxu0 0
        %1907 = vmatprep.subr.bf16.mxu0 0
        %1908 = vmatpush1.bf16.msra.mxu0 0
        %1909 = vmatprep.subr.bf16.mxu0 0
        %1910 = vmatpush1.bf16.msra.mxu0 0
        %1911 = vmatprep.subr.bf16.mxu0 0
        %1912 = vmatpush1.bf16.msra.mxu0 0
        %1913 = vmatprep.subr.bf16.mxu0 0
        %1914 = vmatpush1.bf16.msra.mxu0 0
        %1915 = vmatprep.mubr.bf16.mxu0 0
        %1916 = vmatmul.mubr.bf16.gmra.mrb[0].mxu0 %v705
        %v1917 = vpop.f32.mrb[0].mxu0
        %v1918 = vadd.f32 %v1869, %v1917
        %v1919 = vpop.f32.mrb[0].mxu0
        %v1920 = vpop.f32.mrb[0].mxu0
        %v1921 = vadd.f32 %v1869, %v1920
        %v1922 = vpop.f32.mrb[0].mxu0
        %1923 = vdwg.mxu0
        %s1924 = scalar_lea.vmem %s4, 48
        %v1925 = vld [vmem:[%s1924] sm:$0xf]
        %v1926 = vld [vmem:[%s1924 + $0x4] sm:$0xf]
        %v1927 = vld [vmem:[%s1924 + $0x8] sm:$0xf]
        %v1928 = vld [vmem:[%s1924 + $0xc] sm:$0xf]
        %s1929 = scalar_lea.vmem %s7, 3
        %v1930 = vld [vmem:[%s1929] sm:$0x1]
        %v1932 = vlaneseq
        %v1933 = vshrl.u32 %v1932, 7
        %v1934 = vsub.s32 0, %v1933
        %v1935 = vrot.slane %v1930, %v1934
        %v1941 = vunpack.c.l.b16 %v1925
        %v1942 = vunpack.c.l.b16 %v1926
        %v1943 = vunpack.c.l.b16 %v1927
        %v1944 = vunpack.c.l.b16 %v1928
        %v1945 = vpack.c.b16 %v1942, %v1941
        %v1946 = vpack.c.b16 %v1944, %v1943
        %1949 = vmatprep.subr.bf16.mxu0 0
        %1950 = vmatpush1.bf16.msra.mxu0 %v1945
        %1951 = vmatprep.subr.bf16.mxu0 0
        %1952 = vmatpush1.bf16.msra.mxu0 %v1946
        %1953 = vmatprep.subr.bf16.mxu0 0
        %1954 = vmatpush1.bf16.msra.mxu0 0
        %1955 = vmatprep.subr.bf16.mxu0 0
        %1956 = vmatpush1.bf16.msra.mxu0 0
        %1957 = vmatprep.subr.bf16.mxu0 0
        %1958 = vmatpush1.bf16.msra.mxu0 0
        %1959 = vmatprep.subr.bf16.mxu0 0
        %1960 = vmatpush1.bf16.msra.mxu0 0
        %1961 = vmatprep.subr.bf16.mxu0 0
        %1962 = vmatpush1.bf16.msra.mxu0 0
        %1963 = vmatprep.subr.bf16.mxu0 0
        %1964 = vmatpush1.bf16.msra.mxu0 0
        %1965 = vmatprep.subr.bf16.mxu0 0
        %1966 = vmatpush1.bf16.msra.mxu0 0
        %1967 = vmatprep.subr.bf16.mxu0 0
        %1968 = vmatpush1.bf16.msra.mxu0 0
        %1969 = vmatprep.subr.bf16.mxu0 0
        %1970 = vmatpush1.bf16.msra.mxu0 0
        %1971 = vmatprep.subr.bf16.mxu0 0
        %1972 = vmatpush1.bf16.msra.mxu0 0
        %1973 = vmatprep.subr.bf16.mxu0 0
        %1974 = vmatpush1.bf16.msra.mxu0 0
        %1975 = vmatprep.subr.bf16.mxu0 0
        %1976 = vmatpush1.bf16.msra.mxu0 0
        %1977 = vmatprep.subr.bf16.mxu0 0
        %1978 = vmatpush1.bf16.msra.mxu0 0
        %1979 = vmatprep.subr.bf16.mxu0 0
        %1980 = vmatpush1.bf16.msra.mxu0 0
        %1981 = vmatprep.mubr.bf16.mxu0 0
        %1982 = vmatmul.mubr.bf16.gmra.mrb[0].mxu0 %v705
        %v1983 = vpop.f32.mrb[0].mxu0
        %v1984 = vadd.f32 %v1935, %v1983
        %v1985 = vpop.f32.mrb[0].mxu0
        %v1986 = vpop.f32.mrb[0].mxu0
        %v1987 = vadd.f32 %v1935, %v1986
        %v1988 = vpop.f32.mrb[0].mxu0
        %1989 = vdwg.mxu0
        %v1990 = vpack.c.bf16 %v1857, %v1856
        %v1991 = vpack.c.bf16 %v1921, %v1918
        %v1993 = vsel %vm614, %v1990, 0
        %v1996 = vsel %vm614, %v1991, 0
        %1998 = vmatprep.subr.bf16.mxu0 0
        %1999 = vmatpush1.bf16.xpose.msra.mxu0 %v1996
        %2000 = vmatprep.subr.bf16.mxu0 0
        %2001 = vmatpush1.bf16.xpose.msra.mxu0 0
        %2002 = vmatprep.subr.bf16.mxu0 0
        %2003 = vmatpush1.bf16.xpose.msra.mxu0 0
        %2004 = vmatprep.subr.bf16.mxu0 0
        %2005 = vmatpush1.bf16.xpose.msra.mxu0 0
        %2006 = vmatprep.subr.bf16.mxu0 0
        %2007 = vmatpush1.bf16.xpose.msra.mxu0 0
        %2008 = vmatprep.subr.bf16.mxu0 0
        %2009 = vmatpush1.bf16.xpose.msra.mxu0 0
        %2010 = vmatprep.subr.bf16.mxu0 0
        %2011 = vmatpush1.bf16.xpose.msra.mxu0 0
        %2012 = vmatprep.subr.bf16.mxu0 0
        %2013 = vmatpush1.bf16.xpose.msra.mxu0 0
        %2014 = vmatprep.subr.bf16.mxu0 0
        %2015 = vmatpush1.bf16.xpose.msra.mxu0 0
        %2016 = vmatprep.subr.bf16.mxu0 0
        %2017 = vmatpush1.bf16.xpose.msra.mxu0 0
        %2018 = vmatprep.subr.bf16.mxu0 0
        %2019 = vmatpush1.bf16.xpose.msra.mxu0 0
        %2020 = vmatprep.subr.bf16.mxu0 0
        %2021 = vmatpush1.bf16.xpose.msra.mxu0 0
        %2022 = vmatprep.subr.bf16.mxu0 0
        %2023 = vmatpush1.bf16.xpose.msra.mxu0 0
        %2024 = vmatprep.subr.bf16.mxu0 0
        %2025 = vmatpush1.bf16.xpose.msra.mxu0 0
        %2026 = vmatprep.subr.bf16.mxu0 0
        %2027 = vmatpush1.bf16.xpose.msra.mxu0 0
        %2028 = vmatprep.subr.bf16.mxu0 0
        %2029 = vmatpush1.bf16.xpose.msra.mxu0 0
        %2030 = vmatprep.mubr.bf16.mxu0 0
        %2031 = vmatmul.mubr.bf16.gmra.mrb[0].mxu0 %v1993
        %v2032 = vpop.f32.mrb[0].mxu0
        %v2033 = vadd.f32 0.0, %v2032
        %v2034 = vpop.f32.mrb[0].mxu0
        %v2035 = vpop.f32.mrb[0].mxu0
        %v2036 = vadd.f32 0.0, %v2035
        %v2037 = vpop.f32.mrb[0].mxu0
        %2038 = vdwg.mxu0
        %v2039 = vsel %vm663, %v2033, -1e+30
        %v2040 = vsel %vm664, %v2036, -1e+30
        %v2041 = vsel %vm665, %v2039, -inf
        %2042 = vmax.xlane.f32.xlu0 %v2041
        %v2043 = vpop.xlane.xlu0 %2042
        %v2044 = vsel %vm665, %v2040, -inf
        %2045 = vmax.xlane.f32.xlu0 %v2044
        %v2046 = vpop.xlane.xlu0 %2045
        %v2047 = vsub.f32 %v2039, %v2043
        %v2048 = vsub.f32 %v2040, %v2046
        %v2049 = vmul.f32 %v2047, 1.442695
        %v2050 = vpow.pop %v2049
        %v2051 = vmul.f32 %v2048, 1.442695
        %v2052 = vpow.pop %v2051
        %v2053 = vsel %vm665, %v2050, 0.0
        %2054 = vadd.xlane.f32.xlu0 %v2053
        %v2055 = vpop.xlane.xlu0 %2054
        %v2056 = vsel %vm665, %v2052, 0.0
        %2057 = vadd.xlane.f32.xlu0 %v2056
        %v2058 = vpop.xlane.xlu0 %2057
        %v2059 = vpack.c.bf16 %v2052, %v2050
        %v2060 = vpack.c.bf16 %v1987, %v1984
        %v2062 = vsel %vm665, %v2059, 0
        %2064 = vmatprep.subr.bf16.mxu0 0
        %2065 = vmatpush1.bf16.msra.mxu0 %v2060
        %2066 = vmatprep.subr.bf16.mxu0 0
        %2067 = vmatpush1.bf16.msra.mxu0 0
        %2068 = vmatprep.subr.bf16.mxu0 0
        %2069 = vmatpush1.bf16.msra.mxu0 0
        %2070 = vmatprep.subr.bf16.mxu0 0
        %2071 = vmatpush1.bf16.msra.mxu0 0
        %2072 = vmatprep.subr.bf16.mxu0 0
        %2073 = vmatpush1.bf16.msra.mxu0 0
        %2074 = vmatprep.subr.bf16.mxu0 0
        %2075 = vmatpush1.bf16.msra.mxu0 0
        %2076 = vmatprep.subr.bf16.mxu0 0
        %2077 = vmatpush1.bf16.msra.mxu0 0
        %2078 = vmatprep.subr.bf16.mxu0 0
        %2079 = vmatpush1.bf16.msra.mxu0 0
        %2080 = vmatprep.subr.bf16.mxu0 0
        %2081 = vmatpush1.bf16.msra.mxu0 0
        %2082 = vmatprep.subr.bf16.mxu0 0
        %2083 = vmatpush1.bf16.msra.mxu0 0
        %2084 = vmatprep.subr.bf16.mxu0 0
        %2085 = vmatpush1.bf16.msra.mxu0 0
        %2086 = vmatprep.subr.bf16.mxu0 0
        %2087 = vmatpush1.bf16.msra.mxu0 0
        %2088 = vmatprep.subr.bf16.mxu0 0
        %2089 = vmatpush1.bf16.msra.mxu0 0
        %2090 = vmatprep.subr.bf16.mxu0 0
        %2091 = vmatpush1.bf16.msra.mxu0 0
        %2092 = vmatprep.subr.bf16.mxu0 0
        %2093 = vmatpush1.bf16.msra.mxu0 0
        %2094 = vmatprep.subr.bf16.mxu0 0
        %2095 = vmatpush1.bf16.msra.mxu0 0
        %2096 = vmatprep.mubr.bf16.mxu0 0
        %2097 = vmatmul.mubr.bf16.gmra.mrb[0].mxu0 %v2062
        %v2098 = vpop.f32.mrb[0].mxu0
        %v2099 = vadd.f32 0.0, %v2098
        %v2100 = vpop.f32.mrb[0].mxu0
        %v2101 = vpop.f32.mrb[0].mxu0
        %v2102 = vadd.f32 0.0, %v2101
        %v2103 = vpop.f32.mrb[0].mxu0
        %2104 = vdwg.mxu0
        %v2105 = vrcp.pop %v2055
        %v2106 = vrcp.pop %v2058
        %v2107 = vmul.f32 %v2099, %v2105
        %v2108 = vmul.f32 %v2102, %v2106
        %v2109 = vpack.c.bf16 %v2108, %v2107
        %s2110 = scalar_lea.vmem %s8, 6
        %v2111 = vld [vmem:[%s2110] sm:$0x3]
        %v2113 = vsel %vm614, %v2109, 0
        %v2116 = vsel %vm618, %v2111, 0
        %2118 = vmatprep.subr.bf16.mxu0 0
        %2119 = vmatpush1.bf16.msra.mxu0 %v2116
        %2120 = vmatprep.subr.bf16.mxu0 0
        %2121 = vmatpush1.bf16.msra.mxu0 0
        %2122 = vmatprep.subr.bf16.mxu0 0
        %2123 = vmatpush1.bf16.msra.mxu0 0
        %2124 = vmatprep.subr.bf16.mxu0 0
        %2125 = vmatpush1.bf16.msra.mxu0 0
        %2126 = vmatprep.subr.bf16.mxu0 0
        %2127 = vmatpush1.bf16.msra.mxu0 0
        %2128 = vmatprep.subr.bf16.mxu0 0
        %2129 = vmatpush1.bf16.msra.mxu0 0
        %2130 = vmatprep.subr.bf16.mxu0 0
        %2131 = vmatpush1.bf16.msra.mxu0 0
        %2132 = vmatprep.subr.bf16.mxu0 0
        %2133 = vmatpush1.bf16.msra.mxu0 0
        %2134 = vmatprep.subr.bf16.mxu0 0
        %2135 = vmatpush1.bf16.msra.mxu0 0
        %2136 = vmatprep.subr.bf16.mxu0 0
        %2137 = vmatpush1.bf16.msra.mxu0 0
        %2138 = vmatprep.subr.bf16.mxu0 0
        %2139 = vmatpush1.bf16.msra.mxu0 0
        %2140 = vmatprep.subr.bf16.mxu0 0
        %2141 = vmatpush1.bf16.msra.mxu0 0
        %2142 = vmatprep.subr.bf16.mxu0 0
        %2143 = vmatpush1.bf16.msra.mxu0 0
        %2144 = vmatprep.subr.bf16.mxu0 0
        %2145 = vmatpush1.bf16.msra.mxu0 0
        %2146 = vmatprep.subr.bf16.mxu0 0
        %2147 = vmatpush1.bf16.msra.mxu0 0
        %2148 = vmatprep.subr.bf16.mxu0 0
        %2149 = vmatpush1.bf16.msra.mxu0 0
        %2150 = vmatprep.mubr.bf16.mxu0 0
        %2151 = vmatmul.mubr.bf16.gmra.mrb[0].mxu0 %v2113
        %v2152 = vpop.f32.mrb[0].mxu0
        %v2153 = vadd.f32 0.0, %v2152
        %v2154 = vpop.f32.mrb[0].mxu0
        %v2155 = vpop.f32.mrb[0].mxu0
        %v2156 = vadd.f32 0.0, %v2155
        %v2157 = vpop.f32.mrb[0].mxu0
        %2158 = vdwg.mxu0
        %v2159 = vadd.f32 %v1788, %v2153
        %v2160 = vadd.f32 %v1789, %v2156
        %s2161 = scalar_lea.vmem %s2, 64
        %v2162 = vld [vmem:[%s2161] sm:$0xf]
        %v2163 = vld [vmem:[%s2161 + $0x4] sm:$0xf]
        %v2164 = vld [vmem:[%s2161 + $0x8] sm:$0xf]
        %v2165 = vld [vmem:[%s2161 + $0xc] sm:$0xf]
        %s2166 = scalar_lea.vmem %s5, 4
        %v2167 = vld [vmem:[%s2166] sm:$0x1]
        %v2169 = vlaneseq
        %v2170 = vshrl.u32 %v2169, 7
        %v2171 = vsub.s32 0, %v2170
        %v2172 = vrot.slane %v2167, %v2171
        %v2178 = vunpack.c.l.b16 %v2162
        %v2179 = vunpack.c.l.b16 %v2163
        %v2180 = vunpack.c.l.b16 %v2164
        %v2181 = vunpack.c.l.b16 %v2165
        %v2182 = vpack.c.b16 %v2179, %v2178
        %v2183 = vpack.c.b16 %v2181, %v2180
        %2186 = vmatprep.subr.bf16.mxu0 0
        %2187 = vmatpush1.bf16.msra.mxu0 %v2182
        %2188 = vmatprep.subr.bf16.mxu0 0
        %2189 = vmatpush1.bf16.msra.mxu0 %v2183
        %2190 = vmatprep.subr.bf16.mxu0 0
        %2191 = vmatpush1.bf16.msra.mxu0 0
        %2192 = vmatprep.subr.bf16.mxu0 0
        %2193 = vmatpush1.bf16.msra.mxu0 0
        %2194 = vmatprep.subr.bf16.mxu0 0
        %2195 = vmatpush1.bf16.msra.mxu0 0
        %2196 = vmatprep.subr.bf16.mxu0 0
        %2197 = vmatpush1.bf16.msra.mxu0 0
        %2198 = vmatprep.subr.bf16.mxu0 0
        %2199 = vmatpush1.bf16.msra.mxu0 0
        %2200 = vmatprep.subr.bf16.mxu0 0
        %2201 = vmatpush1.bf16.msra.mxu0 0
        %2202 = vmatprep.subr.bf16.mxu0 0
        %2203 = vmatpush1.bf16.msra.mxu0 0
        %2204 = vmatprep.subr.bf16.mxu0 0
        %2205 = vmatpush1.bf16.msra.mxu0 0
        %2206 = vmatprep.subr.bf16.mxu0 0
        %2207 = vmatpush1.bf16.msra.mxu0 0
        %2208 = vmatprep.subr.bf16.mxu0 0
        %2209 = vmatpush1.bf16.msra.mxu0 0
        %2210 = vmatprep.subr.bf16.mxu0 0
        %2211 = vmatpush1.bf16.msra.mxu0 0
        %2212 = vmatprep.subr.bf16.mxu0 0
        %2213 = vmatpush1.bf16.msra.mxu0 0
        %2214 = vmatprep.subr.bf16.mxu0 0
        %2215 = vmatpush1.bf16.msra.mxu0 0
        %2216 = vmatprep.subr.bf16.mxu0 0
        %2217 = vmatpush1.bf16.msra.mxu0 0
        %2218 = vmatprep.mubr.bf16.mxu0 0
        %2219 = vmatmul.mubr.bf16.gmra.mrb[0].mxu0 %v705
        %v2220 = vpop.f32.mrb[0].mxu0
        %v2221 = vadd.f32 %v2172, %v2220
        %v2222 = vpop.f32.mrb[0].mxu0
        %v2223 = vpop.f32.mrb[0].mxu0
        %v2224 = vadd.f32 %v2172, %v2223
        %v2225 = vpop.f32.mrb[0].mxu0
        %2226 = vdwg.mxu0
        %v2227 = vmul.f32 %v2221, 0.5
        %v2228 = vmul.f32 %v2224, 0.5
        %s2229 = scalar_lea.vmem %s3, 64
        %v2230 = vld [vmem:[%s2229] sm:$0xf]
        %v2231 = vld [vmem:[%s2229 + $0x4] sm:$0xf]
        %v2232 = vld [vmem:[%s2229 + $0x8] sm:$0xf]
        %v2233 = vld [vmem:[%s2229 + $0xc] sm:$0xf]
        %s2234 = scalar_lea.vmem %s6, 4
        %v2235 = vld [vmem:[%s2234] sm:$0x1]
        %v2237 = vlaneseq
        %v2238 = vshrl.u32 %v2237, 7
        %v2239 = vsub.s32 0, %v2238
        %v2240 = vrot.slane %v2235, %v2239
        %v2246 = vunpack.c.l.b16 %v2230
        %v2247 = vunpack.c.l.b16 %v2231
        %v2248 = vunpack.c.l.b16 %v2232
        %v2249 = vunpack.c.l.b16 %v2233
        %v2250 = vpack.c.b16 %v2247, %v2246
        %v2251 = vpack.c.b16 %v2249, %v2248
        %2254 = vmatprep.subr.bf16.mxu0 0
        %2255 = vmatpush1.bf16.msra.mxu0 %v2250
        %2256 = vmatprep.subr.bf16.mxu0 0
        %2257 = vmatpush1.bf16.msra.mxu0 %v2251
        %2258 = vmatprep.subr.bf16.mxu0 0
        %2259 = vmatpush1.bf16.msra.mxu0 0
        %2260 = vmatprep.subr.bf16.mxu0 0
        %2261 = vmatpush1.bf16.msra.mxu0 0
        %2262 = vmatprep.subr.bf16.mxu0 0
        %2263 = vmatpush1.bf16.msra.mxu0 0
        %2264 = vmatprep.subr.bf16.mxu0 0
        %2265 = vmatpush1.bf16.msra.mxu0 0
        %2266 = vmatprep.subr.bf16.mxu0 0
        %2267 = vmatpush1.bf16.msra.mxu0 0
        %2268 = vmatprep.subr.bf16.mxu0 0
        %2269 = vmatpush1.bf16.msra.mxu0 0
        %2270 = vmatprep.subr.bf16.mxu0 0
        %2271 = vmatpush1.bf16.msra.mxu0 0
        %2272 = vmatprep.subr.bf16.mxu0 0
        %2273 = vmatpush1.bf16.msra.mxu0 0
        %2274 = vmatprep.subr.bf16.mxu0 0
        %2275 = vmatpush1.bf16.msra.mxu0 0
        %2276 = vmatprep.subr.bf16.mxu0 0
        %2277 = vmatpush1.bf16.msra.mxu0 0
        %2278 = vmatprep.subr.bf16.mxu0 0
        %2279 = vmatpush1.bf16.msra.mxu0 0
        %2280 = vmatprep.subr.bf16.mxu0 0
        %2281 = vmatpush1.bf16.msra.mxu0 0
        %2282 = vmatprep.subr.bf16.mxu0 0
        %2283 = vmatpush1.bf16.msra.mxu0 0
        %2284 = vmatprep.subr.bf16.mxu0 0
        %2285 = vmatpush1.bf16.msra.mxu0 0
        %2286 = vmatprep.mubr.bf16.mxu0 0
        %2287 = vmatmul.mubr.bf16.gmra.mrb[0].mxu0 %v705
        %v2288 = vpop.f32.mrb[0].mxu0
        %v2289 = vadd.f32 %v2240, %v2288
        %v2290 = vpop.f32.mrb[0].mxu0
        %v2291 = vpop.f32.mrb[0].mxu0
        %v2292 = vadd.f32 %v2240, %v2291
        %v2293 = vpop.f32.mrb[0].mxu0
        %2294 = vdwg.mxu0
        %s2295 = scalar_lea.vmem %s4, 64
        %v2296 = vld [vmem:[%s2295] sm:$0xf]
        %v2297 = vld [vmem:[%s2295 + $0x4] sm:$0xf]
        %v2298 = vld [vmem:[%s2295 + $0x8] sm:$0xf]
        %v2299 = vld [vmem:[%s2295 + $0xc] sm:$0xf]
        %s2300 = scalar_lea.vmem %s7, 4
        %v2301 = vld [vmem:[%s2300] sm:$0x1]
        %v2303 = vlaneseq
        %v2304 = vshrl.u32 %v2303, 7
        %v2305 = vsub.s32 0, %v2304
        %v2306 = vrot.slane %v2301, %v2305
        %v2312 = vunpack.c.l.b16 %v2296
        %v2313 = vunpack.c.l.b16 %v2297
        %v2314 = vunpack.c.l.b16 %v2298
        %v2315 = vunpack.c.l.b16 %v2299
        %v2316 = vpack.c.b16 %v2313, %v2312
        %v2317 = vpack.c.b16 %v2315, %v2314
        %2320 = vmatprep.subr.bf16.mxu0 0
        %2321 = vmatpush1.bf16.msra.mxu0 %v2316
        %2322 = vmatprep.subr.bf16.mxu0 0
        %2323 = vmatpush1.bf16.msra.mxu0 %v2317
        %2324 = vmatprep.subr.bf16.mxu0 0
        %2325 = vmatpush1.bf16.msra.mxu0 0
        %2326 = vmatprep.subr.bf16.mxu0 0
        %2327 = vmatpush1.bf16.msra.mxu0 0
        %2328 = vmatprep.subr.bf16.mxu0 0
        %2329 = vmatpush1.bf16.msra.mxu0 0
        %2330 = vmatprep.subr.bf16.mxu0 0
        %2331 = vmatpush1.bf16.msra.mxu0 0
        %2332 = vmatprep.subr.bf16.mxu0 0
        %2333 = vmatpush1.bf16.msra.mxu0 0
        %2334 = vmatprep.subr.bf16.mxu0 0
        %2335 = vmatpush1.bf16.msra.mxu0 0
        %2336 = vmatprep.subr.bf16.mxu0 0
        %2337 = vmatpush1.bf16.msra.mxu0 0
        %2338 = vmatprep.subr.bf16.mxu0 0
        %2339 = vmatpush1.bf16.msra.mxu0 0
        %2340 = vmatprep.subr.bf16.mxu0 0
        %2341 = vmatpush1.bf16.msra.mxu0 0
        %2342 = vmatprep.subr.bf16.mxu0 0
        %2343 = vmatpush1.bf16.msra.mxu0 0
        %2344 = vmatprep.subr.bf16.mxu0 0
        %2345 = vmatpush1.bf16.msra.mxu0 0
        %2346 = vmatprep.subr.bf16.mxu0 0
        %2347 = vmatpush1.bf16.msra.mxu0 0
        %2348 = vmatprep.subr.bf16.mxu0 0
        %2349 = vmatpush1.bf16.msra.mxu0 0
        %2350 = vmatprep.subr.bf16.mxu0 0
        %2351 = vmatpush1.bf16.msra.mxu0 0
        %2352 = vmatprep.mubr.bf16.mxu0 0
        %2353 = vmatmul.mubr.bf16.gmra.mrb[0].mxu0 %v705
        %v2354 = vpop.f32.mrb[0].mxu0
        %v2355 = vadd.f32 %v2306, %v2354
        %v2356 = vpop.f32.mrb[0].mxu0
        %v2357 = vpop.f32.mrb[0].mxu0
        %v2358 = vadd.f32 %v2306, %v2357
        %v2359 = vpop.f32.mrb[0].mxu0
        %2360 = vdwg.mxu0
        %v2361 = vpack.c.bf16 %v2228, %v2227
        %v2362 = vpack.c.bf16 %v2292, %v2289
        %v2364 = vsel %vm614, %v2361, 0
        %v2367 = vsel %vm614, %v2362, 0
        %2369 = vmatprep.subr.bf16.mxu0 0
        %2370 = vmatpush1.bf16.xpose.msra.mxu0 %v2367
        %2371 = vmatprep.subr.bf16.mxu0 0
        %2372 = vmatpush1.bf16.xpose.msra.mxu0 0
        %2373 = vmatprep.subr.bf16.mxu0 0
        %2374 = vmatpush1.bf16.xpose.msra.mxu0 0
        %2375 = vmatprep.subr.bf16.mxu0 0
        %2376 = vmatpush1.bf16.xpose.msra.mxu0 0
        %2377 = vmatprep.subr.bf16.mxu0 0
        %2378 = vmatpush1.bf16.xpose.msra.mxu0 0
        %2379 = vmatprep.subr.bf16.mxu0 0
        %2380 = vmatpush1.bf16.xpose.msra.mxu0 0
        %2381 = vmatprep.subr.bf16.mxu0 0
        %2382 = vmatpush1.bf16.xpose.msra.mxu0 0
        %2383 = vmatprep.subr.bf16.mxu0 0
        %2384 = vmatpush1.bf16.xpose.msra.mxu0 0
        %2385 = vmatprep.subr.bf16.mxu0 0
        %2386 = vmatpush1.bf16.xpose.msra.mxu0 0
        %2387 = vmatprep.subr.bf16.mxu0 0
        %2388 = vmatpush1.bf16.xpose.msra.mxu0 0
        %2389 = vmatprep.subr.bf16.mxu0 0
        %2390 = vmatpush1.bf16.xpose.msra.mxu0 0
        %2391 = vmatprep.subr.bf16.mxu0 0
        %2392 = vmatpush1.bf16.xpose.msra.mxu0 0
        %2393 = vmatprep.subr.bf16.mxu0 0
        %2394 = vmatpush1.bf16.xpose.msra.mxu0 0
        %2395 = vmatprep.subr.bf16.mxu0 0
        %2396 = vmatpush1.bf16.xpose.msra.mxu0 0
        %2397 = vmatprep.subr.bf16.mxu0 0
        %2398 = vmatpush1.bf16.xpose.msra.mxu0 0
        %2399 = vmatprep.subr.bf16.mxu0 0
        %2400 = vmatpush1.bf16.xpose.msra.mxu0 0
        %2401 = vmatprep.mubr.bf16.mxu0 0
        %2402 = vmatmul.mubr.bf16.gmra.mrb[0].mxu0 %v2364
        %v2403 = vpop.f32.mrb[0].mxu0
        %v2404 = vadd.f32 0.0, %v2403
        %v2405 = vpop.f32.mrb[0].mxu0
        %v2406 = vpop.f32.mrb[0].mxu0
        %v2407 = vadd.f32 0.0, %v2406
        %v2408 = vpop.f32.mrb[0].mxu0
        %2409 = vdwg.mxu0
        %v2410 = vsel %vm663, %v2404, -1e+30
        %v2411 = vsel %vm664, %v2407, -1e+30
        %v2412 = vsel %vm665, %v2410, -inf
        %2413 = vmax.xlane.f32.xlu0 %v2412
        %v2414 = vpop.xlane.xlu0 %2413
        %v2415 = vsel %vm665, %v2411, -inf
        %2416 = vmax.xlane.f32.xlu0 %v2415
        %v2417 = vpop.xlane.xlu0 %2416
        %v2418 = vsub.f32 %v2410, %v2414
        %v2419 = vsub.f32 %v2411, %v2417
        %v2420 = vmul.f32 %v2418, 1.442695
        %v2421 = vpow.pop %v2420
        %v2422 = vmul.f32 %v2419, 1.442695
        %v2423 = vpow.pop %v2422
        %v2424 = vsel %vm665, %v2421, 0.0
        %2425 = vadd.xlane.f32.xlu0 %v2424
        %v2426 = vpop.xlane.xlu0 %2425
        %v2427 = vsel %vm665, %v2423, 0.0
        %2428 = vadd.xlane.f32.xlu0 %v2427
        %v2429 = vpop.xlane.xlu0 %2428
        %v2430 = vpack.c.bf16 %v2423, %v2421
        %v2431 = vpack.c.bf16 %v2358, %v2355
        %v2433 = vsel %vm665, %v2430, 0
        %2435 = vmatprep.subr.bf16.mxu0 0
        %2436 = vmatpush1.bf16.msra.mxu0 %v2431
        %2437 = vmatprep.subr.bf16.mxu0 0
        %2438 = vmatpush1.bf16.msra.mxu0 0
        %2439 = vmatprep.subr.bf16.mxu0 0
        %2440 = vmatpush1.bf16.msra.mxu0 0
        %2441 = vmatprep.subr.bf16.mxu0 0
        %2442 = vmatpush1.bf16.msra.mxu0 0
        %2443 = vmatprep.subr.bf16.mxu0 0
        %2444 = vmatpush1.bf16.msra.mxu0 0
        %2445 = vmatprep.subr.bf16.mxu0 0
        %2446 = vmatpush1.bf16.msra.mxu0 0
        %2447 = vmatprep.subr.bf16.mxu0 0
        %2448 = vmatpush1.bf16.msra.mxu0 0
        %2449 = vmatprep.subr.bf16.mxu0 0
        %2450 = vmatpush1.bf16.msra.mxu0 0
        %2451 = vmatprep.subr.bf16.mxu0 0
        %2452 = vmatpush1.bf16.msra.mxu0 0
        %2453 = vmatprep.subr.bf16.mxu0 0
        %2454 = vmatpush1.bf16.msra.mxu0 0
        %2455 = vmatprep.subr.bf16.mxu0 0
        %2456 = vmatpush1.bf16.msra.mxu0 0
        %2457 = vmatprep.subr.bf16.mxu0 0
        %2458 = vmatpush1.bf16.msra.mxu0 0
        %2459 = vmatprep.subr.bf16.mxu0 0
        %2460 = vmatpush1.bf16.msra.mxu0 0
        %2461 = vmatprep.subr.bf16.mxu0 0
        %2462 = vmatpush1.bf16.msra.mxu0 0
        %2463 = vmatprep.subr.bf16.mxu0 0
        %2464 = vmatpush1.bf16.msra.mxu0 0
        %2465 = vmatprep.subr.bf16.mxu0 0
        %2466 = vmatpush1.bf16.msra.mxu0 0
        %2467 = vmatprep.mubr.bf16.mxu0 0
        %2468 = vmatmul.mubr.bf16.gmra.mrb[0].mxu0 %v2433
        %v2469 = vpop.f32.mrb[0].mxu0
        %v2470 = vadd.f32 0.0, %v2469
        %v2471 = vpop.f32.mrb[0].mxu0
        %v2472 = vpop.f32.mrb[0].mxu0
        %v2473 = vadd.f32 0.0, %v2472
        %v2474 = vpop.f32.mrb[0].mxu0
        %2475 = vdwg.mxu0
        %v2476 = vrcp.pop %v2426
        %v2477 = vrcp.pop %v2429
        %v2478 = vmul.f32 %v2470, %v2476
        %v2479 = vmul.f32 %v2473, %v2477
        %v2480 = vpack.c.bf16 %v2479, %v2478
        %s2481 = scalar_lea.vmem %s8, 8
        %v2482 = vld [vmem:[%s2481] sm:$0x3]
        %v2484 = vsel %vm614, %v2480, 0
        %v2487 = vsel %vm618, %v2482, 0
        %2489 = vmatprep.subr.bf16.mxu0 0
        %2490 = vmatpush1.bf16.msra.mxu0 %v2487
        %2491 = vmatprep.subr.bf16.mxu0 0
        %2492 = vmatpush1.bf16.msra.mxu0 0
        %2493 = vmatprep.subr.bf16.mxu0 0
        %2494 = vmatpush1.bf16.msra.mxu0 0
        %2495 = vmatprep.subr.bf16.mxu0 0
        %2496 = vmatpush1.bf16.msra.mxu0 0
        %2497 = vmatprep.subr.bf16.mxu0 0
        %2498 = vmatpush1.bf16.msra.mxu0 0
        %2499 = vmatprep.subr.bf16.mxu0 0
        %2500 = vmatpush1.bf16.msra.mxu0 0
        %2501 = vmatprep.subr.bf16.mxu0 0
        %2502 = vmatpush1.bf16.msra.mxu0 0
        %2503 = vmatprep.subr.bf16.mxu0 0
        %2504 = vmatpush1.bf16.msra.mxu0 0
        %2505 = vmatprep.subr.bf16.mxu0 0
        %2506 = vmatpush1.bf16.msra.mxu0 0
        %2507 = vmatprep.subr.bf16.mxu0 0
        %2508 = vmatpush1.bf16.msra.mxu0 0
        %2509 = vmatprep.subr.bf16.mxu0 0
        %2510 = vmatpush1.bf16.msra.mxu0 0
        %2511 = vmatprep.subr.bf16.mxu0 0
        %2512 = vmatpush1.bf16.msra.mxu0 0
        %2513 = vmatprep.subr.bf16.mxu0 0
        %2514 = vmatpush1.bf16.msra.mxu0 0
        %2515 = vmatprep.subr.bf16.mxu0 0
        %2516 = vmatpush1.bf16.msra.mxu0 0
        %2517 = vmatprep.subr.bf16.mxu0 0
        %2518 = vmatpush1.bf16.msra.mxu0 0
        %2519 = vmatprep.subr.bf16.mxu0 0
        %2520 = vmatpush1.bf16.msra.mxu0 0
        %2521 = vmatprep.mubr.bf16.mxu0 0
        %2522 = vmatmul.mubr.bf16.gmra.mrb[0].mxu0 %v2484
        %v2523 = vpop.f32.mrb[0].mxu0
        %v2524 = vadd.f32 0.0, %v2523
        %v2525 = vpop.f32.mrb[0].mxu0
        %v2526 = vpop.f32.mrb[0].mxu0
        %v2527 = vadd.f32 0.0, %v2526
        %v2528 = vpop.f32.mrb[0].mxu0
        %2529 = vdwg.mxu0
        %v2530 = vadd.f32 %v2159, %v2524
        %v2531 = vadd.f32 %v2160, %v2527
        %s2532 = scalar_lea.vmem %s2, 80
        %v2533 = vld [vmem:[%s2532] sm:$0xf]
        %v2534 = vld [vmem:[%s2532 + $0x4] sm:$0xf]
        %v2535 = vld [vmem:[%s2532 + $0x8] sm:$0xf]
        %v2536 = vld [vmem:[%s2532 + $0xc] sm:$0xf]
        %s2537 = scalar_lea.vmem %s5, 5
        %v2538 = vld [vmem:[%s2537] sm:$0x1]
        %v2540 = vlaneseq
        %v2541 = vshrl.u32 %v2540, 7
        %v2542 = vsub.s32 0, %v2541
        %v2543 = vrot.slane %v2538, %v2542
        %v2549 = vunpack.c.l.b16 %v2533
        %v2550 = vunpack.c.l.b16 %v2534
        %v2551 = vunpack.c.l.b16 %v2535
        %v2552 = vunpack.c.l.b16 %v2536
        %v2553 = vpack.c.b16 %v2550, %v2549
        %v2554 = vpack.c.b16 %v2552, %v2551
        %2557 = vmatprep.subr.bf16.mxu0 0
        %2558 = vmatpush1.bf16.msra.mxu0 %v2553
        %2559 = vmatprep.subr.bf16.mxu0 0
        %2560 = vmatpush1.bf16.msra.mxu0 %v2554
        %2561 = vmatprep.subr.bf16.mxu0 0
        %2562 = vmatpush1.bf16.msra.mxu0 0
        %2563 = vmatprep.subr.bf16.mxu0 0
        %2564 = vmatpush1.bf16.msra.mxu0 0
        %2565 = vmatprep.subr.bf16.mxu0 0
        %2566 = vmatpush1.bf16.msra.mxu0 0
        %2567 = vmatprep.subr.bf16.mxu0 0
        %2568 = vmatpush1.bf16.msra.mxu0 0
        %2569 = vmatprep.subr.bf16.mxu0 0
        %2570 = vmatpush1.bf16.msra.mxu0 0
        %2571 = vmatprep.subr.bf16.mxu0 0
        %2572 = vmatpush1.bf16.msra.mxu0 0
        %2573 = vmatprep.subr.bf16.mxu0 0
        %2574 = vmatpush1.bf16.msra.mxu0 0
        %2575 = vmatprep.subr.bf16.mxu0 0
        %2576 = vmatpush1.bf16.msra.mxu0 0
        %2577 = vmatprep.subr.bf16.mxu0 0
        %2578 = vmatpush1.bf16.msra.mxu0 0
        %2579 = vmatprep.subr.bf16.mxu0 0
        %2580 = vmatpush1.bf16.msra.mxu0 0
        %2581 = vmatprep.subr.bf16.mxu0 0
        %2582 = vmatpush1.bf16.msra.mxu0 0
        %2583 = vmatprep.subr.bf16.mxu0 0
        %2584 = vmatpush1.bf16.msra.mxu0 0
        %2585 = vmatprep.subr.bf16.mxu0 0
        %2586 = vmatpush1.bf16.msra.mxu0 0
        %2587 = vmatprep.subr.bf16.mxu0 0
        %2588 = vmatpush1.bf16.msra.mxu0 0
        %2589 = vmatprep.mubr.bf16.mxu0 0
        %2590 = vmatmul.mubr.bf16.gmra.mrb[0].mxu0 %v705
        %v2591 = vpop.f32.mrb[0].mxu0
        %v2592 = vadd.f32 %v2543, %v2591
        %v2593 = vpop.f32.mrb[0].mxu0
        %v2594 = vpop.f32.mrb[0].mxu0
        %v2595 = vadd.f32 %v2543, %v2594
        %v2596 = vpop.f32.mrb[0].mxu0
        %2597 = vdwg.mxu0
        %v2598 = vmul.f32 %v2592, 0.5
        %v2599 = vmul.f32 %v2595, 0.5
        %s2600 = scalar_lea.vmem %s3, 80
        %v2601 = vld [vmem:[%s2600] sm:$0xf]
        %v2602 = vld [vmem:[%s2600 + $0x4] sm:$0xf]
        %v2603 = vld [vmem:[%s2600 + $0x8] sm:$0xf]
        %v2604 = vld [vmem:[%s2600 + $0xc] sm:$0xf]
        %s2605 = scalar_lea.vmem %s6, 5
        %v2606 = vld [vmem:[%s2605] sm:$0x1]
        %v2608 = vlaneseq
        %v2609 = vshrl.u32 %v2608, 7
        %v2610 = vsub.s32 0, %v2609
        %v2611 = vrot.slane %v2606, %v2610
        %v2617 = vunpack.c.l.b16 %v2601
        %v2618 = vunpack.c.l.b16 %v2602
        %v2619 = vunpack.c.l.b16 %v2603
        %v2620 = vunpack.c.l.b16 %v2604
        %v2621 = vpack.c.b16 %v2618, %v2617
        %v2622 = vpack.c.b16 %v2620, %v2619
        %2625 = vmatprep.subr.bf16.mxu0 0
        %2626 = vmatpush1.bf16.msra.mxu0 %v2621
        %2627 = vmatprep.subr.bf16.mxu0 0
        %2628 = vmatpush1.bf16.msra.mxu0 %v2622
        %2629 = vmatprep.subr.bf16.mxu0 0
        %2630 = vmatpush1.bf16.msra.mxu0 0
        %2631 = vmatprep.subr.bf16.mxu0 0
        %2632 = vmatpush1.bf16.msra.mxu0 0
        %2633 = vmatprep.subr.bf16.mxu0 0
        %2634 = vmatpush1.bf16.msra.mxu0 0
        %2635 = vmatprep.subr.bf16.mxu0 0
        %2636 = vmatpush1.bf16.msra.mxu0 0
        %2637 = vmatprep.subr.bf16.mxu0 0
        %2638 = vmatpush1.bf16.msra.mxu0 0
        %2639 = vmatprep.subr.bf16.mxu0 0
        %2640 = vmatpush1.bf16.msra.mxu0 0
        %2641 = vmatprep.subr.bf16.mxu0 0
        %2642 = vmatpush1.bf16.msra.mxu0 0
        %2643 = vmatprep.subr.bf16.mxu0 0
        %2644 = vmatpush1.bf16.msra.mxu0 0
        %2645 = vmatprep.subr.bf16.mxu0 0
        %2646 = vmatpush1.bf16.msra.mxu0 0
        %2647 = vmatprep.subr.bf16.mxu0 0
        %2648 = vmatpush1.bf16.msra.mxu0 0
        %2649 = vmatprep.subr.bf16.mxu0 0
        %2650 = vmatpush1.bf16.msra.mxu0 0
        %2651 = vmatprep.subr.bf16.mxu0 0
        %2652 = vmatpush1.bf16.msra.mxu0 0
        %2653 = vmatprep.subr.bf16.mxu0 0
        %2654 = vmatpush1.bf16.msra.mxu0 0
        %2655 = vmatprep.subr.bf16.mxu0 0
        %2656 = vmatpush1.bf16.msra.mxu0 0
        %2657 = vmatprep.mubr.bf16.mxu0 0
        %2658 = vmatmul.mubr.bf16.gmra.mrb[0].mxu0 %v705
        %v2659 = vpop.f32.mrb[0].mxu0
        %v2660 = vadd.f32 %v2611, %v2659
        %v2661 = vpop.f32.mrb[0].mxu0
        %v2662 = vpop.f32.mrb[0].mxu0
        %v2663 = vadd.f32 %v2611, %v2662
        %v2664 = vpop.f32.mrb[0].mxu0
        %2665 = vdwg.mxu0
        %s2666 = scalar_lea.vmem %s4, 80
        %v2667 = vld [vmem:[%s2666] sm:$0xf]
        %v2668 = vld [vmem:[%s2666 + $0x4] sm:$0xf]
        %v2669 = vld [vmem:[%s2666 + $0x8] sm:$0xf]
        %v2670 = vld [vmem:[%s2666 + $0xc] sm:$0xf]
        %s2671 = scalar_lea.vmem %s7, 5
        %v2672 = vld [vmem:[%s2671] sm:$0x1]
        %v2674 = vlaneseq
        %v2675 = vshrl.u32 %v2674, 7
        %v2676 = vsub.s32 0, %v2675
        %v2677 = vrot.slane %v2672, %v2676
        %v2683 = vunpack.c.l.b16 %v2667
        %v2684 = vunpack.c.l.b16 %v2668
        %v2685 = vunpack.c.l.b16 %v2669
        %v2686 = vunpack.c.l.b16 %v2670
        %v2687 = vpack.c.b16 %v2684, %v2683
        %v2688 = vpack.c.b16 %v2686, %v2685
        %2691 = vmatprep.subr.bf16.mxu0 0
        %2692 = vmatpush1.bf16.msra.mxu0 %v2687
        %2693 = vmatprep.subr.bf16.mxu0 0
        %2694 = vmatpush1.bf16.msra.mxu0 %v2688
        %2695 = vmatprep.subr.bf16.mxu0 0
        %2696 = vmatpush1.bf16.msra.mxu0 0
        %2697 = vmatprep.subr.bf16.mxu0 0
        %2698 = vmatpush1.bf16.msra.mxu0 0
        %2699 = vmatprep.subr.bf16.mxu0 0
        %2700 = vmatpush1.bf16.msra.mxu0 0
        %2701 = vmatprep.subr.bf16.mxu0 0
        %2702 = vmatpush1.bf16.msra.mxu0 0
        %2703 = vmatprep.subr.bf16.mxu0 0
        %2704 = vmatpush1.bf16.msra.mxu0 0
        %2705 = vmatprep.subr.bf16.mxu0 0
        %2706 = vmatpush1.bf16.msra.mxu0 0
        %2707 = vmatprep.subr.bf16.mxu0 0
        %2708 = vmatpush1.bf16.msra.mxu0 0
        %2709 = vmatprep.subr.bf16.mxu0 0
        %2710 = vmatpush1.bf16.msra.mxu0 0
        %2711 = vmatprep.subr.bf16.mxu0 0
        %2712 = vmatpush1.bf16.msra.mxu0 0
        %2713 = vmatprep.subr.bf16.mxu0 0
        %2714 = vmatpush1.bf16.msra.mxu0 0
        %2715 = vmatprep.subr.bf16.mxu0 0
        %2716 = vmatpush1.bf16.msra.mxu0 0
        %2717 = vmatprep.subr.bf16.mxu0 0
        %2718 = vmatpush1.bf16.msra.mxu0 0
        %2719 = vmatprep.subr.bf16.mxu0 0
        %2720 = vmatpush1.bf16.msra.mxu0 0
        %2721 = vmatprep.subr.bf16.mxu0 0
        %2722 = vmatpush1.bf16.msra.mxu0 0
        %2723 = vmatprep.mubr.bf16.mxu0 0
        %2724 = vmatmul.mubr.bf16.gmra.mrb[0].mxu0 %v705
        %v2725 = vpop.f32.mrb[0].mxu0
        %v2726 = vadd.f32 %v2677, %v2725
        %v2727 = vpop.f32.mrb[0].mxu0
        %v2728 = vpop.f32.mrb[0].mxu0
        %v2729 = vadd.f32 %v2677, %v2728
        %v2730 = vpop.f32.mrb[0].mxu0
        %2731 = vdwg.mxu0
        %v2732 = vpack.c.bf16 %v2599, %v2598
        %v2733 = vpack.c.bf16 %v2663, %v2660
        %v2735 = vsel %vm614, %v2732, 0
        %v2738 = vsel %vm614, %v2733, 0
        %2740 = vmatprep.subr.bf16.mxu0 0
        %2741 = vmatpush1.bf16.xpose.msra.mxu0 %v2738
        %2742 = vmatprep.subr.bf16.mxu0 0
        %2743 = vmatpush1.bf16.xpose.msra.mxu0 0
        %2744 = vmatprep.subr.bf16.mxu0 0
        %2745 = vmatpush1.bf16.xpose.msra.mxu0 0
        %2746 = vmatprep.subr.bf16.mxu0 0
        %2747 = vmatpush1.bf16.xpose.msra.mxu0 0
        %2748 = vmatprep.subr.bf16.mxu0 0
        %2749 = vmatpush1.bf16.xpose.msra.mxu0 0
        %2750 = vmatprep.subr.bf16.mxu0 0
        %2751 = vmatpush1.bf16.xpose.msra.mxu0 0
        %2752 = vmatprep.subr.bf16.mxu0 0
        %2753 = vmatpush1.bf16.xpose.msra.mxu0 0
        %2754 = vmatprep.subr.bf16.mxu0 0
        %2755 = vmatpush1.bf16.xpose.msra.mxu0 0
        %2756 = vmatprep.subr.bf16.mxu0 0
        %2757 = vmatpush1.bf16.xpose.msra.mxu0 0
        %2758 = vmatprep.subr.bf16.mxu0 0
        %2759 = vmatpush1.bf16.xpose.msra.mxu0 0
        %2760 = vmatprep.subr.bf16.mxu0 0
        %2761 = vmatpush1.bf16.xpose.msra.mxu0 0
        %2762 = vmatprep.subr.bf16.mxu0 0
        %2763 = vmatpush1.bf16.xpose.msra.mxu0 0
        %2764 = vmatprep.subr.bf16.mxu0 0
        %2765 = vmatpush1.bf16.xpose.msra.mxu0 0
        %2766 = vmatprep.subr.bf16.mxu0 0
        %2767 = vmatpush1.bf16.xpose.msra.mxu0 0
        %2768 = vmatprep.subr.bf16.mxu0 0
        %2769 = vmatpush1.bf16.xpose.msra.mxu0 0
        %2770 = vmatprep.subr.bf16.mxu0 0
        %2771 = vmatpush1.bf16.xpose.msra.mxu0 0
        %2772 = vmatprep.mubr.bf16.mxu0 0
        %2773 = vmatmul.mubr.bf16.gmra.mrb[0].mxu0 %v2735
        %v2774 = vpop.f32.mrb[0].mxu0
        %v2775 = vadd.f32 0.0, %v2774
        %v2776 = vpop.f32.mrb[0].mxu0
        %v2777 = vpop.f32.mrb[0].mxu0
        %v2778 = vadd.f32 0.0, %v2777
        %v2779 = vpop.f32.mrb[0].mxu0
        %2780 = vdwg.mxu0
        %v2781 = vsel %vm663, %v2775, -1e+30
        %v2782 = vsel %vm664, %v2778, -1e+30
        %v2783 = vsel %vm665, %v2781, -inf
        %2784 = vmax.xlane.f32.xlu0 %v2783
        %v2785 = vpop.xlane.xlu0 %2784
        %v2786 = vsel %vm665, %v2782, -inf
        %2787 = vmax.xlane.f32.xlu0 %v2786
        %v2788 = vpop.xlane.xlu0 %2787
        %v2789 = vsub.f32 %v2781, %v2785
        %v2790 = vsub.f32 %v2782, %v2788
        %v2791 = vmul.f32 %v2789, 1.442695
        %v2792 = vpow.pop %v2791
        %v2793 = vmul.f32 %v2790, 1.442695
        %v2794 = vpow.pop %v2793
        %v2795 = vsel %vm665, %v2792, 0.0
        %2796 = vadd.xlane.f32.xlu0 %v2795
        %v2797 = vpop.xlane.xlu0 %2796
        %v2798 = vsel %vm665, %v2794, 0.0
        %2799 = vadd.xlane.f32.xlu0 %v2798
        %v2800 = vpop.xlane.xlu0 %2799
        %v2801 = vpack.c.bf16 %v2794, %v2792
        %v2802 = vpack.c.bf16 %v2729, %v2726
        %v2804 = vsel %vm665, %v2801, 0
        %2806 = vmatprep.subr.bf16.mxu0 0
        %2807 = vmatpush1.bf16.msra.mxu0 %v2802
        %2808 = vmatprep.subr.bf16.mxu0 0
        %2809 = vmatpush1.bf16.msra.mxu0 0
        %2810 = vmatprep.subr.bf16.mxu0 0
        %2811 = vmatpush1.bf16.msra.mxu0 0
        %2812 = vmatprep.subr.bf16.mxu0 0
        %2813 = vmatpush1.bf16.msra.mxu0 0
        %2814 = vmatprep.subr.bf16.mxu0 0
        %2815 = vmatpush1.bf16.msra.mxu0 0
        %2816 = vmatprep.subr.bf16.mxu0 0
        %2817 = vmatpush1.bf16.msra.mxu0 0
        %2818 = vmatprep.subr.bf16.mxu0 0
        %2819 = vmatpush1.bf16.msra.mxu0 0
        %2820 = vmatprep.subr.bf16.mxu0 0
        %2821 = vmatpush1.bf16.msra.mxu0 0
        %2822 = vmatprep.subr.bf16.mxu0 0
        %2823 = vmatpush1.bf16.msra.mxu0 0
        %2824 = vmatprep.subr.bf16.mxu0 0
        %2825 = vmatpush1.bf16.msra.mxu0 0
        %2826 = vmatprep.subr.bf16.mxu0 0
        %2827 = vmatpush1.bf16.msra.mxu0 0
        %2828 = vmatprep.subr.bf16.mxu0 0
        %2829 = vmatpush1.bf16.msra.mxu0 0
        %2830 = vmatprep.subr.bf16.mxu0 0
        %2831 = vmatpush1.bf16.msra.mxu0 0
        %2832 = vmatprep.subr.bf16.mxu0 0
        %2833 = vmatpush1.bf16.msra.mxu0 0
        %2834 = vmatprep.subr.bf16.mxu0 0
        %2835 = vmatpush1.bf16.msra.mxu0 0
        %2836 = vmatprep.subr.bf16.mxu0 0
        %2837 = vmatpush1.bf16.msra.mxu0 0
        %2838 = vmatprep.mubr.bf16.mxu0 0
        %2839 = vmatmul.mubr.bf16.gmra.mrb[0].mxu0 %v2804
        %v2840 = vpop.f32.mrb[0].mxu0
        %v2841 = vadd.f32 0.0, %v2840
        %v2842 = vpop.f32.mrb[0].mxu0
        %v2843 = vpop.f32.mrb[0].mxu0
        %v2844 = vadd.f32 0.0, %v2843
        %v2845 = vpop.f32.mrb[0].mxu0
        %2846 = vdwg.mxu0
        %v2847 = vrcp.pop %v2797
        %v2848 = vrcp.pop %v2800
        %v2849 = vmul.f32 %v2841, %v2847
        %v2850 = vmul.f32 %v2844, %v2848
        %v2851 = vpack.c.bf16 %v2850, %v2849
        %s2852 = scalar_lea.vmem %s8, 10
        %v2853 = vld [vmem:[%s2852] sm:$0x3]
        %v2855 = vsel %vm614, %v2851, 0
        %v2858 = vsel %vm618, %v2853, 0
        %2860 = vmatprep.subr.bf16.mxu0 0
        %2861 = vmatpush1.bf16.msra.mxu0 %v2858
        %2862 = vmatprep.subr.bf16.mxu0 0
        %2863 = vmatpush1.bf16.msra.mxu0 0
        %2864 = vmatprep.subr.bf16.mxu0 0
        %2865 = vmatpush1.bf16.msra.mxu0 0
        %2866 = vmatprep.subr.bf16.mxu0 0
        %2867 = vmatpush1.bf16.msra.mxu0 0
        %2868 = vmatprep.subr.bf16.mxu0 0
        %2869 = vmatpush1.bf16.msra.mxu0 0
        %2870 = vmatprep.subr.bf16.mxu0 0
        %2871 = vmatpush1.bf16.msra.mxu0 0
        %2872 = vmatprep.subr.bf16.mxu0 0
        %2873 = vmatpush1.bf16.msra.mxu0 0
        %2874 = vmatprep.subr.bf16.mxu0 0
        %2875 = vmatpush1.bf16.msra.mxu0 0
        %2876 = vmatprep.subr.bf16.mxu0 0
        %2877 = vmatpush1.bf16.msra.mxu0 0
        %2878 = vmatprep.subr.bf16.mxu0 0
        %2879 = vmatpush1.bf16.msra.mxu0 0
        %2880 = vmatprep.subr.bf16.mxu0 0
        %2881 = vmatpush1.bf16.msra.mxu0 0
        %2882 = vmatprep.subr.bf16.mxu0 0
        %2883 = vmatpush1.bf16.msra.mxu0 0
        %2884 = vmatprep.subr.bf16.mxu0 0
        %2885 = vmatpush1.bf16.msra.mxu0 0
        %2886 = vmatprep.subr.bf16.mxu0 0
        %2887 = vmatpush1.bf16.msra.mxu0 0
        %2888 = vmatprep.subr.bf16.mxu0 0
        %2889 = vmatpush1.bf16.msra.mxu0 0
        %2890 = vmatprep.subr.bf16.mxu0 0
        %2891 = vmatpush1.bf16.msra.mxu0 0
        %2892 = vmatprep.mubr.bf16.mxu0 0
        %2893 = vmatmul.mubr.bf16.gmra.mrb[0].mxu0 %v2855
        %v2894 = vpop.f32.mrb[0].mxu0
        %v2895 = vadd.f32 0.0, %v2894
        %v2896 = vpop.f32.mrb[0].mxu0
        %v2897 = vpop.f32.mrb[0].mxu0
        %v2898 = vadd.f32 0.0, %v2897
        %v2899 = vpop.f32.mrb[0].mxu0
        %2900 = vdwg.mxu0
        %v2901 = vadd.f32 %v2530, %v2895
        %v2902 = vadd.f32 %v2531, %v2898
        %s2903 = scalar_lea.vmem %s2, 96
        %v2904 = vld [vmem:[%s2903] sm:$0xf]
        %v2905 = vld [vmem:[%s2903 + $0x4] sm:$0xf]
        %v2906 = vld [vmem:[%s2903 + $0x8] sm:$0xf]
        %v2907 = vld [vmem:[%s2903 + $0xc] sm:$0xf]
        %s2908 = scalar_lea.vmem %s5, 6
        %v2909 = vld [vmem:[%s2908] sm:$0x1]
        %v2911 = vlaneseq
        %v2912 = vshrl.u32 %v2911, 7
        %v2913 = vsub.s32 0, %v2912
        %v2914 = vrot.slane %v2909, %v2913
        %v2920 = vunpack.c.l.b16 %v2904
        %v2921 = vunpack.c.l.b16 %v2905
        %v2922 = vunpack.c.l.b16 %v2906
        %v2923 = vunpack.c.l.b16 %v2907
        %v2924 = vpack.c.b16 %v2921, %v2920
        %v2925 = vpack.c.b16 %v2923, %v2922
        %2928 = vmatprep.subr.bf16.mxu0 0
        %2929 = vmatpush1.bf16.msra.mxu0 %v2924
        %2930 = vmatprep.subr.bf16.mxu0 0
        %2931 = vmatpush1.bf16.msra.mxu0 %v2925
        %2932 = vmatprep.subr.bf16.mxu0 0
        %2933 = vmatpush1.bf16.msra.mxu0 0
        %2934 = vmatprep.subr.bf16.mxu0 0
        %2935 = vmatpush1.bf16.msra.mxu0 0
        %2936 = vmatprep.subr.bf16.mxu0 0
        %2937 = vmatpush1.bf16.msra.mxu0 0
        %2938 = vmatprep.subr.bf16.mxu0 0
        %2939 = vmatpush1.bf16.msra.mxu0 0
        %2940 = vmatprep.subr.bf16.mxu0 0
        %2941 = vmatpush1.bf16.msra.mxu0 0
        %2942 = vmatprep.subr.bf16.mxu0 0
        %2943 = vmatpush1.bf16.msra.mxu0 0
        %2944 = vmatprep.subr.bf16.mxu0 0
        %2945 = vmatpush1.bf16.msra.mxu0 0
        %2946 = vmatprep.subr.bf16.mxu0 0
        %2947 = vmatpush1.bf16.msra.mxu0 0
        %2948 = vmatprep.subr.bf16.mxu0 0
        %2949 = vmatpush1.bf16.msra.mxu0 0
        %2950 = vmatprep.subr.bf16.mxu0 0
        %2951 = vmatpush1.bf16.msra.mxu0 0
        %2952 = vmatprep.subr.bf16.mxu0 0
        %2953 = vmatpush1.bf16.msra.mxu0 0
        %2954 = vmatprep.subr.bf16.mxu0 0
        %2955 = vmatpush1.bf16.msra.mxu0 0
        %2956 = vmatprep.subr.bf16.mxu0 0
        %2957 = vmatpush1.bf16.msra.mxu0 0
        %2958 = vmatprep.subr.bf16.mxu0 0
        %2959 = vmatpush1.bf16.msra.mxu0 0
        %2960 = vmatprep.mubr.bf16.mxu0 0
        %2961 = vmatmul.mubr.bf16.gmra.mrb[0].mxu0 %v705
        %v2962 = vpop.f32.mrb[0].mxu0
        %v2963 = vadd.f32 %v2914, %v2962
        %v2964 = vpop.f32.mrb[0].mxu0
        %v2965 = vpop.f32.mrb[0].mxu0
        %v2966 = vadd.f32 %v2914, %v2965
        %v2967 = vpop.f32.mrb[0].mxu0
        %2968 = vdwg.mxu0
        %v2969 = vmul.f32 %v2963, 0.5
        %v2970 = vmul.f32 %v2966, 0.5
        %s2971 = scalar_lea.vmem %s3, 96
        %v2972 = vld [vmem:[%s2971] sm:$0xf]
        %v2973 = vld [vmem:[%s2971 + $0x4] sm:$0xf]
        %v2974 = vld [vmem:[%s2971 + $0x8] sm:$0xf]
        %v2975 = vld [vmem:[%s2971 + $0xc] sm:$0xf]
        %s2976 = scalar_lea.vmem %s6, 6
        %v2977 = vld [vmem:[%s2976] sm:$0x1]
        %v2979 = vlaneseq
        %v2980 = vshrl.u32 %v2979, 7
        %v2981 = vsub.s32 0, %v2980
        %v2982 = vrot.slane %v2977, %v2981
        %v2988 = vunpack.c.l.b16 %v2972
        %v2989 = vunpack.c.l.b16 %v2973
        %v2990 = vunpack.c.l.b16 %v2974
        %v2991 = vunpack.c.l.b16 %v2975
        %v2992 = vpack.c.b16 %v2989, %v2988
        %v2993 = vpack.c.b16 %v2991, %v2990
        %2996 = vmatprep.subr.bf16.mxu0 0
        %2997 = vmatpush1.bf16.msra.mxu0 %v2992
        %2998 = vmatprep.subr.bf16.mxu0 0
        %2999 = vmatpush1.bf16.msra.mxu0 %v2993
        %3000 = vmatprep.subr.bf16.mxu0 0
        %3001 = vmatpush1.bf16.msra.mxu0 0
        %3002 = vmatprep.subr.bf16.mxu0 0
        %3003 = vmatpush1.bf16.msra.mxu0 0
        %3004 = vmatprep.subr.bf16.mxu0 0
        %3005 = vmatpush1.bf16.msra.mxu0 0
        %3006 = vmatprep.subr.bf16.mxu0 0
        %3007 = vmatpush1.bf16.msra.mxu0 0
        %3008 = vmatprep.subr.bf16.mxu0 0
        %3009 = vmatpush1.bf16.msra.mxu0 0
        %3010 = vmatprep.subr.bf16.mxu0 0
        %3011 = vmatpush1.bf16.msra.mxu0 0
        %3012 = vmatprep.subr.bf16.mxu0 0
        %3013 = vmatpush1.bf16.msra.mxu0 0
        %3014 = vmatprep.subr.bf16.mxu0 0
        %3015 = vmatpush1.bf16.msra.mxu0 0
        %3016 = vmatprep.subr.bf16.mxu0 0
        %3017 = vmatpush1.bf16.msra.mxu0 0
        %3018 = vmatprep.subr.bf16.mxu0 0
        %3019 = vmatpush1.bf16.msra.mxu0 0
        %3020 = vmatprep.subr.bf16.mxu0 0
        %3021 = vmatpush1.bf16.msra.mxu0 0
        %3022 = vmatprep.subr.bf16.mxu0 0
        %3023 = vmatpush1.bf16.msra.mxu0 0
        %3024 = vmatprep.subr.bf16.mxu0 0
        %3025 = vmatpush1.bf16.msra.mxu0 0
        %3026 = vmatprep.subr.bf16.mxu0 0
        %3027 = vmatpush1.bf16.msra.mxu0 0
        %3028 = vmatprep.mubr.bf16.mxu0 0
        %3029 = vmatmul.mubr.bf16.gmra.mrb[0].mxu0 %v705
        %v3030 = vpop.f32.mrb[0].mxu0
        %v3031 = vadd.f32 %v2982, %v3030
        %v3032 = vpop.f32.mrb[0].mxu0
        %v3033 = vpop.f32.mrb[0].mxu0
        %v3034 = vadd.f32 %v2982, %v3033
        %v3035 = vpop.f32.mrb[0].mxu0
        %3036 = vdwg.mxu0
        %s3037 = scalar_lea.vmem %s4, 96
        %v3038 = vld [vmem:[%s3037] sm:$0xf]
        %v3039 = vld [vmem:[%s3037 + $0x4] sm:$0xf]
        %v3040 = vld [vmem:[%s3037 + $0x8] sm:$0xf]
        %v3041 = vld [vmem:[%s3037 + $0xc] sm:$0xf]
        %s3042 = scalar_lea.vmem %s7, 6
        %v3043 = vld [vmem:[%s3042] sm:$0x1]
        %v3045 = vlaneseq
        %v3046 = vshrl.u32 %v3045, 7
        %v3047 = vsub.s32 0, %v3046
        %v3048 = vrot.slane %v3043, %v3047
        %v3054 = vunpack.c.l.b16 %v3038
        %v3055 = vunpack.c.l.b16 %v3039
        %v3056 = vunpack.c.l.b16 %v3040
        %v3057 = vunpack.c.l.b16 %v3041
        %v3058 = vpack.c.b16 %v3055, %v3054
        %v3059 = vpack.c.b16 %v3057, %v3056
        %3062 = vmatprep.subr.bf16.mxu0 0
        %3063 = vmatpush1.bf16.msra.mxu0 %v3058
        %3064 = vmatprep.subr.bf16.mxu0 0
        %3065 = vmatpush1.bf16.msra.mxu0 %v3059
        %3066 = vmatprep.subr.bf16.mxu0 0
        %3067 = vmatpush1.bf16.msra.mxu0 0
        %3068 = vmatprep.subr.bf16.mxu0 0
        %3069 = vmatpush1.bf16.msra.mxu0 0
        %3070 = vmatprep.subr.bf16.mxu0 0
        %3071 = vmatpush1.bf16.msra.mxu0 0
        %3072 = vmatprep.subr.bf16.mxu0 0
        %3073 = vmatpush1.bf16.msra.mxu0 0
        %3074 = vmatprep.subr.bf16.mxu0 0
        %3075 = vmatpush1.bf16.msra.mxu0 0
        %3076 = vmatprep.subr.bf16.mxu0 0
        %3077 = vmatpush1.bf16.msra.mxu0 0
        %3078 = vmatprep.subr.bf16.mxu0 0
        %3079 = vmatpush1.bf16.msra.mxu0 0
        %3080 = vmatprep.subr.bf16.mxu0 0
        %3081 = vmatpush1.bf16.msra.mxu0 0
        %3082 = vmatprep.subr.bf16.mxu0 0
        %3083 = vmatpush1.bf16.msra.mxu0 0
        %3084 = vmatprep.subr.bf16.mxu0 0
        %3085 = vmatpush1.bf16.msra.mxu0 0
        %3086 = vmatprep.subr.bf16.mxu0 0
        %3087 = vmatpush1.bf16.msra.mxu0 0
        %3088 = vmatprep.subr.bf16.mxu0 0
        %3089 = vmatpush1.bf16.msra.mxu0 0
        %3090 = vmatprep.subr.bf16.mxu0 0
        %3091 = vmatpush1.bf16.msra.mxu0 0
        %3092 = vmatprep.subr.bf16.mxu0 0
        %3093 = vmatpush1.bf16.msra.mxu0 0
        %3094 = vmatprep.mubr.bf16.mxu0 0
        %3095 = vmatmul.mubr.bf16.gmra.mrb[0].mxu0 %v705
        %v3096 = vpop.f32.mrb[0].mxu0
        %v3097 = vadd.f32 %v3048, %v3096
        %v3098 = vpop.f32.mrb[0].mxu0
        %v3099 = vpop.f32.mrb[0].mxu0
        %v3100 = vadd.f32 %v3048, %v3099
        %v3101 = vpop.f32.mrb[0].mxu0
        %3102 = vdwg.mxu0
        %v3103 = vpack.c.bf16 %v2970, %v2969
        %v3104 = vpack.c.bf16 %v3034, %v3031
        %v3106 = vsel %vm614, %v3103, 0
        %v3109 = vsel %vm614, %v3104, 0
        %3111 = vmatprep.subr.bf16.mxu0 0
        %3112 = vmatpush1.bf16.xpose.msra.mxu0 %v3109
        %3113 = vmatprep.subr.bf16.mxu0 0
        %3114 = vmatpush1.bf16.xpose.msra.mxu0 0
        %3115 = vmatprep.subr.bf16.mxu0 0
        %3116 = vmatpush1.bf16.xpose.msra.mxu0 0
        %3117 = vmatprep.subr.bf16.mxu0 0
        %3118 = vmatpush1.bf16.xpose.msra.mxu0 0
        %3119 = vmatprep.subr.bf16.mxu0 0
        %3120 = vmatpush1.bf16.xpose.msra.mxu0 0
        %3121 = vmatprep.subr.bf16.mxu0 0
        %3122 = vmatpush1.bf16.xpose.msra.mxu0 0
        %3123 = vmatprep.subr.bf16.mxu0 0
        %3124 = vmatpush1.bf16.xpose.msra.mxu0 0
        %3125 = vmatprep.subr.bf16.mxu0 0
        %3126 = vmatpush1.bf16.xpose.msra.mxu0 0
        %3127 = vmatprep.subr.bf16.mxu0 0
        %3128 = vmatpush1.bf16.xpose.msra.mxu0 0
        %3129 = vmatprep.subr.bf16.mxu0 0
        %3130 = vmatpush1.bf16.xpose.msra.mxu0 0
        %3131 = vmatprep.subr.bf16.mxu0 0
        %3132 = vmatpush1.bf16.xpose.msra.mxu0 0
        %3133 = vmatprep.subr.bf16.mxu0 0
        %3134 = vmatpush1.bf16.xpose.msra.mxu0 0
        %3135 = vmatprep.subr.bf16.mxu0 0
        %3136 = vmatpush1.bf16.xpose.msra.mxu0 0
        %3137 = vmatprep.subr.bf16.mxu0 0
        %3138 = vmatpush1.bf16.xpose.msra.mxu0 0
        %3139 = vmatprep.subr.bf16.mxu0 0
        %3140 = vmatpush1.bf16.xpose.msra.mxu0 0
        %3141 = vmatprep.subr.bf16.mxu0 0
        %3142 = vmatpush1.bf16.xpose.msra.mxu0 0
        %3143 = vmatprep.mubr.bf16.mxu0 0
        %3144 = vmatmul.mubr.bf16.gmra.mrb[0].mxu0 %v3106
        %v3145 = vpop.f32.mrb[0].mxu0
        %v3146 = vadd.f32 0.0, %v3145
        %v3147 = vpop.f32.mrb[0].mxu0
        %v3148 = vpop.f32.mrb[0].mxu0
        %v3149 = vadd.f32 0.0, %v3148
        %v3150 = vpop.f32.mrb[0].mxu0
        %3151 = vdwg.mxu0
        %v3152 = vsel %vm663, %v3146, -1e+30
        %v3153 = vsel %vm664, %v3149, -1e+30
        %v3154 = vsel %vm665, %v3152, -inf
        %3155 = vmax.xlane.f32.xlu0 %v3154
        %v3156 = vpop.xlane.xlu0 %3155
        %v3157 = vsel %vm665, %v3153, -inf
        %3158 = vmax.xlane.f32.xlu0 %v3157
        %v3159 = vpop.xlane.xlu0 %3158
        %v3160 = vsub.f32 %v3152, %v3156
        %v3161 = vsub.f32 %v3153, %v3159
        %v3162 = vmul.f32 %v3160, 1.442695
        %v3163 = vpow.pop %v3162
        %v3164 = vmul.f32 %v3161, 1.442695
        %v3165 = vpow.pop %v3164
        %v3166 = vsel %vm665, %v3163, 0.0
        %3167 = vadd.xlane.f32.xlu0 %v3166
        %v3168 = vpop.xlane.xlu0 %3167
        %v3169 = vsel %vm665, %v3165, 0.0
        %3170 = vadd.xlane.f32.xlu0 %v3169
        %v3171 = vpop.xlane.xlu0 %3170
        %v3172 = vpack.c.bf16 %v3165, %v3163
        %v3173 = vpack.c.bf16 %v3100, %v3097
        %v3175 = vsel %vm665, %v3172, 0
        %3177 = vmatprep.subr.bf16.mxu0 0
        %3178 = vmatpush1.bf16.msra.mxu0 %v3173
        %3179 = vmatprep.subr.bf16.mxu0 0
        %3180 = vmatpush1.bf16.msra.mxu0 0
        %3181 = vmatprep.subr.bf16.mxu0 0
        %3182 = vmatpush1.bf16.msra.mxu0 0
        %3183 = vmatprep.subr.bf16.mxu0 0
        %3184 = vmatpush1.bf16.msra.mxu0 0
        %3185 = vmatprep.subr.bf16.mxu0 0
        %3186 = vmatpush1.bf16.msra.mxu0 0
        %3187 = vmatprep.subr.bf16.mxu0 0
        %3188 = vmatpush1.bf16.msra.mxu0 0
        %3189 = vmatprep.subr.bf16.mxu0 0
        %3190 = vmatpush1.bf16.msra.mxu0 0
        %3191 = vmatprep.subr.bf16.mxu0 0
        %3192 = vmatpush1.bf16.msra.mxu0 0
        %3193 = vmatprep.subr.bf16.mxu0 0
        %3194 = vmatpush1.bf16.msra.mxu0 0
        %3195 = vmatprep.subr.bf16.mxu0 0
        %3196 = vmatpush1.bf16.msra.mxu0 0
        %3197 = vmatprep.subr.bf16.mxu0 0
        %3198 = vmatpush1.bf16.msra.mxu0 0
        %3199 = vmatprep.subr.bf16.mxu0 0
        %3200 = vmatpush1.bf16.msra.mxu0 0
        %3201 = vmatprep.subr.bf16.mxu0 0
        %3202 = vmatpush1.bf16.msra.mxu0 0
        %3203 = vmatprep.subr.bf16.mxu0 0
        %3204 = vmatpush1.bf16.msra.mxu0 0
        %3205 = vmatprep.subr.bf16.mxu0 0
        %3206 = vmatpush1.bf16.msra.mxu0 0
        %3207 = vmatprep.subr.bf16.mxu0 0
        %3208 = vmatpush1.bf16.msra.mxu0 0
        %3209 = vmatprep.mubr.bf16.mxu0 0
        %3210 = vmatmul.mubr.bf16.gmra.mrb[0].mxu0 %v3175
        %v3211 = vpop.f32.mrb[0].mxu0
        %v3212 = vadd.f32 0.0, %v3211
        %v3213 = vpop.f32.mrb[0].mxu0
        %v3214 = vpop.f32.mrb[0].mxu0
        %v3215 = vadd.f32 0.0, %v3214
        %v3216 = vpop.f32.mrb[0].mxu0
        %3217 = vdwg.mxu0
        %v3218 = vrcp.pop %v3168
        %v3219 = vrcp.pop %v3171
        %v3220 = vmul.f32 %v3212, %v3218
        %v3221 = vmul.f32 %v3215, %v3219
        %v3222 = vpack.c.bf16 %v3221, %v3220
        %s3223 = scalar_lea.vmem %s8, 12
        %v3224 = vld [vmem:[%s3223] sm:$0x3]
        %v3226 = vsel %vm614, %v3222, 0
        %v3229 = vsel %vm618, %v3224, 0
        %3231 = vmatprep.subr.bf16.mxu0 0
        %3232 = vmatpush1.bf16.msra.mxu0 %v3229
        %3233 = vmatprep.subr.bf16.mxu0 0
        %3234 = vmatpush1.bf16.msra.mxu0 0
        %3235 = vmatprep.subr.bf16.mxu0 0
        %3236 = vmatpush1.bf16.msra.mxu0 0
        %3237 = vmatprep.subr.bf16.mxu0 0
        %3238 = vmatpush1.bf16.msra.mxu0 0
        %3239 = vmatprep.subr.bf16.mxu0 0
        %3240 = vmatpush1.bf16.msra.mxu0 0
        %3241 = vmatprep.subr.bf16.mxu0 0
        %3242 = vmatpush1.bf16.msra.mxu0 0
        %3243 = vmatprep.subr.bf16.mxu0 0
        %3244 = vmatpush1.bf16.msra.mxu0 0
        %3245 = vmatprep.subr.bf16.mxu0 0
        %3246 = vmatpush1.bf16.msra.mxu0 0
        %3247 = vmatprep.subr.bf16.mxu0 0
        %3248 = vmatpush1.bf16.msra.mxu0 0
        %3249 = vmatprep.subr.bf16.mxu0 0
        %3250 = vmatpush1.bf16.msra.mxu0 0
        %3251 = vmatprep.subr.bf16.mxu0 0
        %3252 = vmatpush1.bf16.msra.mxu0 0
        %3253 = vmatprep.subr.bf16.mxu0 0
        %3254 = vmatpush1.bf16.msra.mxu0 0
        %3255 = vmatprep.subr.bf16.mxu0 0
        %3256 = vmatpush1.bf16.msra.mxu0 0
        %3257 = vmatprep.subr.bf16.mxu0 0
        %3258 = vmatpush1.bf16.msra.mxu0 0
        %3259 = vmatprep.subr.bf16.mxu0 0
        %3260 = vmatpush1.bf16.msra.mxu0 0
        %3261 = vmatprep.subr.bf16.mxu0 0
        %3262 = vmatpush1.bf16.msra.mxu0 0
        %3263 = vmatprep.mubr.bf16.mxu0 0
        %3264 = vmatmul.mubr.bf16.gmra.mrb[0].mxu0 %v3226
        %v3265 = vpop.f32.mrb[0].mxu0
        %v3266 = vadd.f32 0.0, %v3265
        %v3267 = vpop.f32.mrb[0].mxu0
        %v3268 = vpop.f32.mrb[0].mxu0
        %v3269 = vadd.f32 0.0, %v3268
        %v3270 = vpop.f32.mrb[0].mxu0
        %3271 = vdwg.mxu0
        %v3272 = vadd.f32 %v2901, %v3266
        %v3273 = vadd.f32 %v2902, %v3269
        %s3274 = scalar_lea.vmem %s2, 112
        %v3275 = vld [vmem:[%s3274] sm:$0xf]
        %v3276 = vld [vmem:[%s3274 + $0x4] sm:$0xf]
        %v3277 = vld [vmem:[%s3274 + $0x8] sm:$0xf]
        %v3278 = vld [vmem:[%s3274 + $0xc] sm:$0xf]
        %s3279 = scalar_lea.vmem %s5, 7
        %v3280 = vld [vmem:[%s3279] sm:$0x1]
        %v3282 = vlaneseq
        %v3283 = vshrl.u32 %v3282, 7
        %v3284 = vsub.s32 0, %v3283
        %v3285 = vrot.slane %v3280, %v3284
        %v3291 = vunpack.c.l.b16 %v3275
        %v3292 = vunpack.c.l.b16 %v3276
        %v3293 = vunpack.c.l.b16 %v3277
        %v3294 = vunpack.c.l.b16 %v3278
        %v3295 = vpack.c.b16 %v3292, %v3291
        %v3296 = vpack.c.b16 %v3294, %v3293
        %3299 = vmatprep.subr.bf16.mxu0 0
        %3300 = vmatpush1.bf16.msra.mxu0 %v3295
        %3301 = vmatprep.subr.bf16.mxu0 0
        %3302 = vmatpush1.bf16.msra.mxu0 %v3296
        %3303 = vmatprep.subr.bf16.mxu0 0
        %3304 = vmatpush1.bf16.msra.mxu0 0
        %3305 = vmatprep.subr.bf16.mxu0 0
        %3306 = vmatpush1.bf16.msra.mxu0 0
        %3307 = vmatprep.subr.bf16.mxu0 0
        %3308 = vmatpush1.bf16.msra.mxu0 0
        %3309 = vmatprep.subr.bf16.mxu0 0
        %3310 = vmatpush1.bf16.msra.mxu0 0
        %3311 = vmatprep.subr.bf16.mxu0 0
        %3312 = vmatpush1.bf16.msra.mxu0 0
        %3313 = vmatprep.subr.bf16.mxu0 0
        %3314 = vmatpush1.bf16.msra.mxu0 0
        %3315 = vmatprep.subr.bf16.mxu0 0
        %3316 = vmatpush1.bf16.msra.mxu0 0
        %3317 = vmatprep.subr.bf16.mxu0 0
        %3318 = vmatpush1.bf16.msra.mxu0 0
        %3319 = vmatprep.subr.bf16.mxu0 0
        %3320 = vmatpush1.bf16.msra.mxu0 0
        %3321 = vmatprep.subr.bf16.mxu0 0
        %3322 = vmatpush1.bf16.msra.mxu0 0
        %3323 = vmatprep.subr.bf16.mxu0 0
        %3324 = vmatpush1.bf16.msra.mxu0 0
        %3325 = vmatprep.subr.bf16.mxu0 0
        %3326 = vmatpush1.bf16.msra.mxu0 0
        %3327 = vmatprep.subr.bf16.mxu0 0
        %3328 = vmatpush1.bf16.msra.mxu0 0
        %3329 = vmatprep.subr.bf16.mxu0 0
        %3330 = vmatpush1.bf16.msra.mxu0 0
        %3331 = vmatprep.mubr.bf16.mxu0 0
        %3332 = vmatmul.mubr.bf16.gmra.mrb[0].mxu0 %v705
        %v3333 = vpop.f32.mrb[0].mxu0
        %v3334 = vadd.f32 %v3285, %v3333
        %v3335 = vpop.f32.mrb[0].mxu0
        %v3336 = vpop.f32.mrb[0].mxu0
        %v3337 = vadd.f32 %v3285, %v3336
        %v3338 = vpop.f32.mrb[0].mxu0
        %3339 = vdwg.mxu0
        %v3340 = vmul.f32 %v3334, 0.5
        %v3341 = vmul.f32 %v3337, 0.5
        %s3342 = scalar_lea.vmem %s3, 112
        %v3343 = vld [vmem:[%s3342] sm:$0xf]
        %v3344 = vld [vmem:[%s3342 + $0x4] sm:$0xf]
        %v3345 = vld [vmem:[%s3342 + $0x8] sm:$0xf]
        %v3346 = vld [vmem:[%s3342 + $0xc] sm:$0xf]
        %s3347 = scalar_lea.vmem %s6, 7
        %v3348 = vld [vmem:[%s3347] sm:$0x1]
        %v3350 = vlaneseq
        %v3351 = vshrl.u32 %v3350, 7
        %v3352 = vsub.s32 0, %v3351
        %v3353 = vrot.slane %v3348, %v3352
        %v3359 = vunpack.c.l.b16 %v3343
        %v3360 = vunpack.c.l.b16 %v3344
        %v3361 = vunpack.c.l.b16 %v3345
        %v3362 = vunpack.c.l.b16 %v3346
        %v3363 = vpack.c.b16 %v3360, %v3359
        %v3364 = vpack.c.b16 %v3362, %v3361
        %3367 = vmatprep.subr.bf16.mxu0 0
        %3368 = vmatpush1.bf16.msra.mxu0 %v3363
        %3369 = vmatprep.subr.bf16.mxu0 0
        %3370 = vmatpush1.bf16.msra.mxu0 %v3364
        %3371 = vmatprep.subr.bf16.mxu0 0
        %3372 = vmatpush1.bf16.msra.mxu0 0
        %3373 = vmatprep.subr.bf16.mxu0 0
        %3374 = vmatpush1.bf16.msra.mxu0 0
        %3375 = vmatprep.subr.bf16.mxu0 0
        %3376 = vmatpush1.bf16.msra.mxu0 0
        %3377 = vmatprep.subr.bf16.mxu0 0
        %3378 = vmatpush1.bf16.msra.mxu0 0
        %3379 = vmatprep.subr.bf16.mxu0 0
        %3380 = vmatpush1.bf16.msra.mxu0 0
        %3381 = vmatprep.subr.bf16.mxu0 0
        %3382 = vmatpush1.bf16.msra.mxu0 0
        %3383 = vmatprep.subr.bf16.mxu0 0
        %3384 = vmatpush1.bf16.msra.mxu0 0
        %3385 = vmatprep.subr.bf16.mxu0 0
        %3386 = vmatpush1.bf16.msra.mxu0 0
        %3387 = vmatprep.subr.bf16.mxu0 0
        %3388 = vmatpush1.bf16.msra.mxu0 0
        %3389 = vmatprep.subr.bf16.mxu0 0
        %3390 = vmatpush1.bf16.msra.mxu0 0
        %3391 = vmatprep.subr.bf16.mxu0 0
        %3392 = vmatpush1.bf16.msra.mxu0 0
        %3393 = vmatprep.subr.bf16.mxu0 0
        %3394 = vmatpush1.bf16.msra.mxu0 0
        %3395 = vmatprep.subr.bf16.mxu0 0
        %3396 = vmatpush1.bf16.msra.mxu0 0
        %3397 = vmatprep.subr.bf16.mxu0 0
        %3398 = vmatpush1.bf16.msra.mxu0 0
        %3399 = vmatprep.mubr.bf16.mxu0 0
        %3400 = vmatmul.mubr.bf16.gmra.mrb[0].mxu0 %v705
        %v3401 = vpop.f32.mrb[0].mxu0
        %v3402 = vadd.f32 %v3353, %v3401
        %v3403 = vpop.f32.mrb[0].mxu0
        %v3404 = vpop.f32.mrb[0].mxu0
        %v3405 = vadd.f32 %v3353, %v3404
        %v3406 = vpop.f32.mrb[0].mxu0
        %3407 = vdwg.mxu0
        %s3408 = scalar_lea.vmem %s4, 112
        %v3409 = vld [vmem:[%s3408] sm:$0xf]
        %v3410 = vld [vmem:[%s3408 + $0x4] sm:$0xf]
        %v3411 = vld [vmem:[%s3408 + $0x8] sm:$0xf]
        %v3412 = vld [vmem:[%s3408 + $0xc] sm:$0xf]
        %s3413 = scalar_lea.vmem %s7, 7
        %v3414 = vld [vmem:[%s3413] sm:$0x1]
        %v3416 = vlaneseq
        %v3417 = vshrl.u32 %v3416, 7
        %v3418 = vsub.s32 0, %v3417
        %v3419 = vrot.slane %v3414, %v3418
        %v3425 = vunpack.c.l.b16 %v3409
        %v3426 = vunpack.c.l.b16 %v3410
        %v3427 = vunpack.c.l.b16 %v3411
        %v3428 = vunpack.c.l.b16 %v3412
        %v3429 = vpack.c.b16 %v3426, %v3425
        %v3430 = vpack.c.b16 %v3428, %v3427
        %3433 = vmatprep.subr.bf16.mxu0 0
        %3434 = vmatpush1.bf16.msra.mxu0 %v3429
        %3435 = vmatprep.subr.bf16.mxu0 0
        %3436 = vmatpush1.bf16.msra.mxu0 %v3430
        %3437 = vmatprep.subr.bf16.mxu0 0
        %3438 = vmatpush1.bf16.msra.mxu0 0
        %3439 = vmatprep.subr.bf16.mxu0 0
        %3440 = vmatpush1.bf16.msra.mxu0 0
        %3441 = vmatprep.subr.bf16.mxu0 0
        %3442 = vmatpush1.bf16.msra.mxu0 0
        %3443 = vmatprep.subr.bf16.mxu0 0
        %3444 = vmatpush1.bf16.msra.mxu0 0
        %3445 = vmatprep.subr.bf16.mxu0 0
        %3446 = vmatpush1.bf16.msra.mxu0 0
        %3447 = vmatprep.subr.bf16.mxu0 0
        %3448 = vmatpush1.bf16.msra.mxu0 0
        %3449 = vmatprep.subr.bf16.mxu0 0
        %3450 = vmatpush1.bf16.msra.mxu0 0
        %3451 = vmatprep.subr.bf16.mxu0 0
        %3452 = vmatpush1.bf16.msra.mxu0 0
        %3453 = vmatprep.subr.bf16.mxu0 0
        %3454 = vmatpush1.bf16.msra.mxu0 0
        %3455 = vmatprep.subr.bf16.mxu0 0
        %3456 = vmatpush1.bf16.msra.mxu0 0
        %3457 = vmatprep.subr.bf16.mxu0 0
        %3458 = vmatpush1.bf16.msra.mxu0 0
        %3459 = vmatprep.subr.bf16.mxu0 0
        %3460 = vmatpush1.bf16.msra.mxu0 0
        %3461 = vmatprep.subr.bf16.mxu0 0
        %3462 = vmatpush1.bf16.msra.mxu0 0
        %3463 = vmatprep.subr.bf16.mxu0 0
        %3464 = vmatpush1.bf16.msra.mxu0 0
        %3465 = vmatprep.mubr.bf16.mxu0 0
        %3466 = vmatmul.mubr.bf16.gmra.mrb[0].mxu0 %v705
        %v3467 = vpop.f32.mrb[0].mxu0
        %v3468 = vadd.f32 %v3419, %v3467
        %v3469 = vpop.f32.mrb[0].mxu0
        %v3470 = vpop.f32.mrb[0].mxu0
        %v3471 = vadd.f32 %v3419, %v3470
        %v3472 = vpop.f32.mrb[0].mxu0
        %3473 = vdwg.mxu0
        %v3474 = vpack.c.bf16 %v3341, %v3340
        %v3475 = vpack.c.bf16 %v3405, %v3402
        %v3477 = vsel %vm614, %v3474, 0
        %v3480 = vsel %vm614, %v3475, 0
        %3482 = vmatprep.subr.bf16.mxu0 0
        %3483 = vmatpush1.bf16.xpose.msra.mxu0 %v3480
        %3484 = vmatprep.subr.bf16.mxu0 0
        %3485 = vmatpush1.bf16.xpose.msra.mxu0 0
        %3486 = vmatprep.subr.bf16.mxu0 0
        %3487 = vmatpush1.bf16.xpose.msra.mxu0 0
        %3488 = vmatprep.subr.bf16.mxu0 0
        %3489 = vmatpush1.bf16.xpose.msra.mxu0 0
        %3490 = vmatprep.subr.bf16.mxu0 0
        %3491 = vmatpush1.bf16.xpose.msra.mxu0 0
        %3492 = vmatprep.subr.bf16.mxu0 0
        %3493 = vmatpush1.bf16.xpose.msra.mxu0 0
        %3494 = vmatprep.subr.bf16.mxu0 0
        %3495 = vmatpush1.bf16.xpose.msra.mxu0 0
        %3496 = vmatprep.subr.bf16.mxu0 0
        %3497 = vmatpush1.bf16.xpose.msra.mxu0 0
        %3498 = vmatprep.subr.bf16.mxu0 0
        %3499 = vmatpush1.bf16.xpose.msra.mxu0 0
        %3500 = vmatprep.subr.bf16.mxu0 0
        %3501 = vmatpush1.bf16.xpose.msra.mxu0 0
        %3502 = vmatprep.subr.bf16.mxu0 0
        %3503 = vmatpush1.bf16.xpose.msra.mxu0 0
        %3504 = vmatprep.subr.bf16.mxu0 0
        %3505 = vmatpush1.bf16.xpose.msra.mxu0 0
        %3506 = vmatprep.subr.bf16.mxu0 0
        %3507 = vmatpush1.bf16.xpose.msra.mxu0 0
        %3508 = vmatprep.subr.bf16.mxu0 0
        %3509 = vmatpush1.bf16.xpose.msra.mxu0 0
        %3510 = vmatprep.subr.bf16.mxu0 0
        %3511 = vmatpush1.bf16.xpose.msra.mxu0 0
        %3512 = vmatprep.subr.bf16.mxu0 0
        %3513 = vmatpush1.bf16.xpose.msra.mxu0 0
        %3514 = vmatprep.mubr.bf16.mxu0 0
        %3515 = vmatmul.mubr.bf16.gmra.mrb[0].mxu0 %v3477
        %v3516 = vpop.f32.mrb[0].mxu0
        %v3517 = vadd.f32 0.0, %v3516
        %v3518 = vpop.f32.mrb[0].mxu0
        %v3519 = vpop.f32.mrb[0].mxu0
        %v3520 = vadd.f32 0.0, %v3519
        %v3521 = vpop.f32.mrb[0].mxu0
        %3522 = vdwg.mxu0
        %v3523 = vsel %vm663, %v3517, -1e+30
        %v3524 = vsel %vm664, %v3520, -1e+30
        %v3525 = vsel %vm665, %v3523, -inf
        %3526 = vmax.xlane.f32.xlu0 %v3525
        %v3527 = vpop.xlane.xlu0 %3526
        %v3528 = vsel %vm665, %v3524, -inf
        %3529 = vmax.xlane.f32.xlu0 %v3528
        %v3530 = vpop.xlane.xlu0 %3529
        %v3531 = vsub.f32 %v3523, %v3527
        %v3532 = vsub.f32 %v3524, %v3530
        %v3533 = vmul.f32 %v3531, 1.442695
        %v3534 = vpow.pop %v3533
        %v3535 = vmul.f32 %v3532, 1.442695
        %v3536 = vpow.pop %v3535
        %v3537 = vsel %vm665, %v3534, 0.0
        %3538 = vadd.xlane.f32.xlu0 %v3537
        %v3539 = vpop.xlane.xlu0 %3538
        %v3540 = vsel %vm665, %v3536, 0.0
        %3541 = vadd.xlane.f32.xlu0 %v3540
        %v3542 = vpop.xlane.xlu0 %3541
        %v3543 = vpack.c.bf16 %v3536, %v3534
        %v3544 = vpack.c.bf16 %v3471, %v3468
        %v3546 = vsel %vm665, %v3543, 0
        %3548 = vmatprep.subr.bf16.mxu0 0
        %3549 = vmatpush1.bf16.msra.mxu0 %v3544
        %3550 = vmatprep.subr.bf16.mxu0 0
        %3551 = vmatpush1.bf16.msra.mxu0 0
        %3552 = vmatprep.subr.bf16.mxu0 0
        %3553 = vmatpush1.bf16.msra.mxu0 0
        %3554 = vmatprep.subr.bf16.mxu0 0
        %3555 = vmatpush1.bf16.msra.mxu0 0
        %3556 = vmatprep.subr.bf16.mxu0 0
        %3557 = vmatpush1.bf16.msra.mxu0 0
        %3558 = vmatprep.subr.bf16.mxu0 0
        %3559 = vmatpush1.bf16.msra.mxu0 0
        %3560 = vmatprep.subr.bf16.mxu0 0
        %3561 = vmatpush1.bf16.msra.mxu0 0
        %3562 = vmatprep.subr.bf16.mxu0 0
        %3563 = vmatpush1.bf16.msra.mxu0 0
        %3564 = vmatprep.subr.bf16.mxu0 0
        %3565 = vmatpush1.bf16.msra.mxu0 0
        %3566 = vmatprep.subr.bf16.mxu0 0
        %3567 = vmatpush1.bf16.msra.mxu0 0
        %3568 = vmatprep.subr.bf16.mxu0 0
        %3569 = vmatpush1.bf16.msra.mxu0 0
        %3570 = vmatprep.subr.bf16.mxu0 0
        %3571 = vmatpush1.bf16.msra.mxu0 0
        %3572 = vmatprep.subr.bf16.mxu0 0
        %3573 = vmatpush1.bf16.msra.mxu0 0
        %3574 = vmatprep.subr.bf16.mxu0 0
        %3575 = vmatpush1.bf16.msra.mxu0 0
        %3576 = vmatprep.subr.bf16.mxu0 0
        %3577 = vmatpush1.bf16.msra.mxu0 0
        %3578 = vmatprep.subr.bf16.mxu0 0
        %3579 = vmatpush1.bf16.msra.mxu0 0
        %3580 = vmatprep.mubr.bf16.mxu0 0
        %3581 = vmatmul.mubr.bf16.gmra.mrb[0].mxu0 %v3546
        %v3582 = vpop.f32.mrb[0].mxu0
        %v3583 = vadd.f32 0.0, %v3582
        %v3584 = vpop.f32.mrb[0].mxu0
        %v3585 = vpop.f32.mrb[0].mxu0
        %v3586 = vadd.f32 0.0, %v3585
        %v3587 = vpop.f32.mrb[0].mxu0
        %3588 = vdwg.mxu0
        %v3589 = vrcp.pop %v3539
        %v3590 = vrcp.pop %v3542
        %v3591 = vmul.f32 %v3583, %v3589
        %v3592 = vmul.f32 %v3586, %v3590
        %v3593 = vpack.c.bf16 %v3592, %v3591
        %s3594 = scalar_lea.vmem %s8, 14
        %v3595 = vld [vmem:[%s3594] sm:$0x3]
        %v3597 = vsel %vm614, %v3593, 0
        %v3600 = vsel %vm618, %v3595, 0
        %3602 = vmatprep.subr.bf16.mxu0 0
        %3603 = vmatpush1.bf16.msra.mxu0 %v3600
        %3604 = vmatprep.subr.bf16.mxu0 0
        %3605 = vmatpush1.bf16.msra.mxu0 0
        %3606 = vmatprep.subr.bf16.mxu0 0
        %3607 = vmatpush1.bf16.msra.mxu0 0
        %3608 = vmatprep.subr.bf16.mxu0 0
        %3609 = vmatpush1.bf16.msra.mxu0 0
        %3610 = vmatprep.subr.bf16.mxu0 0
        %3611 = vmatpush1.bf16.msra.mxu0 0
        %3612 = vmatprep.subr.bf16.mxu0 0
        %3613 = vmatpush1.bf16.msra.mxu0 0
        %3614 = vmatprep.subr.bf16.mxu0 0
        %3615 = vmatpush1.bf16.msra.mxu0 0
        %3616 = vmatprep.subr.bf16.mxu0 0
        %3617 = vmatpush1.bf16.msra.mxu0 0
        %3618 = vmatprep.subr.bf16.mxu0 0
        %3619 = vmatpush1.bf16.msra.mxu0 0
        %3620 = vmatprep.subr.bf16.mxu0 0
        %3621 = vmatpush1.bf16.msra.mxu0 0
        %3622 = vmatprep.subr.bf16.mxu0 0
        %3623 = vmatpush1.bf16.msra.mxu0 0
        %3624 = vmatprep.subr.bf16.mxu0 0
        %3625 = vmatpush1.bf16.msra.mxu0 0
        %3626 = vmatprep.subr.bf16.mxu0 0
        %3627 = vmatpush1.bf16.msra.mxu0 0
        %3628 = vmatprep.subr.bf16.mxu0 0
        %3629 = vmatpush1.bf16.msra.mxu0 0
        %3630 = vmatprep.subr.bf16.mxu0 0
        %3631 = vmatpush1.bf16.msra.mxu0 0
        %3632 = vmatprep.subr.bf16.mxu0 0
        %3633 = vmatpush1.bf16.msra.mxu0 0
        %3634 = vmatprep.mubr.bf16.mxu0 0
        %3635 = vmatmul.mubr.bf16.gmra.mrb[0].mxu0 %v3597
        %v3636 = vpop.f32.mrb[0].mxu0
        %v3637 = vadd.f32 0.0, %v3636
        %v3638 = vpop.f32.mrb[0].mxu0
        %v3639 = vpop.f32.mrb[0].mxu0
        %v3640 = vadd.f32 0.0, %v3639
        %v3641 = vpop.f32.mrb[0].mxu0
        %3642 = vdwg.mxu0
        %v3643 = vadd.f32 %v3272, %v3637
        %v3644 = vadd.f32 %v3273, %v3640
        %v3645 = vpack.c.bf16 %v3644, %v3643
        %v3646 = vsel %vm665, %v612, 0
        %3648 = vmatprep.subr.bf16.mxu0 0
        %3649 = vmatpush1.bf16.msra.mxu0 %v3645
        %3650 = vmatprep.subr.bf16.mxu0 0
        %3651 = vmatpush1.bf16.msra.mxu0 0
        %3652 = vmatprep.subr.bf16.mxu0 0
        %3653 = vmatpush1.bf16.msra.mxu0 0
        %3654 = vmatprep.subr.bf16.mxu0 0
        %3655 = vmatpush1.bf16.msra.mxu0 0
        %3656 = vmatprep.subr.bf16.mxu0 0
        %3657 = vmatpush1.bf16.msra.mxu0 0
        %3658 = vmatprep.subr.bf16.mxu0 0
        %3659 = vmatpush1.bf16.msra.mxu0 0
        %3660 = vmatprep.subr.bf16.mxu0 0
        %3661 = vmatpush1.bf16.msra.mxu0 0
        %3662 = vmatprep.subr.bf16.mxu0 0
        %3663 = vmatpush1.bf16.msra.mxu0 0
        %3664 = vmatprep.subr.bf16.mxu0 0
        %3665 = vmatpush1.bf16.msra.mxu0 0
        %3666 = vmatprep.subr.bf16.mxu0 0
        %3667 = vmatpush1.bf16.msra.mxu0 0
        %3668 = vmatprep.subr.bf16.mxu0 0
        %3669 = vmatpush1.bf16.msra.mxu0 0
        %3670 = vmatprep.subr.bf16.mxu0 0
        %3671 = vmatpush1.bf16.msra.mxu0 0
        %3672 = vmatprep.subr.bf16.mxu0 0
        %3673 = vmatpush1.bf16.msra.mxu0 0
        %3674 = vmatprep.subr.bf16.mxu0 0
        %3675 = vmatpush1.bf16.msra.mxu0 0
        %3676 = vmatprep.subr.bf16.mxu0 0
        %3677 = vmatpush1.bf16.msra.mxu0 0
        %3678 = vmatprep.subr.bf16.mxu0 0
        %3679 = vmatpush1.bf16.msra.mxu0 0
        %3680 = vmatprep.mubr.bf16.mxu0 0
        %3681 = vmatmul.mubr.bf16.gmra.mrb[0].mxu0 %v3646
        %v3682 = vpop.f32.mrb[0].mxu0
        %v3683 = vadd.f32 0.0, %v3682
        %v3684 = vpop.f32.mrb[0].mxu0
        %v3685 = vpop.f32.mrb[0].mxu0
        %v3686 = vpop.f32.mrb[0].mxu0
        %3687 = vdwg.mxu0
        %v3688 = vmax.f32 %v611, 1.0
        %v3689 = vrcp.pop %v3688
        %v3690 = vmul.f32 %v3683, %v3689
        %v3691 = vpack.c.bf16 %v3690, %v3690
        %v3692 = vld [vmem:[%s10] sm:$0xf]
        %v3693 = vld [vmem:[%s10 + $0x4] sm:$0xf]
        %v3694 = vld [vmem:[%s10 + $0x8] sm:$0xf]
        %v3695 = vld [vmem:[%s10 + $0xc] sm:$0xf]
        %v3696 = vld [vmem:[%s11] sm:$0x1]
        %v3698 = vlaneseq
        %v3699 = vshrl.u32 %v3698, 7
        %v3700 = vsub.s32 0, %v3699
        %v3701 = vrot.slane %v3696, %v3700
        %v3707 = vunpack.c.l.b16 %v3692
        %v3708 = vunpack.c.l.b16 %v3693
        %v3709 = vunpack.c.l.b16 %v3694
        %v3710 = vunpack.c.l.b16 %v3695
        %v3711 = vpack.c.b16 %v3708, %v3707
        %v3712 = vpack.c.b16 %v3710, %v3709
        %v3716 = vsel %vm703, %v3691, 0
        %3718 = vmatprep.subr.bf16.mxu0 0
        %3719 = vmatpush1.bf16.msra.mxu0 %v3711
        %3720 = vmatprep.subr.bf16.mxu0 0
        %3721 = vmatpush1.bf16.msra.mxu0 %v3712
        %3722 = vmatprep.subr.bf16.mxu0 0
        %3723 = vmatpush1.bf16.msra.mxu0 0
        %3724 = vmatprep.subr.bf16.mxu0 0
        %3725 = vmatpush1.bf16.msra.mxu0 0
        %3726 = vmatprep.subr.bf16.mxu0 0
        %3727 = vmatpush1.bf16.msra.mxu0 0
        %3728 = vmatprep.subr.bf16.mxu0 0
        %3729 = vmatpush1.bf16.msra.mxu0 0
        %3730 = vmatprep.subr.bf16.mxu0 0
        %3731 = vmatpush1.bf16.msra.mxu0 0
        %3732 = vmatprep.subr.bf16.mxu0 0
        %3733 = vmatpush1.bf16.msra.mxu0 0
        %3734 = vmatprep.subr.bf16.mxu0 0
        %3735 = vmatpush1.bf16.msra.mxu0 0
        %3736 = vmatprep.subr.bf16.mxu0 0
        %3737 = vmatpush1.bf16.msra.mxu0 0
        %3738 = vmatprep.subr.bf16.mxu0 0
        %3739 = vmatpush1.bf16.msra.mxu0 0
        %3740 = vmatprep.subr.bf16.mxu0 0
        %3741 = vmatpush1.bf16.msra.mxu0 0
        %3742 = vmatprep.subr.bf16.mxu0 0
        %3743 = vmatpush1.bf16.msra.mxu0 0
        %3744 = vmatprep.subr.bf16.mxu0 0
        %3745 = vmatpush1.bf16.msra.mxu0 0
        %3746 = vmatprep.subr.bf16.mxu0 0
        %3747 = vmatpush1.bf16.msra.mxu0 0
        %3748 = vmatprep.subr.bf16.mxu0 0
        %3749 = vmatpush1.bf16.msra.mxu0 0
        %3750 = vmatprep.mubr.bf16.mxu0 0
        %3751 = vmatmul.mubr.bf16.gmra.mrb[0].mxu0 %v3716
        %v3752 = vpop.f32.mrb[0].mxu0
        %v3753 = vadd.f32 %v3701, %v3752
        %v3754 = vpop.f32.mrb[0].mxu0
        %v3755 = vpop.f32.mrb[0].mxu0
        %v3756 = vpop.f32.mrb[0].mxu0
        %3757 = vdwg.mxu0
        %vm3758 = vcmask 257024
        %v3759 = vsel %vm3758, %v3753, 0.0
        %3760 = vadd.xlane.f32.xlu0 %v3759
        %v3761 = vpop.xlane.xlu0 %3760
        %v3762 = vrcp.pop 32.0
        %v3763 = vmul.f32 %v3761, %v3762
        %v3764 = vsub.f32 %v3753, %v3763
        %v3765 = vmul.f32 %v3764, %v3764
        %v3766 = vsel %vm3758, %v3765, 0.0
        %3767 = vadd.xlane.f32.xlu0 %v3766
        %v3768 = vpop.xlane.xlu0 %3767
        %v3769 = vmul.f32 %v3768, %v3762
        %v3770 = vadd.f32 %v3769, 1e-05
        %v3771 = vrsqrt.pop %v3770
        %v3772 = vmul.f32 %v3764, %v3771
        %v3773 = vld [vmem:[%s12] sm:$0x1]
        %v3775 = vlaneseq
        %v3776 = vshrl.u32 %v3775, 7
        %v3777 = vsub.s32 0, %v3776
        %v3778 = vrot.slane %v3773, %v3777
        %v3780 = vmul.f32 %v3772, %v3778
        %v3781 = vld [vmem:[%s13] sm:$0x1]
        %v3783 = vlaneseq
        %v3784 = vshrl.u32 %v3783, 7
        %v3785 = vsub.s32 0, %v3784
        %v3786 = vrot.slane %v3781, %v3785
        %v3788 = vadd.f32 %v3780, %v3786
        %v3789 = vmul.f32 %v3788, 0.5
        %v3790 = vmul.f32 %v3788, 0.70710677
        %v3791 = verf.f32.pop %v3790
        %v3792 = vadd.f32 %v3791, 1.0
        %v3793 = vmul.f32 %v3789, %v3792
        %v3794 = vpack.c.bf16 %v3793, %v3793
        %v3795 = vld [vmem:[%s14] sm:$0xf]
        %v3796 = vld [vmem:[%s14 + $0x4] sm:$0xf]
        %v3797 = vld [vmem:[%s14 + $0x8] sm:$0xf]
        %v3798 = vld [vmem:[%s14 + $0xc] sm:$0xf]
        %v3799 = vld [vmem:[%s15] sm:$0x1]
        %v3801 = vlaneseq
        %v3802 = vshrl.u32 %v3801, 7
        %v3803 = vsub.s32 0, %v3802
        %v3804 = vrot.slane %v3799, %v3803
        %v3810 = vunpack.c.l.b16 %v3795
        %v3811 = vunpack.c.l.b16 %v3796
        %v3812 = vunpack.c.l.b16 %v3797
        %v3813 = vunpack.c.l.b16 %v3798
        %v3814 = vpack.c.b16 %v3811, %v3810
        %v3815 = vpack.c.b16 %v3813, %v3812
        %v3819 = vsel %vm703, %v3794, 0
        %3821 = vmatprep.subr.bf16.mxu0 0
        %3822 = vmatpush1.bf16.msra.mxu0 %v3814
        %3823 = vmatprep.subr.bf16.mxu0 0
        %3824 = vmatpush1.bf16.msra.mxu0 %v3815
        %3825 = vmatprep.subr.bf16.mxu0 0
        %3826 = vmatpush1.bf16.msra.mxu0 0
        %3827 = vmatprep.subr.bf16.mxu0 0
        %3828 = vmatpush1.bf16.msra.mxu0 0
        %3829 = vmatprep.subr.bf16.mxu0 0
        %3830 = vmatpush1.bf16.msra.mxu0 0
        %3831 = vmatprep.subr.bf16.mxu0 0
        %3832 = vmatpush1.bf16.msra.mxu0 0
        %3833 = vmatprep.subr.bf16.mxu0 0
        %3834 = vmatpush1.bf16.msra.mxu0 0
        %3835 = vmatprep.subr.bf16.mxu0 0
        %3836 = vmatpush1.bf16.msra.mxu0 0
        %3837 = vmatprep.subr.bf16.mxu0 0
        %3838 = vmatpush1.bf16.msra.mxu0 0
        %3839 = vmatprep.subr.bf16.mxu0 0
        %3840 = vmatpush1.bf16.msra.mxu0 0
        %3841 = vmatprep.subr.bf16.mxu0 0
        %3842 = vmatpush1.bf16.msra.mxu0 0
        %3843 = vmatprep.subr.bf16.mxu0 0
        %3844 = vmatpush1.bf16.msra.mxu0 0
        %3845 = vmatprep.subr.bf16.mxu0 0
        %3846 = vmatpush1.bf16.msra.mxu0 0
        %3847 = vmatprep.subr.bf16.mxu0 0
        %3848 = vmatpush1.bf16.msra.mxu0 0
        %3849 = vmatprep.subr.bf16.mxu0 0
        %3850 = vmatpush1.bf16.msra.mxu0 0
        %3851 = vmatprep.subr.bf16.mxu0 0
        %3852 = vmatpush1.bf16.msra.mxu0 0
        %3853 = vmatprep.mubr.bf16.mxu0 0
        %3854 = vmatmul.mubr.bf16.gmra.mrb[0].mxu0 %v3819
        %v3855 = vpop.f32.mrb[0].mxu0
        %v3856 = vadd.f32 %v3804, %v3855
        %v3857 = vpop.f32.mrb[0].mxu0
        %v3858 = vpop.f32.mrb[0].mxu0
        %v3859 = vpop.f32.mrb[0].mxu0
        %3860 = vdwg.mxu0
        %v3861 = vpack.c.bf16 %v3856, %v3856
        %v3863 = vsel %vm618, %v3861, 0
        %3865 = vmatprep.subr.bf16.mxu0 0
        %3866 = vmatpush1.bf16.msra.mxu0 %v3863
        %3867 = vmatprep.subr.bf16.mxu0 0
        %3868 = vmatpush1.bf16.msra.mxu0 0
        %3869 = vmatprep.subr.bf16.mxu0 0
        %3870 = vmatpush1.bf16.msra.mxu0 0
        %3871 = vmatprep.subr.bf16.mxu0 0
        %3872 = vmatpush1.bf16.msra.mxu0 0
        %3873 = vmatprep.subr.bf16.mxu0 0
        %3874 = vmatpush1.bf16.msra.mxu0 0
        %3875 = vmatprep.subr.bf16.mxu0 0
        %3876 = vmatpush1.bf16.msra.mxu0 0
        %3877 = vmatprep.subr.bf16.mxu0 0
        %3878 = vmatpush1.bf16.msra.mxu0 0
        %3879 = vmatprep.subr.bf16.mxu0 0
        %3880 = vmatpush1.bf16.msra.mxu0 0
        %3881 = vmatprep.subr.bf16.mxu0 0
        %3882 = vmatpush1.bf16.msra.mxu0 0
        %3883 = vmatprep.subr.bf16.mxu0 0
        %3884 = vmatpush1.bf16.msra.mxu0 0
        %3885 = vmatprep.subr.bf16.mxu0 0
        %3886 = vmatpush1.bf16.msra.mxu0 0
        %3887 = vmatprep.subr.bf16.mxu0 0
        %3888 = vmatpush1.bf16.msra.mxu0 0
        %3889 = vmatprep.subr.bf16.mxu0 0
        %3890 = vmatpush1.bf16.msra.mxu0 0
        %3891 = vmatprep.subr.bf16.mxu0 0
        %3892 = vmatpush1.bf16.msra.mxu0 0
        %3893 = vmatprep.subr.bf16.mxu0 0
        %3894 = vmatpush1.bf16.msra.mxu0 0
        %3895 = vmatprep.subr.bf16.mxu0 0
        %3896 = vmatpush1.bf16.msra.mxu0 0
        %3897 = vmatprep.mubr.bf16.mxu0 0
        %3898 = vmatmul.mubr.bf16.gmra.mrb[0].mxu0 %v616
        %v3899 = vpop.f32.mrb[0].mxu0
        %v3900 = vadd.f32 0.0, %v3899
        %v3901 = vpop.f32.mrb[0].mxu0
        %v3902 = vpop.f32.mrb[0].mxu0
        %v3903 = vadd.f32 0.0, %v3902
        %v3904 = vpop.f32.mrb[0].mxu0
        %3905 = vdwg.mxu0
        %s3906 = sld [smem:[#allocation2]]
        %vm3907 = vcmp.ge.f32.partialorder %v668, 3.0
        %vm3908 = vcmp.ge.f32.partialorder %v671, 3.0
        %s3909 = ssub.f32 1.0, %s3906
        %v3910 = vstv %s3909
        %v3911 = vmul.f32 %v3910, %v563
        %v3912 = vmul.f32 %v3910, %v564
        %v3913 = vstv %s3906
        %v3914 = vmul.f32 %v3913, %v3900
        %v3915 = vmul.f32 %v3913, %v3903
        %v3916 = vadd.f32 %v3911, %v3914
        %v3917 = vadd.f32 %v3912, %v3915
        %v3918 = vsel %vm3907, 1, 0
        %v3919 = vsel %vm3908, 1, 0
        %vm3920 = vcmp.eq.s32.totalorder %v3918, 1
        %vm3921 = vcmp.eq.s32.totalorder %v3919, 1
        %v3922 = vsel %vm3920, %v3916, %v563
        %v3923 = vsel %vm3921, %v3917, %v564
        %3924 = vst.msk [vmem:[%s553] sm:$0xff] %vm703, %v3922
        %3925 = vst.msk [vmem:[%s553 + $0x8] sm:$0xff] %vm703, %v3923
        %s3926 = sand.u32 %s407, 1
        %s3927 = scalar_lea.sflag [#allocation4], %s3926
        %s3928 = sand.u32 %s407, 1
        %s3929 = smul.addr %s3928, 16
        %s3930 = scalar_lea.vmem [#allocation3], %s3929
        // Predicated region
        $region89: #{tpu_custom_call.1} parent=87 // pred_check
          %p3931 = pneg %p417
        $region90: #{tpu_custom_call.1} parent=87 // pred_check_branch
          %3933 = sbr.rel (%p3931) target = $region92
        $region91: #{tpu_custom_call.1} parent=87 // pred_region
          %s3935 = ssub.s32 256, 256
          %3936 = vsyncadd %s3927, %s3935
          %s3937 = smul.addr %s32, 2
          %s3938 = smul.addr %s3937, 128
          %s3939 = scalar_lea.hbm %s17, %s3938
          %s3940 = sshll.u32 %s3930, 4
          %s3941 = int_to_ptr.vmem [resolvable:$true] %s3940
          %3946 = dma.vmem_to_hbm [thread:$0]  %s3941, 256, %s3939, %s3927, 128, 128, 8
        $region92: #{tpu_custom_call.1} parent=87 // pred_fallthru
          _
      $region88: #{tpu_custom_call.1} parent=5 // pred_fallthru
        _
      %p3947 = scmp.le.s32.totalorder 2, %s27
      // Predicated region
      $region93: #{tpu_custom_call.1} parent=5 // pred_check
        %p3948 = pneg %p3947
      $region94: #{tpu_custom_call.1} parent=5 // pred_check_branch
        %3950 = sbr.rel (%p3948) target = $region96
      $region95: #{tpu_custom_call.1} parent=5 // pred_region
        %s3951 = ssub.s32 %s27, 2
        // Predicated region
        $region97: #{tpu_custom_call.1} parent=95 // pred_check
          %p3952 = pneg %p423
        $region98: #{tpu_custom_call.1} parent=95 // pred_check_branch
          %3954 = sbr.rel (%p3952) target = $region100
        $region99: #{tpu_custom_call.1} parent=95 // pred_region
          %s3955 = sand.u32 %s408, 1
          %s3956 = scalar_lea.sflag [#allocation4], %s3955
          %s3957 = sand.u32 %s408, 1
          %s3958 = smul.addr %s3957, 16
          %s3959 = scalar_lea.vmem [#allocation3], %s3958
          %3960 = dma.done %s3956, 256
        $region100: #{tpu_custom_call.1} parent=95 // pred_fallthru
          _
      $region96: #{tpu_custom_call.1} parent=5 // pred_fallthru
        _
    $region6: #{tpu_custom_call.1} parent=1 // loop_footer
      %s31 = sadd.s32 1, %s27
    $region7: #{tpu_custom_call.1} parent=1 // loop_footer_branch
      %26 = sbr.rel target = $region3
    $region8: #{tpu_custom_call.1} parent=1 // loop_exit
      _
    %3961 = vsyncpa [#allocation4], 1
    %s3962 = scalar_lea.sflag [#allocation4], 1
    %3963 = vsyncpa %s3962, 1

</llo_original>
